<compile_context>
chip_gen: v5e
topology: v5e:2x2
jax: 0.10.0
libtpu: 0.0.40
codegen_flags: <defaults>
</compile_context>

<pallas_src>
import numpy as np
import jax
import jax.numpy as jnp
from jax.experimental import pallas as pl
from jax.experimental.pallas import tpu as pltpu

# ----------------------------- geometry -----------------------------
CIN_PAD = 8            # conv1 input channels zero-padded 3 -> 8
NUM_CLASSES_PAD = 128  # fc2 output padded to a full lane width (sliced in wrapper)

# per stage: padded spatial side P, pooled output side S (k=2, pad=1, stride=1 conv)
P1, S1 = 34, 16        # 32 -> conv 33 -> pool 16
P2, S2 = 18, 8         # 16 -> conv 17 -> pool 8
P3, S3 = 10, 4         #  8 -> conv  9 -> pool 4

L1, L2, L3 = P1 * P1, P2 * P2, P3 * P3
LV1, LV2, LV3 = L1 - (P1 + 1), L2 - (P2 + 1), L3 - (P3 + 1)      # valid conv lanes
NP1, NP2, NP3 = LV1 - (P1 + 1), LV2 - (P2 + 1), LV3 - (P3 + 1)   # pool-base lanes


# ----------------------------- Kernel A: fused conv net -----------------------------

def _pool4(act, P, n):
    """2x2/stride-2 max-pool: the pooled value whose base lane is l = 2hp*P + 2wp is
    max(act[l], act[l+1], act[l+P], act[l+P+1]).  Three plane-wide maxima; the
    non-base lanes hold finite garbage that the selection matmul never selects."""
    return jnp.maximum(jnp.maximum(act[:, 0:n], act[:, 1:1 + n]),
                       jnp.maximum(act[:, P:P + n], act[:, P + 1:P + 1 + n]))


def _convnet_kernel(xs1_ref, w1_ref, b1_ref, sel1_ref,
                    w2_ref, b2_ref, sel2_ref,
                    w3_ref, b3_ref, sel3_ref,
                    out_ref, xs2_ref, xs3_ref):
    # ---- stage 1: single (16, 32) @ (32, LV1) MXU pass; bias+ReLU in registers ----
    c = jnp.dot(w1_ref[...], xs1_ref[0], preferred_element_type=jnp.float32)
    c = jnp.maximum(c + b1_ref[...], 0.0)
    m = _pool4(c, P1, NP1).astype(jnp.bfloat16)                    # (16, NP1)
    # selection matmul scatters pooled pixels into the zero-padded planar layout
    # of stage 2 (0/1 bf16 weights -> exact values, exact-zero pad ring).
    a2 = jnp.dot(m, sel1_ref[...],
                 preferred_element_type=jnp.float32).astype(jnp.bfloat16)   # (16, L2)

    # ---- stage 2: stack the 4 taps along K (K = 64), one MXU pass ----
    for t, s in enumerate((0, 1, P2, P2 + 1)):
        xs2_ref[t * 16:(t + 1) * 16, :] = a2[:, s:s + LV2]
    c = jnp.dot(w2_ref[...], xs2_ref[...], preferred_element_type=jnp.float32)
    c = jnp.maximum(c + b2_ref[...], 0.0)
    m = _pool4(c, P2, NP2).astype(jnp.bfloat16)                    # (32, NP2)
    a3 = jnp.dot(m, sel2_ref[...],
                 preferred_element_type=jnp.float32).astype(jnp.bfloat16)   # (32, L3)

    # ---- stage 3: K = 128 (full MXU depth) ----
    for t, s in enumerate((0, 1, P3, P3 + 1)):
        xs3_ref[t * 32:(t + 1) * 32, :] = a3[:, s:s + LV3]
    c = jnp.dot(w3_ref[...], xs3_ref[...], preferred_element_type=jnp.float32)
    c = jnp.maximum(c + b3_ref[...], 0.0)
    m = _pool4(c, P3, NP3).astype(jnp.bfloat16)                    # (64, NP3)
    # final selection matmul also produces the (c, h*4+w) flatten ordering torch uses
    out_ref[0, :, :] = jnp.dot(m, sel3_ref[...],
                               preferred_element_type=jnp.float32).astype(jnp.bfloat16)


def _convnet(xs1, p):
    B = xs1.shape[0]
    const = lambda b: (0, 0)     # weights / biases / selection matrices: fetched once
    return pl.pallas_call(
        _convnet_kernel,
        out_shape=jax.ShapeDtypeStruct((B, 64, S3 * S3), jnp.bfloat16),
        grid=(B,),
        in_specs=[
            pl.BlockSpec((1, 4 * CIN_PAD, LV1), lambda b: (b, 0, 0)),   # stacked input
            pl.BlockSpec((16, 4 * CIN_PAD), const),   # conv1 stacked weight
            pl.BlockSpec((16, 1), const),             # conv1 bias
            pl.BlockSpec((NP1, L2), const),           # pool1 selection/scatter matrix
            pl.BlockSpec((32, 64), const),            # conv2 stacked weight
            pl.BlockSpec((32, 1), const),
            pl.BlockSpec((NP2, L3), const),
            pl.BlockSpec((64, 128), const),           # conv3 stacked weight
            pl.BlockSpec((64, 1), const),
            pl.BlockSpec((NP3, S3 * S3), const),
        ],
        out_specs=pl.BlockSpec((1, 64, S3 * S3), lambda b: (b, 0, 0)),
        scratch_shapes=[
            pltpu.VMEM((64, LV2), jnp.bfloat16),      # stage-2 tap-stacked input
            pltpu.VMEM((128, LV3), jnp.bfloat16),     # stage-3 tap-stacked input
        ],
        compiler_params=pltpu.CompilerParams(
            dimension_semantics=("parallel",)),       # v7x: one image per TensorCore
    )(xs1, p["conv1_w"], p["conv1_b"], p["sel1"],
      p["conv2_w"], p["conv2_b"], p["sel2"],
      p["conv3_w"], p["conv3_b"], p["sel3"])


# ----------------------------- Kernel B: fused fc1 + fc2 -----------------------------

def _mlp_kernel(x_ref, w1_ref, b1_ref, w2_ref, b2_ref, o_ref):
    # Dropout(0.5) is identity at inference time.
    h = jnp.dot(x_ref[...], w1_ref[...], preferred_element_type=jnp.float32)
    h = jnp.maximum(h + b1_ref[...], 0.0).astype(jnp.bfloat16)
    o_ref[...] = jnp.dot(h, w2_ref[...],
                         preferred_element_type=jnp.float32) + b2_ref[...]


def _mlp(x, p):
    B = x.shape[0]
    vmem = pl.BlockSpec(memory_space=pltpu.MemorySpace.VMEM)
    return pl.pallas_call(
        _mlp_kernel,
        out_shape=jax.ShapeDtypeStruct((B, NUM_CLASSES_PAD), jnp.float32),
        in_specs=[vmem] * 5,
        out_specs=vmem,
    )(x, p["fc1_w"], p["fc1_b"], p["fc2_w"], p["fc2_b"])


# --------------------------------- full forward ---------------------------------

def small_cnn_forward(x_nchw, kparams, num_classes=4):
    B, C = x_nchw.shape[0], x_nchw.shape[1]
    # tiny XLA glue: zero-pad channels 3->8 and spatial by 1, flatten padded spatial,
    # cast to bf16 once, and build the 4-tap stacked stage-1 input (B, 32, LV1).
    xp = jnp.pad(x_nchw, ((0, 0), (0, CIN_PAD - C), (1, 1), (1, 1)))
    xp = xp.reshape(B, CIN_PAD, L1).astype(jnp.bfloat16)
    xs1 = jnp.concatenate([xp[:, :, s:s + LV1] for s in (0, 1, P1, P1 + 1)], axis=1)

    pooled = _convnet(xs1, kparams)                   # (B, 64, 16) bf16, (c, h*4+w)
    fcin = pooled.reshape(B, 64 * S3 * S3)            # free HBM bitcast; torch view order
    logits = _mlp(fcin, kparams)                      # (B, 128) f32
    return logits[:, :num_classes]


# ------------------------------ parameters ------------------------------

def init_params(key, num_classes=4):
    """Parameters in native PyTorch layouts (OIHW conv, (out,in) Linear)."""
    ks = jax.random.split(key, 10)

    def nrm(k, shape, scale):
        return scale * jax.random.normal(k, shape, dtype=jnp.float32)

    return {
        "conv1_w": nrm(ks[0], (16, 3, 2, 2), 0.2),  "conv1_b": nrm(ks[1], (16,), 0.1),
        "conv2_w": nrm(ks[2], (32, 16, 2, 2), 0.1), "conv2_b": nrm(ks[3], (32,), 0.1),
        "conv3_w": nrm(ks[4], (64, 32, 2, 2), 0.08), "conv3_b": nrm(ks[5], (64,), 0.1),
        "fc1_w": nrm(ks[6], (512, 64 * 4 * 4), 0.03), "fc1_b": nrm(ks[7], (512,), 0.1),
        "fc2_w": nrm(ks[8], (num_classes, 512), 0.05),
        "fc2_b": nrm(ks[9], (num_classes,), 0.1),
    }


def _make_sel(P, S, ncols, dst):
    """0/1 bf16 selection matrix (pool-base lane -> destination column):
    row 2hp*P + 2wp carries a single 1 at column dst(hp, wp)."""
    n_pool = P * P - 2 * (P + 1)
    sel = np.zeros((n_pool, ncols), np.float32)
    for hp in range(S):
        for wp in range(S):
            sel[2 * hp * P + 2 * wp, dst(hp, wp)] = 1.0
    return jnp.asarray(sel, dtype=jnp.bfloat16)


def prepare_params(p, num_classes=4):
    """One-time PyTorch-layout -> kernel-layout conversion (done OUTSIDE jit):
      conv OIHW -> tap-stacked (Cout, 4*Cin) bf16 (column t*Cin + c, t = kh*2+kw;
      conv1 Cin zero-padded 3->8), conv bias -> (Cout, 1) f32,
      0/1 pooling scatter matrices in bf16,
      fc weights pre-transposed to (in, out) bf16 (fc2 zero-padded to 128 lanes),
      fc bias -> (1, out) f32."""
    def conv_w_stacked(w, cin_pad):
        o, i = w.shape[0], w.shape[1]
        w = jnp.transpose(w, (2, 3, 1, 0)).reshape(4, i, o)    # [t=kh*2+kw, cin, cout]
        w = jnp.pad(w, ((0, 0), (0, cin_pad - i), (0, 0)))
        return w.reshape(4 * cin_pad, o).T.astype(jnp.bfloat16)   # (cout, 4*cin_pad)

    fc2_t = jnp.pad(p["fc2_w"].T, ((0, 0), (0, NUM_CLASSES_PAD - num_classes)))
    fc2_b = jnp.pad(p["fc2_b"], (0, NUM_CLASSES_PAD - num_classes))
    return {
        "conv1_w": conv_w_stacked(p["conv1_w"], CIN_PAD),
        "conv1_b": p["conv1_b"].reshape(16, 1).astype(jnp.float32),
        "conv2_w": conv_w_stacked(p["conv2_w"], 16),
        "conv2_b": p["conv2_b"].reshape(32, 1).astype(jnp.float32),
        "conv3_w": conv_w_stacked(p["conv3_w"], 32),
        "conv3_b": p["conv3_b"].reshape(64, 1).astype(jnp.float32),
        "sel1": _make_sel(P1, S1, L2, lambda hp, wp: (hp + 1) * P2 + (wp + 1)),
        "sel2": _make_sel(P2, S2, L3, lambda hp, wp: (hp + 1) * P3 + (wp + 1)),
        "sel3": _make_sel(P3, S3, S3 * S3, lambda hp, wp: hp * S3 + wp),
        "fc1_w": p["fc1_w"].T.astype(jnp.bfloat16),
        "fc1_b": p["fc1_b"].reshape(1, 512).astype(jnp.float32),
        "fc2_w": fc2_t.astype(jnp.bfloat16),
        "fc2_b": fc2_b.reshape(1, NUM_CLASSES_PAD).astype(jnp.float32),
    }


if __name__ == "__main__":
    key = jax.random.PRNGKey(0)
    k_x, k_p = jax.random.split(key)
    # The architecture fixes the input geometry: 3 channels, 32x32 spatial
    # (32 -> 33 -> 16 -> 17 -> 8 -> 9 -> 4, and fc1 expects 64*4*4).
    x = jax.random.normal(k_x, (2, 3, 32, 32), dtype=jnp.float32)
    params = prepare_params(init_params(k_p, num_classes=4), num_classes=4)

    out = jax.jit(small_cnn_forward)(x, params)
    out = jax.block_until_ready(out)
    assert out.shape == (2, 4) and out.dtype == jnp.float32
    assert bool(jnp.all(jnp.isfinite(out)))
    print("KERNEL_OK")
</pallas_src>

<mosaic_0001>
module attributes {stable_mosaic.version = 11 : i64} {
  func.func @_mlp_kernel(%arg0: memref<2x1024xbf16, #tpu.memory_space<vmem>>, %arg1: memref<1024x512xbf16, #tpu.memory_space<vmem>>, %arg2: memref<1x512xf32, #tpu.memory_space<vmem>>, %arg3: memref<512x128xbf16, #tpu.memory_space<vmem>>, %arg4: memref<1x128xf32, #tpu.memory_space<vmem>>, %arg5: memref<2x128xf32, #tpu.memory_space<vmem>>) attributes {dimension_semantics = [], scalar_prefetch = 0 : i64, scratch_operands = 0 : i64, tpu.core_type = #tpu.core_type<tc>} {
    %c0 = arith.constant 0 : index
    %c0_0 = arith.constant 0 : index
    %0 = vector.load %arg0[%c0, %c0_0] : memref<2x1024xbf16, #tpu.memory_space<vmem>>, vector<2x1024xbf16>
    %c0_1 = arith.constant 0 : index
    %c0_2 = arith.constant 0 : index
    %1 = vector.load %arg1[%c0_1, %c0_2] : memref<1024x512xbf16, #tpu.memory_space<vmem>>, vector<1024x512xbf16>
    %cst = arith.constant dense<0.000000e+00> : vector<2x512xf32>
    %2 = tpu.matmul %0, %1, %cst {dimension_numbers = #tpu.dot_dimension_numbers<[1], [0], [0], [1], [0, 0, 1, 1], [], []>} : vector<2x1024xbf16>, vector<1024x512xbf16>, vector<2x512xf32> -> vector<2x512xf32>
    %c0_3 = arith.constant 0 : index
    %c0_4 = arith.constant 0 : index
    %3 = vector.load %arg2[%c0_3, %c0_4] : memref<1x512xf32, #tpu.memory_space<vmem>>, vector<1x512xf32>
    %4 = vector.broadcast %3 : vector<1x512xf32> to vector<2x512xf32>
    %5 = arith.addf %2, %4 : vector<2x512xf32>
    %cst_5 = arith.constant 0.000000e+00 : f32
    %6 = vector.broadcast %cst_5 : f32 to vector<2x512xf32>
    %7 = arith.maximumf %5, %6 : vector<2x512xf32>
    %8 = arith.truncf %7 : vector<2x512xf32> to vector<2x512xbf16>
    %c0_6 = arith.constant 0 : index
    %c0_7 = arith.constant 0 : index
    %9 = vector.load %arg3[%c0_6, %c0_7] : memref<512x128xbf16, #tpu.memory_space<vmem>>, vector<512x128xbf16>
    %cst_8 = arith.constant dense<0.000000e+00> : vector<2x128xf32>
    %10 = tpu.matmul %8, %9, %cst_8 {dimension_numbers = #tpu.dot_dimension_numbers<[1], [0], [0], [1], [0, 0, 1, 1], [], []>} : vector<2x512xbf16>, vector<512x128xbf16>, vector<2x128xf32> -> vector<2x128xf32>
    %c0_9 = arith.constant 0 : index
    %c0_10 = arith.constant 0 : index
    %11 = vector.load %arg4[%c0_9, %c0_10] : memref<1x128xf32, #tpu.memory_space<vmem>>, vector<1x128xf32>
    %12 = vector.broadcast %11 : vector<1x128xf32> to vector<2x128xf32>
    %13 = arith.addf %10, %12 : vector<2x128xf32>
    %c0_11 = arith.constant 0 : index
    %c0_12 = arith.constant 0 : index
    %14 = vector.load %arg5[%c0_11, %c0_12] : memref<2x128xf32, #tpu.memory_space<vmem>>, vector<2x128xf32>
    tpu.vector_store %arg5[%c0_11, %c0_12], %13 {strides = array<i32>} : memref<2x128xf32, #tpu.memory_space<vmem>>, vector<2x128xf32>,
    return
  }
}

module attributes {stable_mosaic.version = 11 : i64} {
  func.func @_convnet_kernel(%arg0: i32, %arg1: memref<1x32x1121xbf16, #tpu.memory_space<vmem>>, %arg2: memref<16x32xbf16, #tpu.memory_space<vmem>>, %arg3: memref<16x1xf32, #tpu.memory_space<vmem>>, %arg4: memref<1086x324xbf16, #tpu.memory_space<vmem>>, %arg5: memref<32x64xbf16, #tpu.memory_space<vmem>>, %arg6: memref<32x1xf32, #tpu.memory_space<vmem>>, %arg7: memref<286x100xbf16, #tpu.memory_space<vmem>>, %arg8: memref<64x128xbf16, #tpu.memory_space<vmem>>, %arg9: memref<64x1xf32, #tpu.memory_space<vmem>>, %arg10: memref<78x16xbf16, #tpu.memory_space<vmem>>, %arg11: memref<1x64x16xbf16, #tpu.memory_space<vmem>>, %arg12: memref<64x305xbf16, #tpu.memory_space<vmem>>, %arg13: memref<128x89xbf16, #tpu.memory_space<vmem>>) attributes {dimension_semantics = [#tpu.dimension_semantics<parallel>], iteration_bounds = array<i64: 2>, scalar_prefetch = 0 : i64, scratch_operands = 2 : i64, tpu.core_type = #tpu.core_type<tc>, window_params = [{transform_indices = @transform_0, window_bounds = array<i64: 1, 32, 1121>}, {pipeline_mode = #tpu.pipeline_mode<synchronous>, transform_indices = @transform_1, window_bounds = array<i64: 16, 32>}, {pipeline_mode = #tpu.pipeline_mode<synchronous>, transform_indices = @transform_2, window_bounds = array<i64: 16, 1>}, {pipeline_mode = #tpu.pipeline_mode<synchronous>, transform_indices = @transform_3, window_bounds = array<i64: 1086, 324>}, {pipeline_mode = #tpu.pipeline_mode<synchronous>, transform_indices = @transform_4, window_bounds = array<i64: 32, 64>}, {pipeline_mode = #tpu.pipeline_mode<synchronous>, transform_indices = @transform_5, window_bounds = array<i64: 32, 1>}, {pipeline_mode = #tpu.pipeline_mode<synchronous>, transform_indices = @transform_6, window_bounds = array<i64: 286, 100>}, {pipeline_mode = #tpu.pipeline_mode<synchronous>, transform_indices = @transform_7, window_bounds = array<i64: 64, 128>}, {pipeline_mode = #tpu.pipeline_mode<synchronous>, transform_indices = @transform_8, window_bounds = array<i64: 64, 1>}, {pipeline_mode = #tpu.pipeline_mode<synchronous>, transform_indices = @transform_9, window_bounds = array<i64: 78, 16>}, {transform_indices = @transform_10, window_bounds = array<i64: 1, 64, 16>}]} {
    %c0 = arith.constant 0 : index
    %c0_0 = arith.constant 0 : index
    %0 = vector.load %arg2[%c0, %c0_0] : memref<16x32xbf16, #tpu.memory_space<vmem>>, vector<16x32xbf16>
    %c0_1 = arith.constant 0 : index
    %c0_2 = arith.constant 0 : index
    %c0_3 = arith.constant 0 : index
    %1 = vector.load %arg1[%c0_1, %c0_2, %c0_3] : memref<1x32x1121xbf16, #tpu.memory_space<vmem>>, vector<1x32x1121xbf16>
    %2 = vector.shape_cast %1 : vector<1x32x1121xbf16> to vector<32x1121xbf16>
    %cst = arith.constant dense<0.000000e+00> : vector<16x1121xf32>
    %3 = tpu.matmul %0, %2, %cst {dimension_numbers = #tpu.dot_dimension_numbers<[1], [0], [0], [1], [0, 0, 1, 1], [], []>} : vector<16x32xbf16>, vector<32x1121xbf16>, vector<16x1121xf32> -> vector<16x1121xf32>
    %c0_4 = arith.constant 0 : index
    %c0_5 = arith.constant 0 : index
    %4 = vector.load %arg3[%c0_4, %c0_5] : memref<16x1xf32, #tpu.memory_space<vmem>>, vector<16x1xf32>
    %5 = vector.broadcast %4 : vector<16x1xf32> to vector<16x1121xf32>
    %6 = arith.addf %3, %5 : vector<16x1121xf32>
    %cst_6 = arith.constant 0.000000e+00 : f32
    %7 = vector.broadcast %cst_6 : f32 to vector<16x1121xf32>
    %8 = arith.maximumf %6, %7 : vector<16x1121xf32>
    %9 = vector.extract_strided_slice %8 {offsets = [0, 0], sizes = [16, 1086], strides = [1, 1]} : vector<16x1121xf32> to vector<16x1086xf32>
    %10 = vector.extract_strided_slice %8 {offsets = [0, 1], sizes = [16, 1086], strides = [1, 1]} : vector<16x1121xf32> to vector<16x1086xf32>
    %11 = arith.maximumf %9, %10 : vector<16x1086xf32>
    %12 = vector.extract_strided_slice %8 {offsets = [0, 34], sizes = [16, 1086], strides = [1, 1]} : vector<16x1121xf32> to vector<16x1086xf32>
    %13 = vector.extract_strided_slice %8 {offsets = [0, 35], sizes = [16, 1086], strides = [1, 1]} : vector<16x1121xf32> to vector<16x1086xf32>
    %14 = arith.maximumf %12, %13 : vector<16x1086xf32>
    %15 = arith.maximumf %11, %14 : vector<16x1086xf32>
    %16 = arith.truncf %15 : vector<16x1086xf32> to vector<16x1086xbf16>
    %c0_7 = arith.constant 0 : index
    %c0_8 = arith.constant 0 : index
    %17 = vector.load %arg4[%c0_7, %c0_8] : memref<1086x324xbf16, #tpu.memory_space<vmem>>, vector<1086x324xbf16>
    %cst_9 = arith.constant dense<0.000000e+00> : vector<16x324xf32>
    %18 = tpu.matmul %16, %17, %cst_9 {dimension_numbers = #tpu.dot_dimension_numbers<[1], [0], [0], [1], [0, 0, 1, 1], [], []>} : vector<16x1086xbf16>, vector<1086x324xbf16>, vector<16x324xf32> -> vector<16x324xf32>
    %19 = arith.truncf %18 : vector<16x324xf32> to vector<16x324xbf16>
    %20 = vector.extract_strided_slice %19 {offsets = [0, 0], sizes = [16, 305], strides = [1, 1]} : vector<16x324xbf16> to vector<16x305xbf16>
    %c0_10 = arith.constant 0 : index
    %c0_11 = arith.constant 0 : index
    %21 = vector.load %arg12[%c0_10, %c0_11] : memref<64x305xbf16, #tpu.memory_space<vmem>>, vector<16x305xbf16>
    tpu.vector_store %arg12[%c0_10, %c0_11], %20 {strides = array<i32>} : memref<64x305xbf16, #tpu.memory_space<vmem>>, vector<16x305xbf16>,
    %22 = vector.extract_strided_slice %19 {offsets = [0, 1], sizes = [16, 305], strides = [1, 1]} : vector<16x324xbf16> to vector<16x305xbf16>
    %c16 = arith.constant 16 : index
    %c0_12 = arith.constant 0 : index
    %23 = vector.load %arg12[%c16, %c0_12] : memref<64x305xbf16, #tpu.memory_space<vmem>>, vector<16x305xbf16>
    tpu.vector_store %arg12[%c16, %c0_12], %22 {strides = array<i32>} : memref<64x305xbf16, #tpu.memory_space<vmem>>, vector<16x305xbf16>,
    %24 = vector.extract_strided_slice %19 {offsets = [0, 18], sizes = [16, 305], strides = [1, 1]} : vector<16x324xbf16> to vector<16x305xbf16>
    %c32 = arith.constant 32 : index
    %c0_13 = arith.constant 0 : index
    %25 = vector.load %arg12[%c32, %c0_13] : memref<64x305xbf16, #tpu.memory_space<vmem>>, vector<16x305xbf16>
    tpu.vector_store %arg12[%c32, %c0_13], %24 {strides = array<i32>} : memref<64x305xbf16, #tpu.memory_space<vmem>>, vector<16x305xbf16>,
    %26 = vector.extract_strided_slice %19 {offsets = [0, 19], sizes = [16, 305], strides = [1, 1]} : vector<16x324xbf16> to vector<16x305xbf16>
    %c48 = arith.constant 48 : index
    %c0_14 = arith.constant 0 : index
    %27 = vector.load %arg12[%c48, %c0_14] : memref<64x305xbf16, #tpu.memory_space<vmem>>, vector<16x305xbf16>
    tpu.vector_store %arg12[%c48, %c0_14], %26 {strides = array<i32>} : memref<64x305xbf16, #tpu.memory_space<vmem>>, vector<16x305xbf16>,
    %c0_15 = arith.constant 0 : index
    %c0_16 = arith.constant 0 : index
    %28 = vector.load %arg5[%c0_15, %c0_16] : memref<32x64xbf16, #tpu.memory_space<vmem>>, vector<32x64xbf16>
    %c0_17 = arith.constant 0 : index
    %c0_18 = arith.constant 0 : index
    %29 = vector.load %arg12[%c0_17, %c0_18] : memref<64x305xbf16, #tpu.memory_space<vmem>>, vector<64x305xbf16>
    %cst_19 = arith.constant dense<0.000000e+00> : vector<32x305xf32>
    %30 = tpu.matmul %28, %29, %cst_19 {dimension_numbers = #tpu.dot_dimension_numbers<[1], [0], [0], [1], [0, 0, 1, 1], [], []>} : vector<32x64xbf16>, vector<64x305xbf16>, vector<32x305xf32> -> vector<32x305xf32>
    %c0_20 = arith.constant 0 : index
    %c0_21 = arith.constant 0 : index
    %31 = vector.load %arg6[%c0_20, %c0_21] : memref<32x1xf32, #tpu.memory_space<vmem>>, vector<32x1xf32>
    %32 = vector.broadcast %31 : vector<32x1xf32> to vector<32x305xf32>
    %33 = arith.addf %30, %32 : vector<32x305xf32>
    %cst_22 = arith.constant 0.000000e+00 : f32
    %34 = vector.broadcast %cst_22 : f32 to vector<32x305xf32>
    %35 = arith.maximumf %33, %34 : vector<32x305xf32>
    %36 = vector.extract_strided_slice %35 {offsets = [0, 0], sizes = [32, 286], strides = [1, 1]} : vector<32x305xf32> to vector<32x286xf32>
    %37 = vector.extract_strided_slice %35 {offsets = [0, 1], sizes = [32, 286], strides = [1, 1]} : vector<32x305xf32> to vector<32x286xf32>
    %38 = arith.maximumf %36, %37 : vector<32x286xf32>
    %39 = vector.extract_strided_slice %35 {offsets = [0, 18], sizes = [32, 286], strides = [1, 1]} : vector<32x305xf32> to vector<32x286xf32>
    %40 = vector.extract_strided_slice %35 {offsets = [0, 19], sizes = [32, 286], strides = [1, 1]} : vector<32x305xf32> to vector<32x286xf32>
    %41 = arith.maximumf %39, %40 : vector<32x286xf32>
    %42 = arith.maximumf %38, %41 : vector<32x286xf32>
    %43 = arith.truncf %42 : vector<32x286xf32> to vector<32x286xbf16>
    %c0_23 = arith.constant 0 : index
    %c0_24 = arith.constant 0 : index
    %44 = vector.load %arg7[%c0_23, %c0_24] : memref<286x100xbf16, #tpu.memory_space<vmem>>, vector<286x100xbf16>
    %cst_25 = arith.constant dense<0.000000e+00> : vector<32x100xf32>
    %45 = tpu.matmul %43, %44, %cst_25 {dimension_numbers = #tpu.dot_dimension_numbers<[1], [0], [0], [1], [0, 0, 1, 1], [], []>} : vector<32x286xbf16>, vector<286x100xbf16>, vector<32x100xf32> -> vector<32x100xf32>
    %46 = arith.truncf %45 : vector<32x100xf32> to vector<32x100xbf16>
    %47 = vector.extract_strided_slice %46 {offsets = [0, 0], sizes = [32, 89], strides = [1, 1]} : vector<32x100xbf16> to vector<32x89xbf16>
    %c0_26 = arith.constant 0 : index
    %c0_27 = arith.constant 0 : index
    %48 = vector.load %arg13[%c0_26, %c0_27] : memref<128x89xbf16, #tpu.memory_space<vmem>>, vector<32x89xbf16>
    tpu.vector_store %arg13[%c0_26, %c0_27], %47 {strides = array<i32>} : memref<128x89xbf16, #tpu.memory_space<vmem>>, vector<32x89xbf16>,
    %49 = vector.extract_strided_slice %46 {offsets = [0, 1], sizes = [32, 89], strides = [1, 1]} : vector<32x100xbf16> to vector<32x89xbf16>
    %c32_28 = arith.constant 32 : index
    %c0_29 = arith.constant 0 : index
    %50 = vector.load %arg13[%c32_28, %c0_29] : memref<128x89xbf16, #tpu.memory_space<vmem>>, vector<32x89xbf16>
    tpu.vector_store %arg13[%c32_28, %c0_29], %49 {strides = array<i32>} : memref<128x89xbf16, #tpu.memory_space<vmem>>, vector<32x89xbf16>,
    %51 = vector.extract_strided_slice %46 {offsets = [0, 10], sizes = [32, 89], strides = [1, 1]} : vector<32x100xbf16> to vector<32x89xbf16>
    %c64 = arith.constant 64 : index
    %c0_30 = arith.constant 0 : index
    %52 = vector.load %arg13[%c64, %c0_30] : memref<128x89xbf16, #tpu.memory_space<vmem>>, vector<32x89xbf16>
    tpu.vector_store %arg13[%c64, %c0_30], %51 {strides = array<i32>} : memref<128x89xbf16, #tpu.memory_space<vmem>>, vector<32x89xbf16>,
    %53 = vector.extract_strided_slice %46 {offsets = [0, 11], sizes = [32, 89], strides = [1, 1]} : vector<32x100xbf16> to vector<32x89xbf16>
    %c96 = arith.constant 96 : index
    %c0_31 = arith.constant 0 : index
    %54 = vector.load %arg13[%c96, %c0_31] : memref<128x89xbf16, #tpu.memory_space<vmem>>, vector<32x89xbf16>
    tpu.vector_store %arg13[%c96, %c0_31], %53 {strides = array<i32>} : memref<128x89xbf16, #tpu.memory_space<vmem>>, vector<32x89xbf16>,
    %c0_32 = arith.constant 0 : index
    %c0_33 = arith.constant 0 : index
    %55 = vector.load %arg8[%c0_32, %c0_33] : memref<64x128xbf16, #tpu.memory_space<vmem>>, vector<64x128xbf16>
    %c0_34 = arith.constant 0 : index
    %c0_35 = arith.constant 0 : index
    %56 = vector.load %arg13[%c0_34, %c0_35] : memref<128x89xbf16, #tpu.memory_space<vmem>>, vector<128x89xbf16>
    %cst_36 = arith.constant dense<0.000000e+00> : vector<64x89xf32>
    %57 = tpu.matmul %55, %56, %cst_36 {dimension_numbers = #tpu.dot_dimension_numbers<[1], [0], [0], [1], [0, 0, 1, 1], [], []>} : vector<64x128xbf16>, vector<128x89xbf16>, vector<64x89xf32> -> vector<64x89xf32>
    %c0_37 = arith.constant 0 : index
    %c0_38 = arith.constant 0 : index
    %58 = vector.load %arg9[%c0_37, %c0_38] : memref<64x1xf32, #tpu.memory_space<vmem>>, vector<64x1xf32>
    %59 = vector.broadcast %58 : vector<64x1xf32> to vector<64x89xf32>
    %60 = arith.addf %57, %59 : vector<64x89xf32>
    %cst_39 = arith.constant 0.000000e+00 : f32
    %61 = vector.broadcast %cst_39 : f32 to vector<64x89xf32>
    %62 = arith.maximumf %60, %61 : vector<64x89xf32>
    %63 = vector.extract_strided_slice %62 {offsets = [0, 0], sizes = [64, 78], strides = [1, 1]} : vector<64x89xf32> to vector<64x78xf32>
    %64 = vector.extract_strided_slice %62 {offsets = [0, 1], sizes = [64, 78], strides = [1, 1]} : vector<64x89xf32> to vector<64x78xf32>
    %65 = arith.maximumf %63, %64 : vector<64x78xf32>
    %66 = vector.extract_strided_slice %62 {offsets = [0, 10], sizes = [64, 78], strides = [1, 1]} : vector<64x89xf32> to vector<64x78xf32>
    %67 = vector.extract_strided_slice %62 {offsets = [0, 11], sizes = [64, 78], strides = [1, 1]} : vector<64x89xf32> to vector<64x78xf32>
    %68 = arith.maximumf %66, %67 : vector<64x78xf32>
    %69 = arith.maximumf %65, %68 : vector<64x78xf32>
    %70 = arith.truncf %69 : vector<64x78xf32> to vector<64x78xbf16>
    %c0_40 = arith.constant 0 : index
    %c0_41 = arith.constant 0 : index
    %71 = vector.load %arg10[%c0_40, %c0_41] : memref<78x16xbf16, #tpu.memory_space<vmem>>, vector<78x16xbf16>
    %cst_42 = arith.constant dense<0.000000e+00> : vector<64x16xf32>
    %72 = tpu.matmul %70, %71, %cst_42 {dimension_numbers = #tpu.dot_dimension_numbers<[1], [0], [0], [1], [0, 0, 1, 1], [], []>} : vector<64x78xbf16>, vector<78x16xbf16>, vector<64x16xf32> -> vector<64x16xf32>
    %73 = arith.truncf %72 : vector<64x16xf32> to vector<64x16xbf16>
    %c0_43 = arith.constant 0 : index
    %c0_44 = arith.constant 0 : index
    %c0_45 = arith.constant 0 : index
    %74 = vector.load %arg11[%c0_43, %c0_44, %c0_45] : memref<1x64x16xbf16, #tpu.memory_space<vmem>>, vector<1x64x16xbf16>
    %75 = vector.shape_cast %74 : vector<1x64x16xbf16> to vector<64x16xbf16>
    %76 = vector.shape_cast %73 : vector<64x16xbf16> to vector<1x64x16xbf16>
    tpu.vector_store %arg11[%c0_43, %c0_44, %c0_45], %76 {strides = array<i32>} : memref<1x64x16xbf16, #tpu.memory_space<vmem>>, vector<1x64x16xbf16>,
    return
  }
  func.func @transform_0(%arg0: i32) -> (i32, i32, i32) {
    %c0_i32 = arith.constant 0 : i32
    %c0_i32_0 = arith.constant 0 : i32
    %c0_i32_1 = arith.constant 0 : i32
    return %arg0, %c0_i32, %c0_i32_0 : i32, i32, i32
  }
  func.func @transform_1(%arg0: i32) -> (i32, i32) {
    %c0_i32 = arith.constant 0 : i32
    %c0_i32_0 = arith.constant 0 : i32
    %c0_i32_1 = arith.constant 0 : i32
    return %c0_i32, %c0_i32_0 : i32, i32
  }
  func.func @transform_2(%arg0: i32) -> (i32, i32) {
    %c0_i32 = arith.constant 0 : i32
    %c0_i32_0 = arith.constant 0 : i32
    %c0_i32_1 = arith.constant 0 : i32
    return %c0_i32, %c0_i32_0 : i32, i32
  }
  func.func @transform_3(%arg0: i32) -> (i32, i32) {
    %c0_i32 = arith.constant 0 : i32
    %c0_i32_0 = arith.constant 0 : i32
    %c0_i32_1 = arith.constant 0 : i32
    return %c0_i32, %c0_i32_0 : i32, i32
  }
  func.func @transform_4(%arg0: i32) -> (i32, i32) {
    %c0_i32 = arith.constant 0 : i32
    %c0_i32_0 = arith.constant 0 : i32
    %c0_i32_1 = arith.constant 0 : i32
    return %c0_i32, %c0_i32_0 : i32, i32
  }
  func.func @transform_5(%arg0: i32) -> (i32, i32) {
    %c0_i32 = arith.constant 0 : i32
    %c0_i32_0 = arith.constant 0 : i32
    %c0_i32_1 = arith.constant 0 : i32
    return %c0_i32, %c0_i32_0 : i32, i32
  }
  func.func @transform_6(%arg0: i32) -> (i32, i32) {
    %c0_i32 = arith.constant 0 : i32
    %c0_i32_0 = arith.constant 0 : i32
    %c0_i32_1 = arith.constant 0 : i32
    return %c0_i32, %c0_i32_0 : i32, i32
  }
  func.func @transform_7(%arg0: i32) -> (i32, i32) {
    %c0_i32 = arith.constant 0 : i32
    %c0_i32_0 = arith.constant 0 : i32
    %c0_i32_1 = arith.constant 0 : i32
    return %c0_i32, %c0_i32_0 : i32, i32
  }
  func.func @transform_8(%arg0: i32) -> (i32, i32) {
    %c0_i32 = arith.constant 0 : i32
    %c0_i32_0 = arith.constant 0 : i32
    %c0_i32_1 = arith.constant 0 : i32
    return %c0_i32, %c0_i32_0 : i32, i32
  }
  func.func @transform_9(%arg0: i32) -> (i32, i32) {
    %c0_i32 = arith.constant 0 : i32
    %c0_i32_0 = arith.constant 0 : i32
    %c0_i32_1 = arith.constant 0 : i32
    return %c0_i32, %c0_i32_0 : i32, i32
  }
  func.func @transform_10(%arg0: i32) -> (i32, i32, i32) {
    %c0_i32 = arith.constant 0 : i32
    %c0_i32_0 = arith.constant 0 : i32
    %c0_i32_1 = arith.constant 0 : i32
    return %arg0, %c0_i32, %c0_i32_0 : i32, i32, i32
  }
}

</mosaic_0001>

<llo_original>
// kernel: small_cnn_forward.3
$region0: #{small_cnn_forward.3}
  #allocation0 [shape = 'u32[]', space=smem, size = 0x4, offset = 0x4, fixed_abs, tag = 'smem constant byte address 0x4 - core index']
  #allocation1 [shape = 'u32[72,128]{1,0:T(1,128)}', space=vmem, size = 0x9000, scoped, tag = 'internal scratch']
  %s0 = inlined_call_operand.vmem [shape: bf16[2,1024], index: 0, kind: input, shape index: {}]
  %s1 = inlined_call_operand.vmem [shape: bf16[1024,512], index: 1, kind: input, shape index: {}]
  %s2 = inlined_call_operand.vmem [shape: f32[1,512], index: 2, kind: input, shape index: {}]
  %s3 = inlined_call_operand.vmem [shape: bf16[512,128], index: 3, kind: input, shape index: {}]
  %s4 = inlined_call_operand.vmem [shape: f32[1,128], index: 4, kind: input, shape index: {}]
  %s5 = inlined_call_operand.hbm [shape: f32[2,128], index: 5, kind: output, shape index: {}]
  %s6 = sld [smem:[#allocation0]]
  $region30: #{small_cnn_forward.3} parent=0
    _
  %s8 = ssub.s32 1, %s6
  %s9 = scalar_select 0, %s8, %s6
  $region1: #{small_cnn_forward.3} parent=0
    #allocation2 [shape = 'u8[1024]{0}', space=vmem, size = 0x400, scoped, tag = 'output window, operand 0, single buffered']
    #allocation3 [shape = 's32[1]{0}', space=sflag, size = 0x4, scoped, tag = 'scoped memory for small_cnn_forward.3']
    %10 = vsyncpa [#allocation3], 0
    // Predicated region
    $region2: #{small_cnn_forward.3} parent=1 // pred_check
      _
    $region3: #{small_cnn_forward.3} parent=1 // pred_check_branch
      %12 = sbr.rel (0) target = $region5
    $region4: #{small_cnn_forward.3} parent=1 // pred_region
      _
    $region5: #{small_cnn_forward.3} parent=1 // pred_fallthru
      _
    // Predicated region
    $region6: #{small_cnn_forward.3} parent=1 // pred_check
      _
    $region7: #{small_cnn_forward.3} parent=1 // pred_check_branch
      %14 = sbr.rel (0) target = $region9
    $region8: #{small_cnn_forward.3} parent=1 // pred_region
      _
    $region9: #{small_cnn_forward.3} parent=1 // pred_fallthru
      _
    // Predicated region
    $region10: #{small_cnn_forward.3} parent=1 // pred_check
      _
    $region11: #{small_cnn_forward.3} parent=1 // pred_check_branch
      %16 = sbr.rel (0) target = $region13
    $region12: #{small_cnn_forward.3} parent=1 // pred_region
      _
    $region13: #{small_cnn_forward.3} parent=1 // pred_fallthru
      _
    // Predicated region
    $region14: #{small_cnn_forward.3} parent=1 // pred_check
      _
    $region15: #{small_cnn_forward.3} parent=1 // pred_check_branch
      %18 = sbr.rel (0) target = $region17
    $region16: #{small_cnn_forward.3} parent=1 // pred_region
      _
    $region17: #{small_cnn_forward.3} parent=1 // pred_fallthru
      _
    // Predicated region
    $region18: #{small_cnn_forward.3} parent=1 // pred_check
      _
    $region19: #{small_cnn_forward.3} parent=1 // pred_check_branch
      %20 = sbr.rel (0) target = $region21
    $region20: #{small_cnn_forward.3} parent=1 // pred_region
      _
    $region21: #{small_cnn_forward.3} parent=1 // pred_fallthru
      _
    %v21 = vld [vmem:[%s0] sm:$0xff]
    %v22 = vld [vmem:[%s1] sm:$0xff]
    %v23 = vld [vmem:[%s1 + $0x8] sm:$0xff]
    %v24 = vld [vmem:[%s1 + $0x10] sm:$0xff]
    %v25 = vld [vmem:[%s1 + $0x18] sm:$0xff]
    %v26 = vld [vmem:[%s1 + $0x20] sm:$0xff]
    %v27 = vld [vmem:[%s1 + $0x28] sm:$0xff]
    %v28 = vld [vmem:[%s1 + $0x30] sm:$0xff]
    %v29 = vld [vmem:[%s1 + $0x38] sm:$0xff]
    %v30 = vld [vmem:[%s1 + $0x40] sm:$0xff]
    %v31 = vld [vmem:[%s1 + $0x48] sm:$0xff]
    %v32 = vld [vmem:[%s1 + $0x50] sm:$0xff]
    %v33 = vld [vmem:[%s1 + $0x58] sm:$0xff]
    %v34 = vld [vmem:[%s1 + $0x60] sm:$0xff]
    %v35 = vld [vmem:[%s1 + $0x68] sm:$0xff]
    %v36 = vld [vmem:[%s1 + $0x70] sm:$0xff]
    %v37 = vld [vmem:[%s1 + $0x78] sm:$0xff]
    %v38 = vld [vmem:[%s1 + $0x80] sm:$0xff]
    %v39 = vld [vmem:[%s1 + $0x88] sm:$0xff]
    %v40 = vld [vmem:[%s1 + $0x90] sm:$0xff]
    %v41 = vld [vmem:[%s1 + $0x98] sm:$0xff]
    %v42 = vld [vmem:[%s1 + $0xa0] sm:$0xff]
    %v43 = vld [vmem:[%s1 + $0xa8] sm:$0xff]
    %v44 = vld [vmem:[%s1 + $0xb0] sm:$0xff]
    %v45 = vld [vmem:[%s1 + $0xb8] sm:$0xff]
    %v46 = vld [vmem:[%s1 + $0xc0] sm:$0xff]
    %v47 = vld [vmem:[%s1 + $0xc8] sm:$0xff]
    %v48 = vld [vmem:[%s1 + $0xd0] sm:$0xff]
    %v49 = vld [vmem:[%s1 + $0xd8] sm:$0xff]
    %v50 = vld [vmem:[%s1 + $0xe0] sm:$0xff]
    %v51 = vld [vmem:[%s1 + $0xe8] sm:$0xff]
    %v52 = vld [vmem:[%s1 + $0xf0] sm:$0xff]
    %v53 = vld [vmem:[%s1 + $0xf8] sm:$0xff]
    %v54 = vld [vmem:[%s1 + $0x100] sm:$0xff]
    %v55 = vld [vmem:[%s1 + $0x108] sm:$0xff]
    %v56 = vld [vmem:[%s1 + $0x110] sm:$0xff]
    %v57 = vld [vmem:[%s1 + $0x118] sm:$0xff]
    %v58 = vld [vmem:[%s1 + $0x120] sm:$0xff]
    %v59 = vld [vmem:[%s1 + $0x128] sm:$0xff]
    %v60 = vld [vmem:[%s1 + $0x130] sm:$0xff]
    %v61 = vld [vmem:[%s1 + $0x138] sm:$0xff]
    %v62 = vld [vmem:[%s1 + $0x140] sm:$0xff]
    %v63 = vld [vmem:[%s1 + $0x148] sm:$0xff]
    %v64 = vld [vmem:[%s1 + $0x150] sm:$0xff]
    %v65 = vld [vmem:[%s1 + $0x158] sm:$0xff]
    %v66 = vld [vmem:[%s1 + $0x160] sm:$0xff]
    %v67 = vld [vmem:[%s1 + $0x168] sm:$0xff]
    %v68 = vld [vmem:[%s1 + $0x170] sm:$0xff]
    %v69 = vld [vmem:[%s1 + $0x178] sm:$0xff]
    %v70 = vld [vmem:[%s1 + $0x180] sm:$0xff]
    %v71 = vld [vmem:[%s1 + $0x188] sm:$0xff]
    %v72 = vld [vmem:[%s1 + $0x190] sm:$0xff]
    %v73 = vld [vmem:[%s1 + $0x198] sm:$0xff]
    %v74 = vld [vmem:[%s1 + $0x1a0] sm:$0xff]
    %v75 = vld [vmem:[%s1 + $0x1a8] sm:$0xff]
    %v76 = vld [vmem:[%s1 + $0x1b0] sm:$0xff]
    %v77 = vld [vmem:[%s1 + $0x1b8] sm:$0xff]
    %v78 = vld [vmem:[%s1 + $0x1c0] sm:$0xff]
    %v79 = vld [vmem:[%s1 + $0x1c8] sm:$0xff]
    %v80 = vld [vmem:[%s1 + $0x1d0] sm:$0xff]
    %v81 = vld [vmem:[%s1 + $0x1d8] sm:$0xff]
    %v82 = vld [vmem:[%s1 + $0x1e0] sm:$0xff]
    %v83 = vld [vmem:[%s1 + $0x1e8] sm:$0xff]
    %v84 = vld [vmem:[%s1 + $0x1f0] sm:$0xff]
    %v85 = vld [vmem:[%s1 + $0x1f8] sm:$0xff]
    %v86 = vld [vmem:[%s1 + $0x200] sm:$0xff]
    %v87 = vld [vmem:[%s1 + $0x208] sm:$0xff]
    %v88 = vld [vmem:[%s1 + $0x210] sm:$0xff]
    %v89 = vld [vmem:[%s1 + $0x218] sm:$0xff]
    %v90 = vld [vmem:[%s1 + $0x220] sm:$0xff]
    %v91 = vld [vmem:[%s1 + $0x228] sm:$0xff]
    %v92 = vld [vmem:[%s1 + $0x230] sm:$0xff]
    %v93 = vld [vmem:[%s1 + $0x238] sm:$0xff]
    %v94 = vld [vmem:[%s1 + $0x240] sm:$0xff]
    %v95 = vld [vmem:[%s1 + $0x248] sm:$0xff]
    %v96 = vld [vmem:[%s1 + $0x250] sm:$0xff]
    %v97 = vld [vmem:[%s1 + $0x258] sm:$0xff]
    %v98 = vld [vmem:[%s1 + $0x260] sm:$0xff]
    %v99 = vld [vmem:[%s1 + $0x268] sm:$0xff]
    %v100 = vld [vmem:[%s1 + $0x270] sm:$0xff]
    %v101 = vld [vmem:[%s1 + $0x278] sm:$0xff]
    %v102 = vld [vmem:[%s1 + $0x280] sm:$0xff]
    %v103 = vld [vmem:[%s1 + $0x288] sm:$0xff]
    %v104 = vld [vmem:[%s1 + $0x290] sm:$0xff]
    %v105 = vld [vmem:[%s1 + $0x298] sm:$0xff]
    %v106 = vld [vmem:[%s1 + $0x2a0] sm:$0xff]
    %v107 = vld [vmem:[%s1 + $0x2a8] sm:$0xff]
    %v108 = vld [vmem:[%s1 + $0x2b0] sm:$0xff]
    %v109 = vld [vmem:[%s1 + $0x2b8] sm:$0xff]
    %v110 = vld [vmem:[%s1 + $0x2c0] sm:$0xff]
    %v111 = vld [vmem:[%s1 + $0x2c8] sm:$0xff]
    %v112 = vld [vmem:[%s1 + $0x2d0] sm:$0xff]
    %v113 = vld [vmem:[%s1 + $0x2d8] sm:$0xff]
    %v114 = vld [vmem:[%s1 + $0x2e0] sm:$0xff]
    %v115 = vld [vmem:[%s1 + $0x2e8] sm:$0xff]
    %v116 = vld [vmem:[%s1 + $0x2f0] sm:$0xff]
    %v117 = vld [vmem:[%s1 + $0x2f8] sm:$0xff]
    %v118 = vld [vmem:[%s1 + $0x300] sm:$0xff]
    %v119 = vld [vmem:[%s1 + $0x308] sm:$0xff]
    %v120 = vld [vmem:[%s1 + $0x310] sm:$0xff]
    %v121 = vld [vmem:[%s1 + $0x318] sm:$0xff]
    %v122 = vld [vmem:[%s1 + $0x320] sm:$0xff]
    %v123 = vld [vmem:[%s1 + $0x328] sm:$0xff]
    %v124 = vld [vmem:[%s1 + $0x330] sm:$0xff]
    %v125 = vld [vmem:[%s1 + $0x338] sm:$0xff]
    %v126 = vld [vmem:[%s1 + $0x340] sm:$0xff]
    %v127 = vld [vmem:[%s1 + $0x348] sm:$0xff]
    %v128 = vld [vmem:[%s1 + $0x350] sm:$0xff]
    %v129 = vld [vmem:[%s1 + $0x358] sm:$0xff]
    %v130 = vld [vmem:[%s1 + $0x360] sm:$0xff]
    %v131 = vld [vmem:[%s1 + $0x368] sm:$0xff]
    %v132 = vld [vmem:[%s1 + $0x370] sm:$0xff]
    %v133 = vld [vmem:[%s1 + $0x378] sm:$0xff]
    %v134 = vld [vmem:[%s1 + $0x380] sm:$0xff]
    %v135 = vld [vmem:[%s1 + $0x388] sm:$0xff]
    %v136 = vld [vmem:[%s1 + $0x390] sm:$0xff]
    %v137 = vld [vmem:[%s1 + $0x398] sm:$0xff]
    %v138 = vld [vmem:[%s1 + $0x3a0] sm:$0xff]
    %v139 = vld [vmem:[%s1 + $0x3a8] sm:$0xff]
    %v140 = vld [vmem:[%s1 + $0x3b0] sm:$0xff]
    %v141 = vld [vmem:[%s1 + $0x3b8] sm:$0xff]
    %v142 = vld [vmem:[%s1 + $0x3c0] sm:$0xff]
    %v143 = vld [vmem:[%s1 + $0x3c8] sm:$0xff]
    %v144 = vld [vmem:[%s1 + $0x3d0] sm:$0xff]
    %v145 = vld [vmem:[%s1 + $0x3d8] sm:$0xff]
    %v146 = vld [vmem:[%s1 + $0x3e0] sm:$0xff]
    %v147 = vld [vmem:[%s1 + $0x3e8] sm:$0xff]
    %v148 = vld [vmem:[%s1 + $0x3f0] sm:$0xff]
    %v149 = vld [vmem:[%s1 + $0x3f8] sm:$0xff]
    %v150 = vld [vmem:[%s1 + $0x400] sm:$0xff]
    %v151 = vld [vmem:[%s1 + $0x408] sm:$0xff]
    %v152 = vld [vmem:[%s1 + $0x410] sm:$0xff]
    %v153 = vld [vmem:[%s1 + $0x418] sm:$0xff]
    %v154 = vld [vmem:[%s1 + $0x420] sm:$0xff]
    %v155 = vld [vmem:[%s1 + $0x428] sm:$0xff]
    %v156 = vld [vmem:[%s1 + $0x430] sm:$0xff]
    %v157 = vld [vmem:[%s1 + $0x438] sm:$0xff]
    %v158 = vld [vmem:[%s1 + $0x440] sm:$0xff]
    %v159 = vld [vmem:[%s1 + $0x448] sm:$0xff]
    %v160 = vld [vmem:[%s1 + $0x450] sm:$0xff]
    %v161 = vld [vmem:[%s1 + $0x458] sm:$0xff]
    %v162 = vld [vmem:[%s1 + $0x460] sm:$0xff]
    %v163 = vld [vmem:[%s1 + $0x468] sm:$0xff]
    %v164 = vld [vmem:[%s1 + $0x470] sm:$0xff]
    %v165 = vld [vmem:[%s1 + $0x478] sm:$0xff]
    %v166 = vld [vmem:[%s1 + $0x480] sm:$0xff]
    %v167 = vld [vmem:[%s1 + $0x488] sm:$0xff]
    %v168 = vld [vmem:[%s1 + $0x490] sm:$0xff]
    %v169 = vld [vmem:[%s1 + $0x498] sm:$0xff]
    %v170 = vld [vmem:[%s1 + $0x4a0] sm:$0xff]
    %v171 = vld [vmem:[%s1 + $0x4a8] sm:$0xff]
    %v172 = vld [vmem:[%s1 + $0x4b0] sm:$0xff]
    %v173 = vld [vmem:[%s1 + $0x4b8] sm:$0xff]
    %v174 = vld [vmem:[%s1 + $0x4c0] sm:$0xff]
    %v175 = vld [vmem:[%s1 + $0x4c8] sm:$0xff]
    %v176 = vld [vmem:[%s1 + $0x4d0] sm:$0xff]
    %v177 = vld [vmem:[%s1 + $0x4d8] sm:$0xff]
    %v178 = vld [vmem:[%s1 + $0x4e0] sm:$0xff]
    %v179 = vld [vmem:[%s1 + $0x4e8] sm:$0xff]
    %v180 = vld [vmem:[%s1 + $0x4f0] sm:$0xff]
    %v181 = vld [vmem:[%s1 + $0x4f8] sm:$0xff]
    %v182 = vld [vmem:[%s1 + $0x500] sm:$0xff]
    %v183 = vld [vmem:[%s1 + $0x508] sm:$0xff]
    %v184 = vld [vmem:[%s1 + $0x510] sm:$0xff]
    %v185 = vld [vmem:[%s1 + $0x518] sm:$0xff]
    %v186 = vld [vmem:[%s1 + $0x520] sm:$0xff]
    %v187 = vld [vmem:[%s1 + $0x528] sm:$0xff]
    %v188 = vld [vmem:[%s1 + $0x530] sm:$0xff]
    %v189 = vld [vmem:[%s1 + $0x538] sm:$0xff]
    %v190 = vld [vmem:[%s1 + $0x540] sm:$0xff]
    %v191 = vld [vmem:[%s1 + $0x548] sm:$0xff]
    %v192 = vld [vmem:[%s1 + $0x550] sm:$0xff]
    %v193 = vld [vmem:[%s1 + $0x558] sm:$0xff]
    %v194 = vld [vmem:[%s1 + $0x560] sm:$0xff]
    %v195 = vld [vmem:[%s1 + $0x568] sm:$0xff]
    %v196 = vld [vmem:[%s1 + $0x570] sm:$0xff]
    %v197 = vld [vmem:[%s1 + $0x578] sm:$0xff]
    %v198 = vld [vmem:[%s1 + $0x580] sm:$0xff]
    %v199 = vld [vmem:[%s1 + $0x588] sm:$0xff]
    %v200 = vld [vmem:[%s1 + $0x590] sm:$0xff]
    %v201 = vld [vmem:[%s1 + $0x598] sm:$0xff]
    %v202 = vld [vmem:[%s1 + $0x5a0] sm:$0xff]
    %v203 = vld [vmem:[%s1 + $0x5a8] sm:$0xff]
    %v204 = vld [vmem:[%s1 + $0x5b0] sm:$0xff]
    %v205 = vld [vmem:[%s1 + $0x5b8] sm:$0xff]
    %v206 = vld [vmem:[%s1 + $0x5c0] sm:$0xff]
    %v207 = vld [vmem:[%s1 + $0x5c8] sm:$0xff]
    %v208 = vld [vmem:[%s1 + $0x5d0] sm:$0xff]
    %v209 = vld [vmem:[%s1 + $0x5d8] sm:$0xff]
    %v210 = vld [vmem:[%s1 + $0x5e0] sm:$0xff]
    %v211 = vld [vmem:[%s1 + $0x5e8] sm:$0xff]
    %v212 = vld [vmem:[%s1 + $0x5f0] sm:$0xff]
    %v213 = vld [vmem:[%s1 + $0x5f8] sm:$0xff]
    %v214 = vld [vmem:[%s1 + $0x600] sm:$0xff]
    %v215 = vld [vmem:[%s1 + $0x608] sm:$0xff]
    %v216 = vld [vmem:[%s1 + $0x610] sm:$0xff]
    %v217 = vld [vmem:[%s1 + $0x618] sm:$0xff]
    %v218 = vld [vmem:[%s1 + $0x620] sm:$0xff]
    %v219 = vld [vmem:[%s1 + $0x628] sm:$0xff]
    %v220 = vld [vmem:[%s1 + $0x630] sm:$0xff]
    %v221 = vld [vmem:[%s1 + $0x638] sm:$0xff]
    %v222 = vld [vmem:[%s1 + $0x640] sm:$0xff]
    %v223 = vld [vmem:[%s1 + $0x648] sm:$0xff]
    %v224 = vld [vmem:[%s1 + $0x650] sm:$0xff]
    %v225 = vld [vmem:[%s1 + $0x658] sm:$0xff]
    %v226 = vld [vmem:[%s1 + $0x660] sm:$0xff]
    %v227 = vld [vmem:[%s1 + $0x668] sm:$0xff]
    %v228 = vld [vmem:[%s1 + $0x670] sm:$0xff]
    %v229 = vld [vmem:[%s1 + $0x678] sm:$0xff]
    %v230 = vld [vmem:[%s1 + $0x680] sm:$0xff]
    %v231 = vld [vmem:[%s1 + $0x688] sm:$0xff]
    %v232 = vld [vmem:[%s1 + $0x690] sm:$0xff]
    %v233 = vld [vmem:[%s1 + $0x698] sm:$0xff]
    %v234 = vld [vmem:[%s1 + $0x6a0] sm:$0xff]
    %v235 = vld [vmem:[%s1 + $0x6a8] sm:$0xff]
    %v236 = vld [vmem:[%s1 + $0x6b0] sm:$0xff]
    %v237 = vld [vmem:[%s1 + $0x6b8] sm:$0xff]
    %v238 = vld [vmem:[%s1 + $0x6c0] sm:$0xff]
    %v239 = vld [vmem:[%s1 + $0x6c8] sm:$0xff]
    %v240 = vld [vmem:[%s1 + $0x6d0] sm:$0xff]
    %v241 = vld [vmem:[%s1 + $0x6d8] sm:$0xff]
    %v242 = vld [vmem:[%s1 + $0x6e0] sm:$0xff]
    %v243 = vld [vmem:[%s1 + $0x6e8] sm:$0xff]
    %v244 = vld [vmem:[%s1 + $0x6f0] sm:$0xff]
    %v245 = vld [vmem:[%s1 + $0x6f8] sm:$0xff]
    %v246 = vld [vmem:[%s1 + $0x700] sm:$0xff]
    %v247 = vld [vmem:[%s1 + $0x708] sm:$0xff]
    %v248 = vld [vmem:[%s1 + $0x710] sm:$0xff]
    %v249 = vld [vmem:[%s1 + $0x718] sm:$0xff]
    %v250 = vld [vmem:[%s1 + $0x720] sm:$0xff]
    %v251 = vld [vmem:[%s1 + $0x728] sm:$0xff]
    %v252 = vld [vmem:[%s1 + $0x730] sm:$0xff]
    %v253 = vld [vmem:[%s1 + $0x738] sm:$0xff]
    %v254 = vld [vmem:[%s1 + $0x740] sm:$0xff]
    %v255 = vld [vmem:[%s1 + $0x748] sm:$0xff]
    %v256 = vld [vmem:[%s1 + $0x750] sm:$0xff]
    %v257 = vld [vmem:[%s1 + $0x758] sm:$0xff]
    %v258 = vld [vmem:[%s1 + $0x760] sm:$0xff]
    %v259 = vld [vmem:[%s1 + $0x768] sm:$0xff]
    %v260 = vld [vmem:[%s1 + $0x770] sm:$0xff]
    %v261 = vld [vmem:[%s1 + $0x778] sm:$0xff]
    %v262 = vld [vmem:[%s1 + $0x780] sm:$0xff]
    %v263 = vld [vmem:[%s1 + $0x788] sm:$0xff]
    %v264 = vld [vmem:[%s1 + $0x790] sm:$0xff]
    %v265 = vld [vmem:[%s1 + $0x798] sm:$0xff]
    %v266 = vld [vmem:[%s1 + $0x7a0] sm:$0xff]
    %v267 = vld [vmem:[%s1 + $0x7a8] sm:$0xff]
    %v268 = vld [vmem:[%s1 + $0x7b0] sm:$0xff]
    %v269 = vld [vmem:[%s1 + $0x7b8] sm:$0xff]
    %v270 = vld [vmem:[%s1 + $0x7c0] sm:$0xff]
    %v271 = vld [vmem:[%s1 + $0x7c8] sm:$0xff]
    %v272 = vld [vmem:[%s1 + $0x7d0] sm:$0xff]
    %v273 = vld [vmem:[%s1 + $0x7d8] sm:$0xff]
    %v274 = vld [vmem:[%s1 + $0x7e0] sm:$0xff]
    %v275 = vld [vmem:[%s1 + $0x7e8] sm:$0xff]
    %v276 = vld [vmem:[%s1 + $0x7f0] sm:$0xff]
    %v277 = vld [vmem:[%s1 + $0x7f8] sm:$0xff]
    %v278 = vld [vmem:[%s2] sm:$0xf]
    %v280 = vperm.slane %v278, 0
    %v281 = vperm.slane %v278, 1
    %v282 = vperm.slane %v278, 2
    %v283 = vperm.slane %v278, 3
    %289 = vst [vmem:[#allocation1] ss:$9 sm:$0xff] %v21
    %v290 = vld [vmem:[#allocation1] sm:$0xff]
    %v291 = vld [vmem:[#allocation1 + $0x9] sm:$0xff]
    %v292 = vld [vmem:[#allocation1 + $0x12] sm:$0xff]
    %v293 = vld [vmem:[#allocation1 + $0x1b] sm:$0xff]
    %v294 = vld [vmem:[#allocation1 + $0x24] sm:$0xff]
    %v295 = vld [vmem:[#allocation1 + $0x2d] sm:$0xff]
    %v296 = vld [vmem:[#allocation1 + $0x36] sm:$0xff]
    %v297 = vld [vmem:[#allocation1 + $0x3f] sm:$0xff]
    %v562 = vunpack.c.l.b16 %v22
    %v563 = vunpack.c.h.b16 %v22
    %v564 = vunpack.c.l.b16 %v23
    %v565 = vunpack.c.h.b16 %v23
    %v566 = vunpack.c.l.b16 %v24
    %v567 = vunpack.c.h.b16 %v24
    %v568 = vunpack.c.l.b16 %v25
    %v569 = vunpack.c.h.b16 %v25
    %v570 = vunpack.c.l.b16 %v26
    %v571 = vunpack.c.h.b16 %v26
    %v572 = vunpack.c.l.b16 %v27
    %v573 = vunpack.c.h.b16 %v27
    %v574 = vunpack.c.l.b16 %v28
    %v575 = vunpack.c.h.b16 %v28
    %v576 = vunpack.c.l.b16 %v29
    %v577 = vunpack.c.h.b16 %v29
    %v578 = vunpack.c.l.b16 %v30
    %v579 = vunpack.c.h.b16 %v30
    %v580 = vunpack.c.l.b16 %v31
    %v581 = vunpack.c.h.b16 %v31
    %v582 = vunpack.c.l.b16 %v32
    %v583 = vunpack.c.h.b16 %v32
    %v584 = vunpack.c.l.b16 %v33
    %v585 = vunpack.c.h.b16 %v33
    %v586 = vunpack.c.l.b16 %v34
    %v587 = vunpack.c.h.b16 %v34
    %v588 = vunpack.c.l.b16 %v35
    %v589 = vunpack.c.h.b16 %v35
    %v590 = vunpack.c.l.b16 %v36
    %v591 = vunpack.c.h.b16 %v36
    %v592 = vunpack.c.l.b16 %v37
    %v593 = vunpack.c.h.b16 %v37
    %v594 = vunpack.c.l.b16 %v38
    %v595 = vunpack.c.h.b16 %v38
    %v596 = vunpack.c.l.b16 %v39
    %v597 = vunpack.c.h.b16 %v39
    %v598 = vunpack.c.l.b16 %v40
    %v599 = vunpack.c.h.b16 %v40
    %v600 = vunpack.c.l.b16 %v41
    %v601 = vunpack.c.h.b16 %v41
    %v602 = vunpack.c.l.b16 %v42
    %v603 = vunpack.c.h.b16 %v42
    %v604 = vunpack.c.l.b16 %v43
    %v605 = vunpack.c.h.b16 %v43
    %v606 = vunpack.c.l.b16 %v44
    %v607 = vunpack.c.h.b16 %v44
    %v608 = vunpack.c.l.b16 %v45
    %v609 = vunpack.c.h.b16 %v45
    %v610 = vunpack.c.l.b16 %v46
    %v611 = vunpack.c.h.b16 %v46
    %v612 = vunpack.c.l.b16 %v47
    %v613 = vunpack.c.h.b16 %v47
    %v614 = vunpack.c.l.b16 %v48
    %v615 = vunpack.c.h.b16 %v48
    %v616 = vunpack.c.l.b16 %v49
    %v617 = vunpack.c.h.b16 %v49
    %v618 = vunpack.c.l.b16 %v50
    %v619 = vunpack.c.h.b16 %v50
    %v620 = vunpack.c.l.b16 %v51
    %v621 = vunpack.c.h.b16 %v51
    %v622 = vunpack.c.l.b16 %v52
    %v623 = vunpack.c.h.b16 %v52
    %v624 = vunpack.c.l.b16 %v53
    %v625 = vunpack.c.h.b16 %v53
    %v626 = vunpack.c.l.b16 %v54
    %v627 = vunpack.c.h.b16 %v54
    %v628 = vunpack.c.l.b16 %v55
    %v629 = vunpack.c.h.b16 %v55
    %v630 = vunpack.c.l.b16 %v56
    %v631 = vunpack.c.h.b16 %v56
    %v632 = vunpack.c.l.b16 %v57
    %v633 = vunpack.c.h.b16 %v57
    %v634 = vunpack.c.l.b16 %v58
    %v635 = vunpack.c.h.b16 %v58
    %v636 = vunpack.c.l.b16 %v59
    %v637 = vunpack.c.h.b16 %v59
    %v638 = vunpack.c.l.b16 %v60
    %v639 = vunpack.c.h.b16 %v60
    %v640 = vunpack.c.l.b16 %v61
    %v641 = vunpack.c.h.b16 %v61
    %v642 = vunpack.c.l.b16 %v62
    %v643 = vunpack.c.h.b16 %v62
    %v644 = vunpack.c.l.b16 %v63
    %v645 = vunpack.c.h.b16 %v63
    %v646 = vunpack.c.l.b16 %v64
    %v647 = vunpack.c.h.b16 %v64
    %v648 = vunpack.c.l.b16 %v65
    %v649 = vunpack.c.h.b16 %v65
    %v650 = vunpack.c.l.b16 %v66
    %v651 = vunpack.c.h.b16 %v66
    %v652 = vunpack.c.l.b16 %v67
    %v653 = vunpack.c.h.b16 %v67
    %v654 = vunpack.c.l.b16 %v68
    %v655 = vunpack.c.h.b16 %v68
    %v656 = vunpack.c.l.b16 %v69
    %v657 = vunpack.c.h.b16 %v69
    %v658 = vunpack.c.l.b16 %v70
    %v659 = vunpack.c.h.b16 %v70
    %v660 = vunpack.c.l.b16 %v71
    %v661 = vunpack.c.h.b16 %v71
    %v662 = vunpack.c.l.b16 %v72
    %v663 = vunpack.c.h.b16 %v72
    %v664 = vunpack.c.l.b16 %v73
    %v665 = vunpack.c.h.b16 %v73
    %v666 = vunpack.c.l.b16 %v74
    %v667 = vunpack.c.h.b16 %v74
    %v668 = vunpack.c.l.b16 %v75
    %v669 = vunpack.c.h.b16 %v75
    %v670 = vunpack.c.l.b16 %v76
    %v671 = vunpack.c.h.b16 %v76
    %v672 = vunpack.c.l.b16 %v77
    %v673 = vunpack.c.h.b16 %v77
    %v674 = vunpack.c.l.b16 %v78
    %v675 = vunpack.c.h.b16 %v78
    %v676 = vunpack.c.l.b16 %v79
    %v677 = vunpack.c.h.b16 %v79
    %v678 = vunpack.c.l.b16 %v80
    %v679 = vunpack.c.h.b16 %v80
    %v680 = vunpack.c.l.b16 %v81
    %v681 = vunpack.c.h.b16 %v81
    %v682 = vunpack.c.l.b16 %v82
    %v683 = vunpack.c.h.b16 %v82
    %v684 = vunpack.c.l.b16 %v83
    %v685 = vunpack.c.h.b16 %v83
    %v686 = vunpack.c.l.b16 %v84
    %v687 = vunpack.c.h.b16 %v84
    %v688 = vunpack.c.l.b16 %v85
    %v689 = vunpack.c.h.b16 %v85
    %v690 = vunpack.c.l.b16 %v86
    %v691 = vunpack.c.h.b16 %v86
    %v692 = vunpack.c.l.b16 %v87
    %v693 = vunpack.c.h.b16 %v87
    %v694 = vunpack.c.l.b16 %v88
    %v695 = vunpack.c.h.b16 %v88
    %v696 = vunpack.c.l.b16 %v89
    %v697 = vunpack.c.h.b16 %v89
    %v698 = vunpack.c.l.b16 %v90
    %v699 = vunpack.c.h.b16 %v90
    %v700 = vunpack.c.l.b16 %v91
    %v701 = vunpack.c.h.b16 %v91
    %v702 = vunpack.c.l.b16 %v92
    %v703 = vunpack.c.h.b16 %v92
    %v704 = vunpack.c.l.b16 %v93
    %v705 = vunpack.c.h.b16 %v93
    %v706 = vunpack.c.l.b16 %v94
    %v707 = vunpack.c.h.b16 %v94
    %v708 = vunpack.c.l.b16 %v95
    %v709 = vunpack.c.h.b16 %v95
    %v710 = vunpack.c.l.b16 %v96
    %v711 = vunpack.c.h.b16 %v96
    %v712 = vunpack.c.l.b16 %v97
    %v713 = vunpack.c.h.b16 %v97
    %v714 = vunpack.c.l.b16 %v98
    %v715 = vunpack.c.h.b16 %v98
    %v716 = vunpack.c.l.b16 %v99
    %v717 = vunpack.c.h.b16 %v99
    %v718 = vunpack.c.l.b16 %v100
    %v719 = vunpack.c.h.b16 %v100
    %v720 = vunpack.c.l.b16 %v101
    %v721 = vunpack.c.h.b16 %v101
    %v722 = vunpack.c.l.b16 %v102
    %v723 = vunpack.c.h.b16 %v102
    %v724 = vunpack.c.l.b16 %v103
    %v725 = vunpack.c.h.b16 %v103
    %v726 = vunpack.c.l.b16 %v104
    %v727 = vunpack.c.h.b16 %v104
    %v728 = vunpack.c.l.b16 %v105
    %v729 = vunpack.c.h.b16 %v105
    %v730 = vunpack.c.l.b16 %v106
    %v731 = vunpack.c.h.b16 %v106
    %v732 = vunpack.c.l.b16 %v107
    %v733 = vunpack.c.h.b16 %v107
    %v734 = vunpack.c.l.b16 %v108
    %v735 = vunpack.c.h.b16 %v108
    %v736 = vunpack.c.l.b16 %v109
    %v737 = vunpack.c.h.b16 %v109
    %v738 = vunpack.c.l.b16 %v110
    %v739 = vunpack.c.h.b16 %v110
    %v740 = vunpack.c.l.b16 %v111
    %v741 = vunpack.c.h.b16 %v111
    %v742 = vunpack.c.l.b16 %v112
    %v743 = vunpack.c.h.b16 %v112
    %v744 = vunpack.c.l.b16 %v113
    %v745 = vunpack.c.h.b16 %v113
    %v746 = vunpack.c.l.b16 %v114
    %v747 = vunpack.c.h.b16 %v114
    %v748 = vunpack.c.l.b16 %v115
    %v749 = vunpack.c.h.b16 %v115
    %v750 = vunpack.c.l.b16 %v116
    %v751 = vunpack.c.h.b16 %v116
    %v752 = vunpack.c.l.b16 %v117
    %v753 = vunpack.c.h.b16 %v117
    %v754 = vunpack.c.l.b16 %v118
    %v755 = vunpack.c.h.b16 %v118
    %v756 = vunpack.c.l.b16 %v119
    %v757 = vunpack.c.h.b16 %v119
    %v758 = vunpack.c.l.b16 %v120
    %v759 = vunpack.c.h.b16 %v120
    %v760 = vunpack.c.l.b16 %v121
    %v761 = vunpack.c.h.b16 %v121
    %v762 = vunpack.c.l.b16 %v122
    %v763 = vunpack.c.h.b16 %v122
    %v764 = vunpack.c.l.b16 %v123
    %v765 = vunpack.c.h.b16 %v123
    %v766 = vunpack.c.l.b16 %v124
    %v767 = vunpack.c.h.b16 %v124
    %v768 = vunpack.c.l.b16 %v125
    %v769 = vunpack.c.h.b16 %v125
    %v770 = vunpack.c.l.b16 %v126
    %v771 = vunpack.c.h.b16 %v126
    %v772 = vunpack.c.l.b16 %v127
    %v773 = vunpack.c.h.b16 %v127
    %v774 = vunpack.c.l.b16 %v128
    %v775 = vunpack.c.h.b16 %v128
    %v776 = vunpack.c.l.b16 %v129
    %v777 = vunpack.c.h.b16 %v129
    %v778 = vunpack.c.l.b16 %v130
    %v779 = vunpack.c.h.b16 %v130
    %v780 = vunpack.c.l.b16 %v131
    %v781 = vunpack.c.h.b16 %v131
    %v782 = vunpack.c.l.b16 %v132
    %v783 = vunpack.c.h.b16 %v132
    %v784 = vunpack.c.l.b16 %v133
    %v785 = vunpack.c.h.b16 %v133
    %v786 = vunpack.c.l.b16 %v134
    %v787 = vunpack.c.h.b16 %v134
    %v788 = vunpack.c.l.b16 %v135
    %v789 = vunpack.c.h.b16 %v135
    %v790 = vunpack.c.l.b16 %v136
    %v791 = vunpack.c.h.b16 %v136
    %v792 = vunpack.c.l.b16 %v137
    %v793 = vunpack.c.h.b16 %v137
    %v794 = vunpack.c.l.b16 %v138
    %v795 = vunpack.c.h.b16 %v138
    %v796 = vunpack.c.l.b16 %v139
    %v797 = vunpack.c.h.b16 %v139
    %v798 = vunpack.c.l.b16 %v140
    %v799 = vunpack.c.h.b16 %v140
    %v800 = vunpack.c.l.b16 %v141
    %v801 = vunpack.c.h.b16 %v141
    %v802 = vunpack.c.l.b16 %v142
    %v803 = vunpack.c.h.b16 %v142
    %v804 = vunpack.c.l.b16 %v143
    %v805 = vunpack.c.h.b16 %v143
    %v806 = vunpack.c.l.b16 %v144
    %v807 = vunpack.c.h.b16 %v144
    %v808 = vunpack.c.l.b16 %v145
    %v809 = vunpack.c.h.b16 %v145
    %v810 = vunpack.c.l.b16 %v146
    %v811 = vunpack.c.h.b16 %v146
    %v812 = vunpack.c.l.b16 %v147
    %v813 = vunpack.c.h.b16 %v147
    %v814 = vunpack.c.l.b16 %v148
    %v815 = vunpack.c.h.b16 %v148
    %v816 = vunpack.c.l.b16 %v149
    %v817 = vunpack.c.h.b16 %v149
    %v818 = vunpack.c.l.b16 %v150
    %v819 = vunpack.c.h.b16 %v150
    %v820 = vunpack.c.l.b16 %v151
    %v821 = vunpack.c.h.b16 %v151
    %v822 = vunpack.c.l.b16 %v152
    %v823 = vunpack.c.h.b16 %v152
    %v824 = vunpack.c.l.b16 %v153
    %v825 = vunpack.c.h.b16 %v153
    %v826 = vunpack.c.l.b16 %v154
    %v827 = vunpack.c.h.b16 %v154
    %v828 = vunpack.c.l.b16 %v155
    %v829 = vunpack.c.h.b16 %v155
    %v830 = vunpack.c.l.b16 %v156
    %v831 = vunpack.c.h.b16 %v156
    %v832 = vunpack.c.l.b16 %v157
    %v833 = vunpack.c.h.b16 %v157
    %v834 = vunpack.c.l.b16 %v158
    %v835 = vunpack.c.h.b16 %v158
    %v836 = vunpack.c.l.b16 %v159
    %v837 = vunpack.c.h.b16 %v159
    %v838 = vunpack.c.l.b16 %v160
    %v839 = vunpack.c.h.b16 %v160
    %v840 = vunpack.c.l.b16 %v161
    %v841 = vunpack.c.h.b16 %v161
    %v842 = vunpack.c.l.b16 %v162
    %v843 = vunpack.c.h.b16 %v162
    %v844 = vunpack.c.l.b16 %v163
    %v845 = vunpack.c.h.b16 %v163
    %v846 = vunpack.c.l.b16 %v164
    %v847 = vunpack.c.h.b16 %v164
    %v848 = vunpack.c.l.b16 %v165
    %v849 = vunpack.c.h.b16 %v165
    %v850 = vunpack.c.l.b16 %v166
    %v851 = vunpack.c.h.b16 %v166
    %v852 = vunpack.c.l.b16 %v167
    %v853 = vunpack.c.h.b16 %v167
    %v854 = vunpack.c.l.b16 %v168
    %v855 = vunpack.c.h.b16 %v168
    %v856 = vunpack.c.l.b16 %v169
    %v857 = vunpack.c.h.b16 %v169
    %v858 = vunpack.c.l.b16 %v170
    %v859 = vunpack.c.h.b16 %v170
    %v860 = vunpack.c.l.b16 %v171
    %v861 = vunpack.c.h.b16 %v171
    %v862 = vunpack.c.l.b16 %v172
    %v863 = vunpack.c.h.b16 %v172
    %v864 = vunpack.c.l.b16 %v173
    %v865 = vunpack.c.h.b16 %v173
    %v866 = vunpack.c.l.b16 %v174
    %v867 = vunpack.c.h.b16 %v174
    %v868 = vunpack.c.l.b16 %v175
    %v869 = vunpack.c.h.b16 %v175
    %v870 = vunpack.c.l.b16 %v176
    %v871 = vunpack.c.h.b16 %v176
    %v872 = vunpack.c.l.b16 %v177
    %v873 = vunpack.c.h.b16 %v177
    %v874 = vunpack.c.l.b16 %v178
    %v875 = vunpack.c.h.b16 %v178
    %v876 = vunpack.c.l.b16 %v179
    %v877 = vunpack.c.h.b16 %v179
    %v878 = vunpack.c.l.b16 %v180
    %v879 = vunpack.c.h.b16 %v180
    %v880 = vunpack.c.l.b16 %v181
    %v881 = vunpack.c.h.b16 %v181
    %v882 = vunpack.c.l.b16 %v182
    %v883 = vunpack.c.h.b16 %v182
    %v884 = vunpack.c.l.b16 %v183
    %v885 = vunpack.c.h.b16 %v183
    %v886 = vunpack.c.l.b16 %v184
    %v887 = vunpack.c.h.b16 %v184
    %v888 = vunpack.c.l.b16 %v185
    %v889 = vunpack.c.h.b16 %v185
    %v890 = vunpack.c.l.b16 %v186
    %v891 = vunpack.c.h.b16 %v186
    %v892 = vunpack.c.l.b16 %v187
    %v893 = vunpack.c.h.b16 %v187
    %v894 = vunpack.c.l.b16 %v188
    %v895 = vunpack.c.h.b16 %v188
    %v896 = vunpack.c.l.b16 %v189
    %v897 = vunpack.c.h.b16 %v189
    %v898 = vunpack.c.l.b16 %v190
    %v899 = vunpack.c.h.b16 %v190
    %v900 = vunpack.c.l.b16 %v191
    %v901 = vunpack.c.h.b16 %v191
    %v902 = vunpack.c.l.b16 %v192
    %v903 = vunpack.c.h.b16 %v192
    %v904 = vunpack.c.l.b16 %v193
    %v905 = vunpack.c.h.b16 %v193
    %v906 = vunpack.c.l.b16 %v194
    %v907 = vunpack.c.h.b16 %v194
    %v908 = vunpack.c.l.b16 %v195
    %v909 = vunpack.c.h.b16 %v195
    %v910 = vunpack.c.l.b16 %v196
    %v911 = vunpack.c.h.b16 %v196
    %v912 = vunpack.c.l.b16 %v197
    %v913 = vunpack.c.h.b16 %v197
    %v914 = vunpack.c.l.b16 %v198
    %v915 = vunpack.c.h.b16 %v198
    %v916 = vunpack.c.l.b16 %v199
    %v917 = vunpack.c.h.b16 %v199
    %v918 = vunpack.c.l.b16 %v200
    %v919 = vunpack.c.h.b16 %v200
    %v920 = vunpack.c.l.b16 %v201
    %v921 = vunpack.c.h.b16 %v201
    %v922 = vunpack.c.l.b16 %v202
    %v923 = vunpack.c.h.b16 %v202
    %v924 = vunpack.c.l.b16 %v203
    %v925 = vunpack.c.h.b16 %v203
    %v926 = vunpack.c.l.b16 %v204
    %v927 = vunpack.c.h.b16 %v204
    %v928 = vunpack.c.l.b16 %v205
    %v929 = vunpack.c.h.b16 %v205
    %v930 = vunpack.c.l.b16 %v206
    %v931 = vunpack.c.h.b16 %v206
    %v932 = vunpack.c.l.b16 %v207
    %v933 = vunpack.c.h.b16 %v207
    %v934 = vunpack.c.l.b16 %v208
    %v935 = vunpack.c.h.b16 %v208
    %v936 = vunpack.c.l.b16 %v209
    %v937 = vunpack.c.h.b16 %v209
    %v938 = vunpack.c.l.b16 %v210
    %v939 = vunpack.c.h.b16 %v210
    %v940 = vunpack.c.l.b16 %v211
    %v941 = vunpack.c.h.b16 %v211
    %v942 = vunpack.c.l.b16 %v212
    %v943 = vunpack.c.h.b16 %v212
    %v944 = vunpack.c.l.b16 %v213
    %v945 = vunpack.c.h.b16 %v213
    %v946 = vunpack.c.l.b16 %v214
    %v947 = vunpack.c.h.b16 %v214
    %v948 = vunpack.c.l.b16 %v215
    %v949 = vunpack.c.h.b16 %v215
    %v950 = vunpack.c.l.b16 %v216
    %v951 = vunpack.c.h.b16 %v216
    %v952 = vunpack.c.l.b16 %v217
    %v953 = vunpack.c.h.b16 %v217
    %v954 = vunpack.c.l.b16 %v218
    %v955 = vunpack.c.h.b16 %v218
    %v956 = vunpack.c.l.b16 %v219
    %v957 = vunpack.c.h.b16 %v219
    %v958 = vunpack.c.l.b16 %v220
    %v959 = vunpack.c.h.b16 %v220
    %v960 = vunpack.c.l.b16 %v221
    %v961 = vunpack.c.h.b16 %v221
    %v962 = vunpack.c.l.b16 %v222
    %v963 = vunpack.c.h.b16 %v222
    %v964 = vunpack.c.l.b16 %v223
    %v965 = vunpack.c.h.b16 %v223
    %v966 = vunpack.c.l.b16 %v224
    %v967 = vunpack.c.h.b16 %v224
    %v968 = vunpack.c.l.b16 %v225
    %v969 = vunpack.c.h.b16 %v225
    %v970 = vunpack.c.l.b16 %v226
    %v971 = vunpack.c.h.b16 %v226
    %v972 = vunpack.c.l.b16 %v227
    %v973 = vunpack.c.h.b16 %v227
    %v974 = vunpack.c.l.b16 %v228
    %v975 = vunpack.c.h.b16 %v228
    %v976 = vunpack.c.l.b16 %v229
    %v977 = vunpack.c.h.b16 %v229
    %v978 = vunpack.c.l.b16 %v230
    %v979 = vunpack.c.h.b16 %v230
    %v980 = vunpack.c.l.b16 %v231
    %v981 = vunpack.c.h.b16 %v231
    %v982 = vunpack.c.l.b16 %v232
    %v983 = vunpack.c.h.b16 %v232
    %v984 = vunpack.c.l.b16 %v233
    %v985 = vunpack.c.h.b16 %v233
    %v986 = vunpack.c.l.b16 %v234
    %v987 = vunpack.c.h.b16 %v234
    %v988 = vunpack.c.l.b16 %v235
    %v989 = vunpack.c.h.b16 %v235
    %v990 = vunpack.c.l.b16 %v236
    %v991 = vunpack.c.h.b16 %v236
    %v992 = vunpack.c.l.b16 %v237
    %v993 = vunpack.c.h.b16 %v237
    %v994 = vunpack.c.l.b16 %v238
    %v995 = vunpack.c.h.b16 %v238
    %v996 = vunpack.c.l.b16 %v239
    %v997 = vunpack.c.h.b16 %v239
    %v998 = vunpack.c.l.b16 %v240
    %v999 = vunpack.c.h.b16 %v240
    %v1000 = vunpack.c.l.b16 %v241
    %v1001 = vunpack.c.h.b16 %v241
    %v1002 = vunpack.c.l.b16 %v242
    %v1003 = vunpack.c.h.b16 %v242
    %v1004 = vunpack.c.l.b16 %v243
    %v1005 = vunpack.c.h.b16 %v243
    %v1006 = vunpack.c.l.b16 %v244
    %v1007 = vunpack.c.h.b16 %v244
    %v1008 = vunpack.c.l.b16 %v245
    %v1009 = vunpack.c.h.b16 %v245
    %v1010 = vunpack.c.l.b16 %v246
    %v1011 = vunpack.c.h.b16 %v246
    %v1012 = vunpack.c.l.b16 %v247
    %v1013 = vunpack.c.h.b16 %v247
    %v1014 = vunpack.c.l.b16 %v248
    %v1015 = vunpack.c.h.b16 %v248
    %v1016 = vunpack.c.l.b16 %v249
    %v1017 = vunpack.c.h.b16 %v249
    %v1018 = vunpack.c.l.b16 %v250
    %v1019 = vunpack.c.h.b16 %v250
    %v1020 = vunpack.c.l.b16 %v251
    %v1021 = vunpack.c.h.b16 %v251
    %v1022 = vunpack.c.l.b16 %v252
    %v1023 = vunpack.c.h.b16 %v252
    %v1024 = vunpack.c.l.b16 %v253
    %v1025 = vunpack.c.h.b16 %v253
    %v1026 = vunpack.c.l.b16 %v254
    %v1027 = vunpack.c.h.b16 %v254
    %v1028 = vunpack.c.l.b16 %v255
    %v1029 = vunpack.c.h.b16 %v255
    %v1030 = vunpack.c.l.b16 %v256
    %v1031 = vunpack.c.h.b16 %v256
    %v1032 = vunpack.c.l.b16 %v257
    %v1033 = vunpack.c.h.b16 %v257
    %v1034 = vunpack.c.l.b16 %v258
    %v1035 = vunpack.c.h.b16 %v258
    %v1036 = vunpack.c.l.b16 %v259
    %v1037 = vunpack.c.h.b16 %v259
    %v1038 = vunpack.c.l.b16 %v260
    %v1039 = vunpack.c.h.b16 %v260
    %v1040 = vunpack.c.l.b16 %v261
    %v1041 = vunpack.c.h.b16 %v261
    %v1042 = vunpack.c.l.b16 %v262
    %v1043 = vunpack.c.h.b16 %v262
    %v1044 = vunpack.c.l.b16 %v263
    %v1045 = vunpack.c.h.b16 %v263
    %v1046 = vunpack.c.l.b16 %v264
    %v1047 = vunpack.c.h.b16 %v264
    %v1048 = vunpack.c.l.b16 %v265
    %v1049 = vunpack.c.h.b16 %v265
    %v1050 = vunpack.c.l.b16 %v266
    %v1051 = vunpack.c.h.b16 %v266
    %v1052 = vunpack.c.l.b16 %v267
    %v1053 = vunpack.c.h.b16 %v267
    %v1054 = vunpack.c.l.b16 %v268
    %v1055 = vunpack.c.h.b16 %v268
    %v1056 = vunpack.c.l.b16 %v269
    %v1057 = vunpack.c.h.b16 %v269
    %v1058 = vunpack.c.l.b16 %v270
    %v1059 = vunpack.c.h.b16 %v270
    %v1060 = vunpack.c.l.b16 %v271
    %v1061 = vunpack.c.h.b16 %v271
    %v1062 = vunpack.c.l.b16 %v272
    %v1063 = vunpack.c.h.b16 %v272
    %v1064 = vunpack.c.l.b16 %v273
    %v1065 = vunpack.c.h.b16 %v273
    %v1066 = vunpack.c.l.b16 %v274
    %v1067 = vunpack.c.h.b16 %v274
    %v1068 = vunpack.c.l.b16 %v275
    %v1069 = vunpack.c.h.b16 %v275
    %v1070 = vunpack.c.l.b16 %v276
    %v1071 = vunpack.c.h.b16 %v276
    %v1072 = vunpack.c.l.b16 %v277
    %v1073 = vunpack.c.h.b16 %v277
    %v1074 = vpack.c.b16 %v566, %v562
    %v1075 = vpack.c.b16 %v567, %v563
    %v1076 = vpack.c.b16 %v568, %v564
    %v1077 = vpack.c.b16 %v569, %v565
    %v1078 = vpack.c.b16 %v574, %v570
    %v1079 = vpack.c.b16 %v575, %v571
    %v1080 = vpack.c.b16 %v576, %v572
    %v1081 = vpack.c.b16 %v577, %v573
    %v1082 = vpack.c.b16 %v582, %v578
    %v1083 = vpack.c.b16 %v583, %v579
    %v1084 = vpack.c.b16 %v584, %v580
    %v1085 = vpack.c.b16 %v585, %v581
    %v1086 = vpack.c.b16 %v590, %v586
    %v1087 = vpack.c.b16 %v591, %v587
    %v1088 = vpack.c.b16 %v592, %v588
    %v1089 = vpack.c.b16 %v593, %v589
    %v1090 = vpack.c.b16 %v598, %v594
    %v1091 = vpack.c.b16 %v599, %v595
    %v1092 = vpack.c.b16 %v600, %v596
    %v1093 = vpack.c.b16 %v601, %v597
    %v1094 = vpack.c.b16 %v606, %v602
    %v1095 = vpack.c.b16 %v607, %v603
    %v1096 = vpack.c.b16 %v608, %v604
    %v1097 = vpack.c.b16 %v609, %v605
    %v1098 = vpack.c.b16 %v614, %v610
    %v1099 = vpack.c.b16 %v615, %v611
    %v1100 = vpack.c.b16 %v616, %v612
    %v1101 = vpack.c.b16 %v617, %v613
    %v1102 = vpack.c.b16 %v622, %v618
    %v1103 = vpack.c.b16 %v623, %v619
    %v1104 = vpack.c.b16 %v624, %v620
    %v1105 = vpack.c.b16 %v625, %v621
    %v1106 = vpack.c.b16 %v630, %v626
    %v1107 = vpack.c.b16 %v631, %v627
    %v1108 = vpack.c.b16 %v632, %v628
    %v1109 = vpack.c.b16 %v633, %v629
    %v1110 = vpack.c.b16 %v638, %v634
    %v1111 = vpack.c.b16 %v639, %v635
    %v1112 = vpack.c.b16 %v640, %v636
    %v1113 = vpack.c.b16 %v641, %v637
    %v1114 = vpack.c.b16 %v646, %v642
    %v1115 = vpack.c.b16 %v647, %v643
    %v1116 = vpack.c.b16 %v648, %v644
    %v1117 = vpack.c.b16 %v649, %v645
    %v1118 = vpack.c.b16 %v654, %v650
    %v1119 = vpack.c.b16 %v655, %v651
    %v1120 = vpack.c.b16 %v656, %v652
    %v1121 = vpack.c.b16 %v657, %v653
    %v1122 = vpack.c.b16 %v662, %v658
    %v1123 = vpack.c.b16 %v663, %v659
    %v1124 = vpack.c.b16 %v664, %v660
    %v1125 = vpack.c.b16 %v665, %v661
    %v1126 = vpack.c.b16 %v670, %v666
    %v1127 = vpack.c.b16 %v671, %v667
    %v1128 = vpack.c.b16 %v672, %v668
    %v1129 = vpack.c.b16 %v673, %v669
    %v1130 = vpack.c.b16 %v678, %v674
    %v1131 = vpack.c.b16 %v679, %v675
    %v1132 = vpack.c.b16 %v680, %v676
    %v1133 = vpack.c.b16 %v681, %v677
    %v1134 = vpack.c.b16 %v686, %v682
    %v1135 = vpack.c.b16 %v687, %v683
    %v1136 = vpack.c.b16 %v688, %v684
    %v1137 = vpack.c.b16 %v689, %v685
    %v1138 = vpack.c.b16 %v694, %v690
    %v1139 = vpack.c.b16 %v695, %v691
    %v1140 = vpack.c.b16 %v696, %v692
    %v1141 = vpack.c.b16 %v697, %v693
    %v1142 = vpack.c.b16 %v702, %v698
    %v1143 = vpack.c.b16 %v703, %v699
    %v1144 = vpack.c.b16 %v704, %v700
    %v1145 = vpack.c.b16 %v705, %v701
    %v1146 = vpack.c.b16 %v710, %v706
    %v1147 = vpack.c.b16 %v711, %v707
    %v1148 = vpack.c.b16 %v712, %v708
    %v1149 = vpack.c.b16 %v713, %v709
    %v1150 = vpack.c.b16 %v718, %v714
    %v1151 = vpack.c.b16 %v719, %v715
    %v1152 = vpack.c.b16 %v720, %v716
    %v1153 = vpack.c.b16 %v721, %v717
    %v1154 = vpack.c.b16 %v726, %v722
    %v1155 = vpack.c.b16 %v727, %v723
    %v1156 = vpack.c.b16 %v728, %v724
    %v1157 = vpack.c.b16 %v729, %v725
    %v1158 = vpack.c.b16 %v734, %v730
    %v1159 = vpack.c.b16 %v735, %v731
    %v1160 = vpack.c.b16 %v736, %v732
    %v1161 = vpack.c.b16 %v737, %v733
    %v1162 = vpack.c.b16 %v742, %v738
    %v1163 = vpack.c.b16 %v743, %v739
    %v1164 = vpack.c.b16 %v744, %v740
    %v1165 = vpack.c.b16 %v745, %v741
    %v1166 = vpack.c.b16 %v750, %v746
    %v1167 = vpack.c.b16 %v751, %v747
    %v1168 = vpack.c.b16 %v752, %v748
    %v1169 = vpack.c.b16 %v753, %v749
    %v1170 = vpack.c.b16 %v758, %v754
    %v1171 = vpack.c.b16 %v759, %v755
    %v1172 = vpack.c.b16 %v760, %v756
    %v1173 = vpack.c.b16 %v761, %v757
    %v1174 = vpack.c.b16 %v766, %v762
    %v1175 = vpack.c.b16 %v767, %v763
    %v1176 = vpack.c.b16 %v768, %v764
    %v1177 = vpack.c.b16 %v769, %v765
    %v1178 = vpack.c.b16 %v774, %v770
    %v1179 = vpack.c.b16 %v775, %v771
    %v1180 = vpack.c.b16 %v776, %v772
    %v1181 = vpack.c.b16 %v777, %v773
    %v1182 = vpack.c.b16 %v782, %v778
    %v1183 = vpack.c.b16 %v783, %v779
    %v1184 = vpack.c.b16 %v784, %v780
    %v1185 = vpack.c.b16 %v785, %v781
    %v1186 = vpack.c.b16 %v790, %v786
    %v1187 = vpack.c.b16 %v791, %v787
    %v1188 = vpack.c.b16 %v792, %v788
    %v1189 = vpack.c.b16 %v793, %v789
    %v1190 = vpack.c.b16 %v798, %v794
    %v1191 = vpack.c.b16 %v799, %v795
    %v1192 = vpack.c.b16 %v800, %v796
    %v1193 = vpack.c.b16 %v801, %v797
    %v1194 = vpack.c.b16 %v806, %v802
    %v1195 = vpack.c.b16 %v807, %v803
    %v1196 = vpack.c.b16 %v808, %v804
    %v1197 = vpack.c.b16 %v809, %v805
    %v1198 = vpack.c.b16 %v814, %v810
    %v1199 = vpack.c.b16 %v815, %v811
    %v1200 = vpack.c.b16 %v816, %v812
    %v1201 = vpack.c.b16 %v817, %v813
    %v1202 = vpack.c.b16 %v822, %v818
    %v1203 = vpack.c.b16 %v823, %v819
    %v1204 = vpack.c.b16 %v824, %v820
    %v1205 = vpack.c.b16 %v825, %v821
    %v1206 = vpack.c.b16 %v830, %v826
    %v1207 = vpack.c.b16 %v831, %v827
    %v1208 = vpack.c.b16 %v832, %v828
    %v1209 = vpack.c.b16 %v833, %v829
    %v1210 = vpack.c.b16 %v838, %v834
    %v1211 = vpack.c.b16 %v839, %v835
    %v1212 = vpack.c.b16 %v840, %v836
    %v1213 = vpack.c.b16 %v841, %v837
    %v1214 = vpack.c.b16 %v846, %v842
    %v1215 = vpack.c.b16 %v847, %v843
    %v1216 = vpack.c.b16 %v848, %v844
    %v1217 = vpack.c.b16 %v849, %v845
    %v1218 = vpack.c.b16 %v854, %v850
    %v1219 = vpack.c.b16 %v855, %v851
    %v1220 = vpack.c.b16 %v856, %v852
    %v1221 = vpack.c.b16 %v857, %v853
    %v1222 = vpack.c.b16 %v862, %v858
    %v1223 = vpack.c.b16 %v863, %v859
    %v1224 = vpack.c.b16 %v864, %v860
    %v1225 = vpack.c.b16 %v865, %v861
    %v1226 = vpack.c.b16 %v870, %v866
    %v1227 = vpack.c.b16 %v871, %v867
    %v1228 = vpack.c.b16 %v872, %v868
    %v1229 = vpack.c.b16 %v873, %v869
    %v1230 = vpack.c.b16 %v878, %v874
    %v1231 = vpack.c.b16 %v879, %v875
    %v1232 = vpack.c.b16 %v880, %v876
    %v1233 = vpack.c.b16 %v881, %v877
    %v1234 = vpack.c.b16 %v886, %v882
    %v1235 = vpack.c.b16 %v887, %v883
    %v1236 = vpack.c.b16 %v888, %v884
    %v1237 = vpack.c.b16 %v889, %v885
    %v1238 = vpack.c.b16 %v894, %v890
    %v1239 = vpack.c.b16 %v895, %v891
    %v1240 = vpack.c.b16 %v896, %v892
    %v1241 = vpack.c.b16 %v897, %v893
    %v1242 = vpack.c.b16 %v902, %v898
    %v1243 = vpack.c.b16 %v903, %v899
    %v1244 = vpack.c.b16 %v904, %v900
    %v1245 = vpack.c.b16 %v905, %v901
    %v1246 = vpack.c.b16 %v910, %v906
    %v1247 = vpack.c.b16 %v911, %v907
    %v1248 = vpack.c.b16 %v912, %v908
    %v1249 = vpack.c.b16 %v913, %v909
    %v1250 = vpack.c.b16 %v918, %v914
    %v1251 = vpack.c.b16 %v919, %v915
    %v1252 = vpack.c.b16 %v920, %v916
    %v1253 = vpack.c.b16 %v921, %v917
    %v1254 = vpack.c.b16 %v926, %v922
    %v1255 = vpack.c.b16 %v927, %v923
    %v1256 = vpack.c.b16 %v928, %v924
    %v1257 = vpack.c.b16 %v929, %v925
    %v1258 = vpack.c.b16 %v934, %v930
    %v1259 = vpack.c.b16 %v935, %v931
    %v1260 = vpack.c.b16 %v936, %v932
    %v1261 = vpack.c.b16 %v937, %v933
    %v1262 = vpack.c.b16 %v942, %v938
    %v1263 = vpack.c.b16 %v943, %v939
    %v1264 = vpack.c.b16 %v944, %v940
    %v1265 = vpack.c.b16 %v945, %v941
    %v1266 = vpack.c.b16 %v950, %v946
    %v1267 = vpack.c.b16 %v951, %v947
    %v1268 = vpack.c.b16 %v952, %v948
    %v1269 = vpack.c.b16 %v953, %v949
    %v1270 = vpack.c.b16 %v958, %v954
    %v1271 = vpack.c.b16 %v959, %v955
    %v1272 = vpack.c.b16 %v960, %v956
    %v1273 = vpack.c.b16 %v961, %v957
    %v1274 = vpack.c.b16 %v966, %v962
    %v1275 = vpack.c.b16 %v967, %v963
    %v1276 = vpack.c.b16 %v968, %v964
    %v1277 = vpack.c.b16 %v969, %v965
    %v1278 = vpack.c.b16 %v974, %v970
    %v1279 = vpack.c.b16 %v975, %v971
    %v1280 = vpack.c.b16 %v976, %v972
    %v1281 = vpack.c.b16 %v977, %v973
    %v1282 = vpack.c.b16 %v982, %v978
    %v1283 = vpack.c.b16 %v983, %v979
    %v1284 = vpack.c.b16 %v984, %v980
    %v1285 = vpack.c.b16 %v985, %v981
    %v1286 = vpack.c.b16 %v990, %v986
    %v1287 = vpack.c.b16 %v991, %v987
    %v1288 = vpack.c.b16 %v992, %v988
    %v1289 = vpack.c.b16 %v993, %v989
    %v1290 = vpack.c.b16 %v998, %v994
    %v1291 = vpack.c.b16 %v999, %v995
    %v1292 = vpack.c.b16 %v1000, %v996
    %v1293 = vpack.c.b16 %v1001, %v997
    %v1294 = vpack.c.b16 %v1006, %v1002
    %v1295 = vpack.c.b16 %v1007, %v1003
    %v1296 = vpack.c.b16 %v1008, %v1004
    %v1297 = vpack.c.b16 %v1009, %v1005
    %v1298 = vpack.c.b16 %v1014, %v1010
    %v1299 = vpack.c.b16 %v1015, %v1011
    %v1300 = vpack.c.b16 %v1016, %v1012
    %v1301 = vpack.c.b16 %v1017, %v1013
    %v1302 = vpack.c.b16 %v1022, %v1018
    %v1303 = vpack.c.b16 %v1023, %v1019
    %v1304 = vpack.c.b16 %v1024, %v1020
    %v1305 = vpack.c.b16 %v1025, %v1021
    %v1306 = vpack.c.b16 %v1030, %v1026
    %v1307 = vpack.c.b16 %v1031, %v1027
    %v1308 = vpack.c.b16 %v1032, %v1028
    %v1309 = vpack.c.b16 %v1033, %v1029
    %v1310 = vpack.c.b16 %v1038, %v1034
    %v1311 = vpack.c.b16 %v1039, %v1035
    %v1312 = vpack.c.b16 %v1040, %v1036
    %v1313 = vpack.c.b16 %v1041, %v1037
    %v1314 = vpack.c.b16 %v1046, %v1042
    %v1315 = vpack.c.b16 %v1047, %v1043
    %v1316 = vpack.c.b16 %v1048, %v1044
    %v1317 = vpack.c.b16 %v1049, %v1045
    %v1318 = vpack.c.b16 %v1054, %v1050
    %v1319 = vpack.c.b16 %v1055, %v1051
    %v1320 = vpack.c.b16 %v1056, %v1052
    %v1321 = vpack.c.b16 %v1057, %v1053
    %v1322 = vpack.c.b16 %v1062, %v1058
    %v1323 = vpack.c.b16 %v1063, %v1059
    %v1324 = vpack.c.b16 %v1064, %v1060
    %v1325 = vpack.c.b16 %v1065, %v1061
    %v1326 = vpack.c.b16 %v1070, %v1066
    %v1327 = vpack.c.b16 %v1071, %v1067
    %v1328 = vpack.c.b16 %v1072, %v1068
    %v1329 = vpack.c.b16 %v1073, %v1069
    %1586 = vmatpush.bf16.msra.mxu0 %v1102
    %1587 = vmatpush.bf16.msra.mxu0 %v1098
    %1588 = vmatpush.bf16.msra.mxu0 %v1094
    %1589 = vmatpush.bf16.msra.mxu0 %v1090
    %1590 = vmatpush.bf16.msra.mxu0 %v1086
    %1591 = vmatpush.bf16.msra.mxu0 %v1082
    %1592 = vmatpush.bf16.msra.mxu0 %v1078
    %1593 = vmatpush.bf16.msra.mxu0 %v1074
    %1594 = vmatmul.bf16.gmra.mxu0 %v290
    %v1595 = vpop.f32.mrf.mxu0
    %v1596 = vadd.f32 %v280, %v1595
    %v1597 = vpop.f32.mrf.mxu0
    %1598 = vdwg.mxu0
    %1599 = vmatpush.bf16.msra.mxu0 %v1134
    %1600 = vmatpush.bf16.msra.mxu0 %v1130
    %1601 = vmatpush.bf16.msra.mxu0 %v1126
    %1602 = vmatpush.bf16.msra.mxu0 %v1122
    %1603 = vmatpush.bf16.msra.mxu0 %v1118
    %1604 = vmatpush.bf16.msra.mxu0 %v1114
    %1605 = vmatpush.bf16.msra.mxu0 %v1110
    %1606 = vmatpush.bf16.msra.mxu0 %v1106
    %1607 = vmatmul.bf16.gmra.mxu0 %v291
    %v1608 = vpop.f32.mrf.mxu0
    %v1609 = vadd.f32 %v1596, %v1608
    %v1610 = vpop.f32.mrf.mxu0
    %1611 = vdwg.mxu0
    %1612 = vmatpush.bf16.msra.mxu0 %v1166
    %1613 = vmatpush.bf16.msra.mxu0 %v1162
    %1614 = vmatpush.bf16.msra.mxu0 %v1158
    %1615 = vmatpush.bf16.msra.mxu0 %v1154
    %1616 = vmatpush.bf16.msra.mxu0 %v1150
    %1617 = vmatpush.bf16.msra.mxu0 %v1146
    %1618 = vmatpush.bf16.msra.mxu0 %v1142
    %1619 = vmatpush.bf16.msra.mxu0 %v1138
    %1620 = vmatmul.bf16.gmra.mxu0 %v292
    %v1621 = vpop.f32.mrf.mxu0
    %v1622 = vadd.f32 %v1609, %v1621
    %v1623 = vpop.f32.mrf.mxu0
    %1624 = vdwg.mxu0
    %1625 = vmatpush.bf16.msra.mxu0 %v1198
    %1626 = vmatpush.bf16.msra.mxu0 %v1194
    %1627 = vmatpush.bf16.msra.mxu0 %v1190
    %1628 = vmatpush.bf16.msra.mxu0 %v1186
    %1629 = vmatpush.bf16.msra.mxu0 %v1182
    %1630 = vmatpush.bf16.msra.mxu0 %v1178
    %1631 = vmatpush.bf16.msra.mxu0 %v1174
    %1632 = vmatpush.bf16.msra.mxu0 %v1170
    %1633 = vmatmul.bf16.gmra.mxu0 %v293
    %v1634 = vpop.f32.mrf.mxu0
    %v1635 = vadd.f32 %v1622, %v1634
    %v1636 = vpop.f32.mrf.mxu0
    %1637 = vdwg.mxu0
    %1638 = vmatpush.bf16.msra.mxu0 %v1230
    %1639 = vmatpush.bf16.msra.mxu0 %v1226
    %1640 = vmatpush.bf16.msra.mxu0 %v1222
    %1641 = vmatpush.bf16.msra.mxu0 %v1218
    %1642 = vmatpush.bf16.msra.mxu0 %v1214
    %1643 = vmatpush.bf16.msra.mxu0 %v1210
    %1644 = vmatpush.bf16.msra.mxu0 %v1206
    %1645 = vmatpush.bf16.msra.mxu0 %v1202
    %1646 = vmatmul.bf16.gmra.mxu0 %v294
    %v1647 = vpop.f32.mrf.mxu0
    %v1648 = vadd.f32 %v1635, %v1647
    %v1649 = vpop.f32.mrf.mxu0
    %1650 = vdwg.mxu0
    %1651 = vmatpush.bf16.msra.mxu0 %v1262
    %1652 = vmatpush.bf16.msra.mxu0 %v1258
    %1653 = vmatpush.bf16.msra.mxu0 %v1254
    %1654 = vmatpush.bf16.msra.mxu0 %v1250
    %1655 = vmatpush.bf16.msra.mxu0 %v1246
    %1656 = vmatpush.bf16.msra.mxu0 %v1242
    %1657 = vmatpush.bf16.msra.mxu0 %v1238
    %1658 = vmatpush.bf16.msra.mxu0 %v1234
    %1659 = vmatmul.bf16.gmra.mxu0 %v295
    %v1660 = vpop.f32.mrf.mxu0
    %v1661 = vadd.f32 %v1648, %v1660
    %v1662 = vpop.f32.mrf.mxu0
    %1663 = vdwg.mxu0
    %1664 = vmatpush.bf16.msra.mxu0 %v1294
    %1665 = vmatpush.bf16.msra.mxu0 %v1290
    %1666 = vmatpush.bf16.msra.mxu0 %v1286
    %1667 = vmatpush.bf16.msra.mxu0 %v1282
    %1668 = vmatpush.bf16.msra.mxu0 %v1278
    %1669 = vmatpush.bf16.msra.mxu0 %v1274
    %1670 = vmatpush.bf16.msra.mxu0 %v1270
    %1671 = vmatpush.bf16.msra.mxu0 %v1266
    %1672 = vmatmul.bf16.gmra.mxu0 %v296
    %v1673 = vpop.f32.mrf.mxu0
    %v1674 = vadd.f32 %v1661, %v1673
    %v1675 = vpop.f32.mrf.mxu0
    %1676 = vdwg.mxu0
    %1677 = vmatpush.bf16.msra.mxu0 %v1326
    %1678 = vmatpush.bf16.msra.mxu0 %v1322
    %1679 = vmatpush.bf16.msra.mxu0 %v1318
    %1680 = vmatpush.bf16.msra.mxu0 %v1314
    %1681 = vmatpush.bf16.msra.mxu0 %v1310
    %1682 = vmatpush.bf16.msra.mxu0 %v1306
    %1683 = vmatpush.bf16.msra.mxu0 %v1302
    %1684 = vmatpush.bf16.msra.mxu0 %v1298
    %1685 = vmatmul.bf16.gmra.mxu0 %v297
    %v1686 = vpop.f32.mrf.mxu0
    %v1687 = vadd.f32 %v1674, %v1686
    %v1688 = vpop.f32.mrf.mxu0
    %1689 = vdwg.mxu0
    %1690 = vmatpush.bf16.msra.mxu0 %v1103
    %1691 = vmatpush.bf16.msra.mxu0 %v1099
    %1692 = vmatpush.bf16.msra.mxu0 %v1095
    %1693 = vmatpush.bf16.msra.mxu0 %v1091
    %1694 = vmatpush.bf16.msra.mxu0 %v1087
    %1695 = vmatpush.bf16.msra.mxu0 %v1083
    %1696 = vmatpush.bf16.msra.mxu0 %v1079
    %1697 = vmatpush.bf16.msra.mxu0 %v1075
    %1698 = vmatmul.bf16.gmra.mxu0 %v290
    %v1699 = vpop.f32.mrf.mxu0
    %v1700 = vadd.f32 %v281, %v1699
    %v1701 = vpop.f32.mrf.mxu0
    %1702 = vdwg.mxu0
    %1703 = vmatpush.bf16.msra.mxu0 %v1135
    %1704 = vmatpush.bf16.msra.mxu0 %v1131
    %1705 = vmatpush.bf16.msra.mxu0 %v1127
    %1706 = vmatpush.bf16.msra.mxu0 %v1123
    %1707 = vmatpush.bf16.msra.mxu0 %v1119
    %1708 = vmatpush.bf16.msra.mxu0 %v1115
    %1709 = vmatpush.bf16.msra.mxu0 %v1111
    %1710 = vmatpush.bf16.msra.mxu0 %v1107
    %1711 = vmatmul.bf16.gmra.mxu0 %v291
    %v1712 = vpop.f32.mrf.mxu0
    %v1713 = vadd.f32 %v1700, %v1712
    %v1714 = vpop.f32.mrf.mxu0
    %1715 = vdwg.mxu0
    %1716 = vmatpush.bf16.msra.mxu0 %v1167
    %1717 = vmatpush.bf16.msra.mxu0 %v1163
    %1718 = vmatpush.bf16.msra.mxu0 %v1159
    %1719 = vmatpush.bf16.msra.mxu0 %v1155
    %1720 = vmatpush.bf16.msra.mxu0 %v1151
    %1721 = vmatpush.bf16.msra.mxu0 %v1147
    %1722 = vmatpush.bf16.msra.mxu0 %v1143
    %1723 = vmatpush.bf16.msra.mxu0 %v1139
    %1724 = vmatmul.bf16.gmra.mxu0 %v292
    %v1725 = vpop.f32.mrf.mxu0
    %v1726 = vadd.f32 %v1713, %v1725
    %v1727 = vpop.f32.mrf.mxu0
    %1728 = vdwg.mxu0
    %1729 = vmatpush.bf16.msra.mxu0 %v1199
    %1730 = vmatpush.bf16.msra.mxu0 %v1195
    %1731 = vmatpush.bf16.msra.mxu0 %v1191
    %1732 = vmatpush.bf16.msra.mxu0 %v1187
    %1733 = vmatpush.bf16.msra.mxu0 %v1183
    %1734 = vmatpush.bf16.msra.mxu0 %v1179
    %1735 = vmatpush.bf16.msra.mxu0 %v1175
    %1736 = vmatpush.bf16.msra.mxu0 %v1171
    %1737 = vmatmul.bf16.gmra.mxu0 %v293
    %v1738 = vpop.f32.mrf.mxu0
    %v1739 = vadd.f32 %v1726, %v1738
    %v1740 = vpop.f32.mrf.mxu0
    %1741 = vdwg.mxu0
    %1742 = vmatpush.bf16.msra.mxu0 %v1231
    %1743 = vmatpush.bf16.msra.mxu0 %v1227
    %1744 = vmatpush.bf16.msra.mxu0 %v1223
    %1745 = vmatpush.bf16.msra.mxu0 %v1219
    %1746 = vmatpush.bf16.msra.mxu0 %v1215
    %1747 = vmatpush.bf16.msra.mxu0 %v1211
    %1748 = vmatpush.bf16.msra.mxu0 %v1207
    %1749 = vmatpush.bf16.msra.mxu0 %v1203
    %1750 = vmatmul.bf16.gmra.mxu0 %v294
    %v1751 = vpop.f32.mrf.mxu0
    %v1752 = vadd.f32 %v1739, %v1751
    %v1753 = vpop.f32.mrf.mxu0
    %1754 = vdwg.mxu0
    %1755 = vmatpush.bf16.msra.mxu0 %v1263
    %1756 = vmatpush.bf16.msra.mxu0 %v1259
    %1757 = vmatpush.bf16.msra.mxu0 %v1255
    %1758 = vmatpush.bf16.msra.mxu0 %v1251
    %1759 = vmatpush.bf16.msra.mxu0 %v1247
    %1760 = vmatpush.bf16.msra.mxu0 %v1243
    %1761 = vmatpush.bf16.msra.mxu0 %v1239
    %1762 = vmatpush.bf16.msra.mxu0 %v1235
    %1763 = vmatmul.bf16.gmra.mxu0 %v295
    %v1764 = vpop.f32.mrf.mxu0
    %v1765 = vadd.f32 %v1752, %v1764
    %v1766 = vpop.f32.mrf.mxu0
    %1767 = vdwg.mxu0
    %1768 = vmatpush.bf16.msra.mxu0 %v1295
    %1769 = vmatpush.bf16.msra.mxu0 %v1291
    %1770 = vmatpush.bf16.msra.mxu0 %v1287
    %1771 = vmatpush.bf16.msra.mxu0 %v1283
    %1772 = vmatpush.bf16.msra.mxu0 %v1279
    %1773 = vmatpush.bf16.msra.mxu0 %v1275
    %1774 = vmatpush.bf16.msra.mxu0 %v1271
    %1775 = vmatpush.bf16.msra.mxu0 %v1267
    %1776 = vmatmul.bf16.gmra.mxu0 %v296
    %v1777 = vpop.f32.mrf.mxu0
    %v1778 = vadd.f32 %v1765, %v1777
    %v1779 = vpop.f32.mrf.mxu0
    %1780 = vdwg.mxu0
    %1781 = vmatpush.bf16.msra.mxu0 %v1327
    %1782 = vmatpush.bf16.msra.mxu0 %v1323
    %1783 = vmatpush.bf16.msra.mxu0 %v1319
    %1784 = vmatpush.bf16.msra.mxu0 %v1315
    %1785 = vmatpush.bf16.msra.mxu0 %v1311
    %1786 = vmatpush.bf16.msra.mxu0 %v1307
    %1787 = vmatpush.bf16.msra.mxu0 %v1303
    %1788 = vmatpush.bf16.msra.mxu0 %v1299
    %1789 = vmatmul.bf16.gmra.mxu0 %v297
    %v1790 = vpop.f32.mrf.mxu0
    %v1791 = vadd.f32 %v1778, %v1790
    %v1792 = vpop.f32.mrf.mxu0
    %1793 = vdwg.mxu0
    %1794 = vmatpush.bf16.msra.mxu0 %v1104
    %1795 = vmatpush.bf16.msra.mxu0 %v1100
    %1796 = vmatpush.bf16.msra.mxu0 %v1096
    %1797 = vmatpush.bf16.msra.mxu0 %v1092
    %1798 = vmatpush.bf16.msra.mxu0 %v1088
    %1799 = vmatpush.bf16.msra.mxu0 %v1084
    %1800 = vmatpush.bf16.msra.mxu0 %v1080
    %1801 = vmatpush.bf16.msra.mxu0 %v1076
    %1802 = vmatmul.bf16.gmra.mxu0 %v290
    %v1803 = vpop.f32.mrf.mxu0
    %v1804 = vadd.f32 %v282, %v1803
    %v1805 = vpop.f32.mrf.mxu0
    %1806 = vdwg.mxu0
    %1807 = vmatpush.bf16.msra.mxu0 %v1136
    %1808 = vmatpush.bf16.msra.mxu0 %v1132
    %1809 = vmatpush.bf16.msra.mxu0 %v1128
    %1810 = vmatpush.bf16.msra.mxu0 %v1124
    %1811 = vmatpush.bf16.msra.mxu0 %v1120
    %1812 = vmatpush.bf16.msra.mxu0 %v1116
    %1813 = vmatpush.bf16.msra.mxu0 %v1112
    %1814 = vmatpush.bf16.msra.mxu0 %v1108
    %1815 = vmatmul.bf16.gmra.mxu0 %v291
    %v1816 = vpop.f32.mrf.mxu0
    %v1817 = vadd.f32 %v1804, %v1816
    %v1818 = vpop.f32.mrf.mxu0
    %1819 = vdwg.mxu0
    %1820 = vmatpush.bf16.msra.mxu0 %v1168
    %1821 = vmatpush.bf16.msra.mxu0 %v1164
    %1822 = vmatpush.bf16.msra.mxu0 %v1160
    %1823 = vmatpush.bf16.msra.mxu0 %v1156
    %1824 = vmatpush.bf16.msra.mxu0 %v1152
    %1825 = vmatpush.bf16.msra.mxu0 %v1148
    %1826 = vmatpush.bf16.msra.mxu0 %v1144
    %1827 = vmatpush.bf16.msra.mxu0 %v1140
    %1828 = vmatmul.bf16.gmra.mxu0 %v292
    %v1829 = vpop.f32.mrf.mxu0
    %v1830 = vadd.f32 %v1817, %v1829
    %v1831 = vpop.f32.mrf.mxu0
    %1832 = vdwg.mxu0
    %1833 = vmatpush.bf16.msra.mxu0 %v1200
    %1834 = vmatpush.bf16.msra.mxu0 %v1196
    %1835 = vmatpush.bf16.msra.mxu0 %v1192
    %1836 = vmatpush.bf16.msra.mxu0 %v1188
    %1837 = vmatpush.bf16.msra.mxu0 %v1184
    %1838 = vmatpush.bf16.msra.mxu0 %v1180
    %1839 = vmatpush.bf16.msra.mxu0 %v1176
    %1840 = vmatpush.bf16.msra.mxu0 %v1172
    %1841 = vmatmul.bf16.gmra.mxu0 %v293
    %v1842 = vpop.f32.mrf.mxu0
    %v1843 = vadd.f32 %v1830, %v1842
    %v1844 = vpop.f32.mrf.mxu0
    %1845 = vdwg.mxu0
    %1846 = vmatpush.bf16.msra.mxu0 %v1232
    %1847 = vmatpush.bf16.msra.mxu0 %v1228
    %1848 = vmatpush.bf16.msra.mxu0 %v1224
    %1849 = vmatpush.bf16.msra.mxu0 %v1220
    %1850 = vmatpush.bf16.msra.mxu0 %v1216
    %1851 = vmatpush.bf16.msra.mxu0 %v1212
    %1852 = vmatpush.bf16.msra.mxu0 %v1208
    %1853 = vmatpush.bf16.msra.mxu0 %v1204
    %1854 = vmatmul.bf16.gmra.mxu0 %v294
    %v1855 = vpop.f32.mrf.mxu0
    %v1856 = vadd.f32 %v1843, %v1855
    %v1857 = vpop.f32.mrf.mxu0
    %1858 = vdwg.mxu0
    %1859 = vmatpush.bf16.msra.mxu0 %v1264
    %1860 = vmatpush.bf16.msra.mxu0 %v1260
    %1861 = vmatpush.bf16.msra.mxu0 %v1256
    %1862 = vmatpush.bf16.msra.mxu0 %v1252
    %1863 = vmatpush.bf16.msra.mxu0 %v1248
    %1864 = vmatpush.bf16.msra.mxu0 %v1244
    %1865 = vmatpush.bf16.msra.mxu0 %v1240
    %1866 = vmatpush.bf16.msra.mxu0 %v1236
    %1867 = vmatmul.bf16.gmra.mxu0 %v295
    %v1868 = vpop.f32.mrf.mxu0
    %v1869 = vadd.f32 %v1856, %v1868
    %v1870 = vpop.f32.mrf.mxu0
    %1871 = vdwg.mxu0
    %1872 = vmatpush.bf16.msra.mxu0 %v1296
    %1873 = vmatpush.bf16.msra.mxu0 %v1292
    %1874 = vmatpush.bf16.msra.mxu0 %v1288
    %1875 = vmatpush.bf16.msra.mxu0 %v1284
    %1876 = vmatpush.bf16.msra.mxu0 %v1280
    %1877 = vmatpush.bf16.msra.mxu0 %v1276
    %1878 = vmatpush.bf16.msra.mxu0 %v1272
    %1879 = vmatpush.bf16.msra.mxu0 %v1268
    %1880 = vmatmul.bf16.gmra.mxu0 %v296
    %v1881 = vpop.f32.mrf.mxu0
    %v1882 = vadd.f32 %v1869, %v1881
    %v1883 = vpop.f32.mrf.mxu0
    %1884 = vdwg.mxu0
    %1885 = vmatpush.bf16.msra.mxu0 %v1328
    %1886 = vmatpush.bf16.msra.mxu0 %v1324
    %1887 = vmatpush.bf16.msra.mxu0 %v1320
    %1888 = vmatpush.bf16.msra.mxu0 %v1316
    %1889 = vmatpush.bf16.msra.mxu0 %v1312
    %1890 = vmatpush.bf16.msra.mxu0 %v1308
    %1891 = vmatpush.bf16.msra.mxu0 %v1304
    %1892 = vmatpush.bf16.msra.mxu0 %v1300
    %1893 = vmatmul.bf16.gmra.mxu0 %v297
    %v1894 = vpop.f32.mrf.mxu0
    %v1895 = vadd.f32 %v1882, %v1894
    %v1896 = vpop.f32.mrf.mxu0
    %1897 = vdwg.mxu0
    %1898 = vmatpush.bf16.msra.mxu0 %v1105
    %1899 = vmatpush.bf16.msra.mxu0 %v1101
    %1900 = vmatpush.bf16.msra.mxu0 %v1097
    %1901 = vmatpush.bf16.msra.mxu0 %v1093
    %1902 = vmatpush.bf16.msra.mxu0 %v1089
    %1903 = vmatpush.bf16.msra.mxu0 %v1085
    %1904 = vmatpush.bf16.msra.mxu0 %v1081
    %1905 = vmatpush.bf16.msra.mxu0 %v1077
    %1906 = vmatmul.bf16.gmra.mxu0 %v290
    %v1907 = vpop.f32.mrf.mxu0
    %v1908 = vadd.f32 %v283, %v1907
    %v1909 = vpop.f32.mrf.mxu0
    %1910 = vdwg.mxu0
    %1911 = vmatpush.bf16.msra.mxu0 %v1137
    %1912 = vmatpush.bf16.msra.mxu0 %v1133
    %1913 = vmatpush.bf16.msra.mxu0 %v1129
    %1914 = vmatpush.bf16.msra.mxu0 %v1125
    %1915 = vmatpush.bf16.msra.mxu0 %v1121
    %1916 = vmatpush.bf16.msra.mxu0 %v1117
    %1917 = vmatpush.bf16.msra.mxu0 %v1113
    %1918 = vmatpush.bf16.msra.mxu0 %v1109
    %1919 = vmatmul.bf16.gmra.mxu0 %v291
    %v1920 = vpop.f32.mrf.mxu0
    %v1921 = vadd.f32 %v1908, %v1920
    %v1922 = vpop.f32.mrf.mxu0
    %1923 = vdwg.mxu0
    %1924 = vmatpush.bf16.msra.mxu0 %v1169
    %1925 = vmatpush.bf16.msra.mxu0 %v1165
    %1926 = vmatpush.bf16.msra.mxu0 %v1161
    %1927 = vmatpush.bf16.msra.mxu0 %v1157
    %1928 = vmatpush.bf16.msra.mxu0 %v1153
    %1929 = vmatpush.bf16.msra.mxu0 %v1149
    %1930 = vmatpush.bf16.msra.mxu0 %v1145
    %1931 = vmatpush.bf16.msra.mxu0 %v1141
    %1932 = vmatmul.bf16.gmra.mxu0 %v292
    %v1933 = vpop.f32.mrf.mxu0
    %v1934 = vadd.f32 %v1921, %v1933
    %v1935 = vpop.f32.mrf.mxu0
    %1936 = vdwg.mxu0
    %1937 = vmatpush.bf16.msra.mxu0 %v1201
    %1938 = vmatpush.bf16.msra.mxu0 %v1197
    %1939 = vmatpush.bf16.msra.mxu0 %v1193
    %1940 = vmatpush.bf16.msra.mxu0 %v1189
    %1941 = vmatpush.bf16.msra.mxu0 %v1185
    %1942 = vmatpush.bf16.msra.mxu0 %v1181
    %1943 = vmatpush.bf16.msra.mxu0 %v1177
    %1944 = vmatpush.bf16.msra.mxu0 %v1173
    %1945 = vmatmul.bf16.gmra.mxu0 %v293
    %v1946 = vpop.f32.mrf.mxu0
    %v1947 = vadd.f32 %v1934, %v1946
    %v1948 = vpop.f32.mrf.mxu0
    %1949 = vdwg.mxu0
    %1950 = vmatpush.bf16.msra.mxu0 %v1233
    %1951 = vmatpush.bf16.msra.mxu0 %v1229
    %1952 = vmatpush.bf16.msra.mxu0 %v1225
    %1953 = vmatpush.bf16.msra.mxu0 %v1221
    %1954 = vmatpush.bf16.msra.mxu0 %v1217
    %1955 = vmatpush.bf16.msra.mxu0 %v1213
    %1956 = vmatpush.bf16.msra.mxu0 %v1209
    %1957 = vmatpush.bf16.msra.mxu0 %v1205
    %1958 = vmatmul.bf16.gmra.mxu0 %v294
    %v1959 = vpop.f32.mrf.mxu0
    %v1960 = vadd.f32 %v1947, %v1959
    %v1961 = vpop.f32.mrf.mxu0
    %1962 = vdwg.mxu0
    %1963 = vmatpush.bf16.msra.mxu0 %v1265
    %1964 = vmatpush.bf16.msra.mxu0 %v1261
    %1965 = vmatpush.bf16.msra.mxu0 %v1257
    %1966 = vmatpush.bf16.msra.mxu0 %v1253
    %1967 = vmatpush.bf16.msra.mxu0 %v1249
    %1968 = vmatpush.bf16.msra.mxu0 %v1245
    %1969 = vmatpush.bf16.msra.mxu0 %v1241
    %1970 = vmatpush.bf16.msra.mxu0 %v1237
    %1971 = vmatmul.bf16.gmra.mxu0 %v295
    %v1972 = vpop.f32.mrf.mxu0
    %v1973 = vadd.f32 %v1960, %v1972
    %v1974 = vpop.f32.mrf.mxu0
    %1975 = vdwg.mxu0
    %1976 = vmatpush.bf16.msra.mxu0 %v1297
    %1977 = vmatpush.bf16.msra.mxu0 %v1293
    %1978 = vmatpush.bf16.msra.mxu0 %v1289
    %1979 = vmatpush.bf16.msra.mxu0 %v1285
    %1980 = vmatpush.bf16.msra.mxu0 %v1281
    %1981 = vmatpush.bf16.msra.mxu0 %v1277
    %1982 = vmatpush.bf16.msra.mxu0 %v1273
    %1983 = vmatpush.bf16.msra.mxu0 %v1269
    %1984 = vmatmul.bf16.gmra.mxu0 %v296
    %v1985 = vpop.f32.mrf.mxu0
    %v1986 = vadd.f32 %v1973, %v1985
    %v1987 = vpop.f32.mrf.mxu0
    %1988 = vdwg.mxu0
    %1989 = vmatpush.bf16.msra.mxu0 %v1329
    %1990 = vmatpush.bf16.msra.mxu0 %v1325
    %1991 = vmatpush.bf16.msra.mxu0 %v1321
    %1992 = vmatpush.bf16.msra.mxu0 %v1317
    %1993 = vmatpush.bf16.msra.mxu0 %v1313
    %1994 = vmatpush.bf16.msra.mxu0 %v1309
    %1995 = vmatpush.bf16.msra.mxu0 %v1305
    %1996 = vmatpush.bf16.msra.mxu0 %v1301
    %1997 = vmatmul.bf16.gmra.mxu0 %v297
    %v1998 = vpop.f32.mrf.mxu0
    %v1999 = vadd.f32 %v1986, %v1998
    %v2000 = vpop.f32.mrf.mxu0
    %2001 = vdwg.mxu0
    %v2002 = vmax.f32 %v1687, 0.0
    %v2003 = vmax.f32 %v1791, 0.0
    %v2004 = vmax.f32 %v1895, 0.0
    %v2005 = vmax.f32 %v1999, 0.0
    %v2006 = vpack.c.bf16 %v2002, %v2002
    %v2007 = vpack.c.bf16 %v2003, %v2003
    %v2008 = vpack.c.bf16 %v2004, %v2004
    %v2009 = vpack.c.bf16 %v2005, %v2005
    %v2010 = vld [vmem:[%s3] sm:$0xf]
    %v2011 = vld [vmem:[%s3 + $0x4] sm:$0xf]
    %v2012 = vld [vmem:[%s3 + $0x8] sm:$0xf]
    %v2013 = vld [vmem:[%s3 + $0xc] sm:$0xf]
    %v2014 = vld [vmem:[%s3 + $0x10] sm:$0xf]
    %v2015 = vld [vmem:[%s3 + $0x14] sm:$0xf]
    %v2016 = vld [vmem:[%s3 + $0x18] sm:$0xf]
    %v2017 = vld [vmem:[%s3 + $0x1c] sm:$0xf]
    %v2018 = vld [vmem:[%s3 + $0x20] sm:$0xf]
    %v2019 = vld [vmem:[%s3 + $0x24] sm:$0xf]
    %v2020 = vld [vmem:[%s3 + $0x28] sm:$0xf]
    %v2021 = vld [vmem:[%s3 + $0x2c] sm:$0xf]
    %v2022 = vld [vmem:[%s3 + $0x30] sm:$0xf]
    %v2023 = vld [vmem:[%s3 + $0x34] sm:$0xf]
    %v2024 = vld [vmem:[%s3 + $0x38] sm:$0xf]
    %v2025 = vld [vmem:[%s3 + $0x3c] sm:$0xf]
    %v2026 = vld [vmem:[%s3 + $0x40] sm:$0xf]
    %v2027 = vld [vmem:[%s3 + $0x44] sm:$0xf]
    %v2028 = vld [vmem:[%s3 + $0x48] sm:$0xf]
    %v2029 = vld [vmem:[%s3 + $0x4c] sm:$0xf]
    %v2030 = vld [vmem:[%s3 + $0x50] sm:$0xf]
    %v2031 = vld [vmem:[%s3 + $0x54] sm:$0xf]
    %v2032 = vld [vmem:[%s3 + $0x58] sm:$0xf]
    %v2033 = vld [vmem:[%s3 + $0x5c] sm:$0xf]
    %v2034 = vld [vmem:[%s3 + $0x60] sm:$0xf]
    %v2035 = vld [vmem:[%s3 + $0x64] sm:$0xf]
    %v2036 = vld [vmem:[%s3 + $0x68] sm:$0xf]
    %v2037 = vld [vmem:[%s3 + $0x6c] sm:$0xf]
    %v2038 = vld [vmem:[%s3 + $0x70] sm:$0xf]
    %v2039 = vld [vmem:[%s3 + $0x74] sm:$0xf]
    %v2040 = vld [vmem:[%s3 + $0x78] sm:$0xf]
    %v2041 = vld [vmem:[%s3 + $0x7c] sm:$0xf]
    %v2042 = vld [vmem:[%s3 + $0x80] sm:$0xf]
    %v2043 = vld [vmem:[%s3 + $0x84] sm:$0xf]
    %v2044 = vld [vmem:[%s3 + $0x88] sm:$0xf]
    %v2045 = vld [vmem:[%s3 + $0x8c] sm:$0xf]
    %v2046 = vld [vmem:[%s3 + $0x90] sm:$0xf]
    %v2047 = vld [vmem:[%s3 + $0x94] sm:$0xf]
    %v2048 = vld [vmem:[%s3 + $0x98] sm:$0xf]
    %v2049 = vld [vmem:[%s3 + $0x9c] sm:$0xf]
    %v2050 = vld [vmem:[%s3 + $0xa0] sm:$0xf]
    %v2051 = vld [vmem:[%s3 + $0xa4] sm:$0xf]
    %v2052 = vld [vmem:[%s3 + $0xa8] sm:$0xf]
    %v2053 = vld [vmem:[%s3 + $0xac] sm:$0xf]
    %v2054 = vld [vmem:[%s3 + $0xb0] sm:$0xf]
    %v2055 = vld [vmem:[%s3 + $0xb4] sm:$0xf]
    %v2056 = vld [vmem:[%s3 + $0xb8] sm:$0xf]
    %v2057 = vld [vmem:[%s3 + $0xbc] sm:$0xf]
    %v2058 = vld [vmem:[%s3 + $0xc0] sm:$0xf]
    %v2059 = vld [vmem:[%s3 + $0xc4] sm:$0xf]
    %v2060 = vld [vmem:[%s3 + $0xc8] sm:$0xf]
    %v2061 = vld [vmem:[%s3 + $0xcc] sm:$0xf]
    %v2062 = vld [vmem:[%s3 + $0xd0] sm:$0xf]
    %v2063 = vld [vmem:[%s3 + $0xd4] sm:$0xf]
    %v2064 = vld [vmem:[%s3 + $0xd8] sm:$0xf]
    %v2065 = vld [vmem:[%s3 + $0xdc] sm:$0xf]
    %v2066 = vld [vmem:[%s3 + $0xe0] sm:$0xf]
    %v2067 = vld [vmem:[%s3 + $0xe4] sm:$0xf]
    %v2068 = vld [vmem:[%s3 + $0xe8] sm:$0xf]
    %v2069 = vld [vmem:[%s3 + $0xec] sm:$0xf]
    %v2070 = vld [vmem:[%s3 + $0xf0] sm:$0xf]
    %v2071 = vld [vmem:[%s3 + $0xf4] sm:$0xf]
    %v2072 = vld [vmem:[%s3 + $0xf8] sm:$0xf]
    %v2073 = vld [vmem:[%s3 + $0xfc] sm:$0xf]
    %v2074 = vld [vmem:[%s4] sm:$0x1]
    %v2076 = vperm.slane %v2074, 0
    %v2142 = vunpack.c.l.b16 %v2010
    %v2143 = vunpack.c.l.b16 %v2011
    %v2144 = vunpack.c.l.b16 %v2012
    %v2145 = vunpack.c.l.b16 %v2013
    %v2146 = vunpack.c.l.b16 %v2014
    %v2147 = vunpack.c.l.b16 %v2015
    %v2148 = vunpack.c.l.b16 %v2016
    %v2149 = vunpack.c.l.b16 %v2017
    %v2150 = vunpack.c.l.b16 %v2018
    %v2151 = vunpack.c.l.b16 %v2019
    %v2152 = vunpack.c.l.b16 %v2020
    %v2153 = vunpack.c.l.b16 %v2021
    %v2154 = vunpack.c.l.b16 %v2022
    %v2155 = vunpack.c.l.b16 %v2023
    %v2156 = vunpack.c.l.b16 %v2024
    %v2157 = vunpack.c.l.b16 %v2025
    %v2158 = vunpack.c.l.b16 %v2026
    %v2159 = vunpack.c.l.b16 %v2027
    %v2160 = vunpack.c.l.b16 %v2028
    %v2161 = vunpack.c.l.b16 %v2029
    %v2162 = vunpack.c.l.b16 %v2030
    %v2163 = vunpack.c.l.b16 %v2031
    %v2164 = vunpack.c.l.b16 %v2032
    %v2165 = vunpack.c.l.b16 %v2033
    %v2166 = vunpack.c.l.b16 %v2034
    %v2167 = vunpack.c.l.b16 %v2035
    %v2168 = vunpack.c.l.b16 %v2036
    %v2169 = vunpack.c.l.b16 %v2037
    %v2170 = vunpack.c.l.b16 %v2038
    %v2171 = vunpack.c.l.b16 %v2039
    %v2172 = vunpack.c.l.b16 %v2040
    %v2173 = vunpack.c.l.b16 %v2041
    %v2174 = vunpack.c.l.b16 %v2042
    %v2175 = vunpack.c.l.b16 %v2043
    %v2176 = vunpack.c.l.b16 %v2044
    %v2177 = vunpack.c.l.b16 %v2045
    %v2178 = vunpack.c.l.b16 %v2046
    %v2179 = vunpack.c.l.b16 %v2047
    %v2180 = vunpack.c.l.b16 %v2048
    %v2181 = vunpack.c.l.b16 %v2049
    %v2182 = vunpack.c.l.b16 %v2050
    %v2183 = vunpack.c.l.b16 %v2051
    %v2184 = vunpack.c.l.b16 %v2052
    %v2185 = vunpack.c.l.b16 %v2053
    %v2186 = vunpack.c.l.b16 %v2054
    %v2187 = vunpack.c.l.b16 %v2055
    %v2188 = vunpack.c.l.b16 %v2056
    %v2189 = vunpack.c.l.b16 %v2057
    %v2190 = vunpack.c.l.b16 %v2058
    %v2191 = vunpack.c.l.b16 %v2059
    %v2192 = vunpack.c.l.b16 %v2060
    %v2193 = vunpack.c.l.b16 %v2061
    %v2194 = vunpack.c.l.b16 %v2062
    %v2195 = vunpack.c.l.b16 %v2063
    %v2196 = vunpack.c.l.b16 %v2064
    %v2197 = vunpack.c.l.b16 %v2065
    %v2198 = vunpack.c.l.b16 %v2066
    %v2199 = vunpack.c.l.b16 %v2067
    %v2200 = vunpack.c.l.b16 %v2068
    %v2201 = vunpack.c.l.b16 %v2069
    %v2202 = vunpack.c.l.b16 %v2070
    %v2203 = vunpack.c.l.b16 %v2071
    %v2204 = vunpack.c.l.b16 %v2072
    %v2205 = vunpack.c.l.b16 %v2073
    %v2206 = vpack.c.b16 %v2143, %v2142
    %v2207 = vpack.c.b16 %v2145, %v2144
    %v2208 = vpack.c.b16 %v2147, %v2146
    %v2209 = vpack.c.b16 %v2149, %v2148
    %v2210 = vpack.c.b16 %v2151, %v2150
    %v2211 = vpack.c.b16 %v2153, %v2152
    %v2212 = vpack.c.b16 %v2155, %v2154
    %v2213 = vpack.c.b16 %v2157, %v2156
    %v2214 = vpack.c.b16 %v2159, %v2158
    %v2215 = vpack.c.b16 %v2161, %v2160
    %v2216 = vpack.c.b16 %v2163, %v2162
    %v2217 = vpack.c.b16 %v2165, %v2164
    %v2218 = vpack.c.b16 %v2167, %v2166
    %v2219 = vpack.c.b16 %v2169, %v2168
    %v2220 = vpack.c.b16 %v2171, %v2170
    %v2221 = vpack.c.b16 %v2173, %v2172
    %v2222 = vpack.c.b16 %v2175, %v2174
    %v2223 = vpack.c.b16 %v2177, %v2176
    %v2224 = vpack.c.b16 %v2179, %v2178
    %v2225 = vpack.c.b16 %v2181, %v2180
    %v2226 = vpack.c.b16 %v2183, %v2182
    %v2227 = vpack.c.b16 %v2185, %v2184
    %v2228 = vpack.c.b16 %v2187, %v2186
    %v2229 = vpack.c.b16 %v2189, %v2188
    %v2230 = vpack.c.b16 %v2191, %v2190
    %v2231 = vpack.c.b16 %v2193, %v2192
    %v2232 = vpack.c.b16 %v2195, %v2194
    %v2233 = vpack.c.b16 %v2197, %v2196
    %v2234 = vpack.c.b16 %v2199, %v2198
    %v2235 = vpack.c.b16 %v2201, %v2200
    %v2236 = vpack.c.b16 %v2203, %v2202
    %v2237 = vpack.c.b16 %v2205, %v2204
    %2270 = vmatpush.bf16.msra.mxu0 %v2213
    %2271 = vmatpush.bf16.msra.mxu0 %v2212
    %2272 = vmatpush.bf16.msra.mxu0 %v2211
    %2273 = vmatpush.bf16.msra.mxu0 %v2210
    %2274 = vmatpush.bf16.msra.mxu0 %v2209
    %2275 = vmatpush.bf16.msra.mxu0 %v2208
    %2276 = vmatpush.bf16.msra.mxu0 %v2207
    %2277 = vmatpush.bf16.msra.mxu0 %v2206
    %2278 = vmatmul.bf16.gmra.mxu0 %v2006
    %v2279 = vpop.f32.mrf.mxu0
    %v2280 = vadd.f32 %v2076, %v2279
    %v2281 = vpop.f32.mrf.mxu0
    %2282 = vdwg.mxu0
    %2283 = vmatpush.bf16.msra.mxu0 %v2221
    %2284 = vmatpush.bf16.msra.mxu0 %v2220
    %2285 = vmatpush.bf16.msra.mxu0 %v2219
    %2286 = vmatpush.bf16.msra.mxu0 %v2218
    %2287 = vmatpush.bf16.msra.mxu0 %v2217
    %2288 = vmatpush.bf16.msra.mxu0 %v2216
    %2289 = vmatpush.bf16.msra.mxu0 %v2215
    %2290 = vmatpush.bf16.msra.mxu0 %v2214
    %2291 = vmatmul.bf16.gmra.mxu0 %v2007
    %v2292 = vpop.f32.mrf.mxu0
    %v2293 = vadd.f32 %v2280, %v2292
    %v2294 = vpop.f32.mrf.mxu0
    %2295 = vdwg.mxu0
    %2296 = vmatpush.bf16.msra.mxu0 %v2229
    %2297 = vmatpush.bf16.msra.mxu0 %v2228
    %2298 = vmatpush.bf16.msra.mxu0 %v2227
    %2299 = vmatpush.bf16.msra.mxu0 %v2226
    %2300 = vmatpush.bf16.msra.mxu0 %v2225
    %2301 = vmatpush.bf16.msra.mxu0 %v2224
    %2302 = vmatpush.bf16.msra.mxu0 %v2223
    %2303 = vmatpush.bf16.msra.mxu0 %v2222
    %2304 = vmatmul.bf16.gmra.mxu0 %v2008
    %v2305 = vpop.f32.mrf.mxu0
    %v2306 = vadd.f32 %v2293, %v2305
    %v2307 = vpop.f32.mrf.mxu0
    %2308 = vdwg.mxu0
    %2309 = vmatpush.bf16.msra.mxu0 %v2237
    %2310 = vmatpush.bf16.msra.mxu0 %v2236
    %2311 = vmatpush.bf16.msra.mxu0 %v2235
    %2312 = vmatpush.bf16.msra.mxu0 %v2234
    %2313 = vmatpush.bf16.msra.mxu0 %v2233
    %2314 = vmatpush.bf16.msra.mxu0 %v2232
    %2315 = vmatpush.bf16.msra.mxu0 %v2231
    %2316 = vmatpush.bf16.msra.mxu0 %v2230
    %2317 = vmatmul.bf16.gmra.mxu0 %v2009
    %v2318 = vpop.f32.mrf.mxu0
    %v2319 = vadd.f32 %v2306, %v2318
    %v2320 = vpop.f32.mrf.mxu0
    %2321 = vdwg.mxu0
    %2322 = vst [vmem:[#allocation2] sm:$0x3] %v2319
    // Predicated region
    $region22: #{small_cnn_forward.3} parent=1 // pred_check
      _
    $region23: #{small_cnn_forward.3} parent=1 // pred_check_branch
      %2324 = sbr.rel (0) target = $region25
    $region24: #{small_cnn_forward.3} parent=1 // pred_region
      %2326 = vsyncadd [#allocation3], 0
      %s2328 = sshll.u32 [#allocation2], 4
      %s2329 = int_to_ptr.vmem [resolvable:$true] %s2328
      %s2330 = sshll.u32 %s5, 4
      %s2331 = int_to_ptr.hbm [resolvable:$true] %s2330
      %2333 = dma.vmem_to_hbm [thread:$0]  %s2329, 32, %s2331, [#allocation3]
    $region25: #{small_cnn_forward.3} parent=1 // pred_fallthru
      _
    // Predicated region
    $region26: #{small_cnn_forward.3} parent=1 // pred_check
      _
    $region27: #{small_cnn_forward.3} parent=1 // pred_check_branch
      %2335 = sbr.rel (0) target = $region29
    $region28: #{small_cnn_forward.3} parent=1 // pred_region
      %2337 = dma.done [#allocation3], 32
    $region29: #{small_cnn_forward.3} parent=1 // pred_fallthru
      _
    %2338 = vsyncpa [#allocation3], 1

// kernel: small_cnn_forward.2
$region0: #{small_cnn_forward.2}
  #allocation0 [shape = 'u32[]', space=smem, size = 0x4, offset = 0x4, fixed_abs, tag = 'smem constant byte address 0x4 - core index']
  #allocation1 [shape = 'u32[72,128]{1,0:T(1,128)}', space=vmem, size = 0x9000, scoped, tag = 'internal scratch']
  #allocation2 [shape = 'bf16[64,305]{1,0:T(8,128)(2,1)}', space=vmem, size = 0xc000, scoped, tag = 'scratch operand']
  #allocation3 [shape = 'bf16[128,89]{1,0:T(8,128)(2,1)}', space=vmem, size = 0x8000, scoped, tag = 'scratch operand']
  %s0 = inlined_call_operand.vmem [shape: bf16[2,32,1121], index: 0, kind: input, shape index: {}]
  %s1 = inlined_call_operand.vmem [shape: bf16[16,32], index: 1, kind: input, shape index: {}]
  %s2 = inlined_call_operand.vmem [shape: f32[16,1], index: 2, kind: input, shape index: {}]
  %s3 = inlined_call_operand.vmem [shape: bf16[1086,324], index: 3, kind: input, shape index: {}]
  %s4 = inlined_call_operand.vmem [shape: bf16[32,64], index: 4, kind: input, shape index: {}]
  %s5 = inlined_call_operand.vmem [shape: f32[32,1], index: 5, kind: input, shape index: {}]
  %s6 = inlined_call_operand.vmem [shape: bf16[286,100], index: 6, kind: input, shape index: {}]
  %s7 = inlined_call_operand.vmem [shape: bf16[64,128], index: 7, kind: input, shape index: {}]
  %s8 = inlined_call_operand.vmem [shape: f32[64,1], index: 8, kind: input, shape index: {}]
  %s9 = inlined_call_operand.vmem [shape: bf16[78,16], index: 9, kind: input, shape index: {}]
  %s10 = inlined_call_operand.vmem [shape: bf16[2,64,16], index: 10, kind: output, shape index: {}]
  %s11 = sld [smem:[#allocation0]]
  $region73: #{small_cnn_forward.2} parent=0
    _
  %s13 = ssub.s32 1, %s11
  %s14 = scalar_select 0, %s13, %s11
  loop: start=0, step=1, limit=4
  $region2: #{small_cnn_forward.2} parent=0 // loop_pre_header
    _
  $region3: #{small_cnn_forward.2} parent=0 // loop_header
    %s16 = sphi 0, %s20
    %p17 = scmp.ge.s32.totalorder %s16, 4
    %s26 = sphi 0, %s28
    %s29 = sphi 0, %s26
    %s30 = sphi 0, %s29
    %s46 = sphi 0, %s30
    %s50 = sphi 0, %s50
    %s52 = sphi 0, %s50
    %s53 = sphi 0, %s52
    %s67 = sphi 0, %s53
    %s71 = sphi 0, %s71
    %s73 = sphi 0, %s71
    %s74 = sphi 0, %s73
    %s88 = sphi 0, %s74
    %s92 = sphi 0, %s92
    %s94 = sphi 0, %s92
    %s95 = sphi 0, %s94
    %s109 = sphi 0, %s95
    %s113 = sphi 0, %s113
    %s115 = sphi 0, %s113
    %s116 = sphi 0, %s115
    %s130 = sphi 0, %s116
    %s134 = sphi 0, %s134
    %s136 = sphi 0, %s134
    %s137 = sphi 0, %s136
    %s151 = sphi 0, %s137
    %s155 = sphi 0, %s155
    %s157 = sphi 0, %s155
    %s158 = sphi 0, %s157
    %s172 = sphi 0, %s158
    %s176 = sphi 0, %s176
    %s178 = sphi 0, %s176
    %s179 = sphi 0, %s178
    %s193 = sphi 0, %s179
    %s197 = sphi 0, %s197
    %s199 = sphi 0, %s197
    %s200 = sphi 0, %s199
    %s214 = sphi 0, %s200
    %s218 = sphi 0, %s218
    %s220 = sphi 0, %s218
    %s221 = sphi 0, %s220
    %s235 = sphi 0, %s221
    %s241 = sphi 0, %s243
    %s244 = sphi 0, %s241
    %s245 = sphi 0, %s244
    %s261 = sphi 0, %s245
  $region4: #{small_cnn_forward.2} parent=0 // loop_header_branch
    %19 = sbr.rel (%p17) target = $region8
  $region5: #{small_cnn_forward.2} parent=0 // loop_body
    %s21 = ssub.s32 %s16, 1
    %s22 = ssub.s32 %s16, 2
    %s23 = sadd.s32 %s16, 1
    %s24 = ssub.s32 %s16, %s23
    %p25 = scmp.eq.s32.totalorder %s24, 0
    %s27 = sadd.s32 %s26, 1
    %s28 = scalar_select %p25, %s26, %s27
    %p31 = pneg %p25
    %p32 = scmp.eq.s32.totalorder %s16, 1
    %p33 = por %p31, %p32
    %p34 = scmp.ne.s32.totalorder %s26, %s29
    %p35 = scmp.eq.s32.totalorder %s16, 0
    %p36 = por %p34, %p35
    %p37 = scmp.ne.s32.totalorder %s26, %s29
    %p38 = scmp.eq.s32.totalorder %s21, 1
    %p39 = por %p37, %p38
    %p40 = scmp.ne.s32.totalorder %s29, %s30
    %p41 = scmp.eq.s32.totalorder %s21, 0
    %p42 = por %p40, %p41
    %p43 = scmp.ne.s32.totalorder %s29, %s30
    %p44 = scmp.eq.s32.totalorder %s22, 1
    %p45 = por %p43, %p44
    %p47 = scmp.ne.s32.totalorder %s30, %s46
    %p48 = scmp.eq.s32.totalorder %s22, 0
    %p49 = por %p47, %p48
    %s51 = sadd.s32 %s50, 1
    %p54 = scmp.eq.s32.totalorder %s16, 1
    %p55 = scmp.ne.s32.totalorder %s50, %s52
    %p56 = scmp.eq.s32.totalorder %s16, 0
    %p57 = por %p55, %p56
    %p58 = scmp.ne.s32.totalorder %s50, %s52
    %p59 = scmp.eq.s32.totalorder %s21, 1
    %p60 = por %p58, %p59
    %p61 = scmp.ne.s32.totalorder %s52, %s53
    %p62 = scmp.eq.s32.totalorder %s21, 0
    %p63 = por %p61, %p62
    %p64 = scmp.ne.s32.totalorder %s52, %s53
    %p65 = scmp.eq.s32.totalorder %s22, 1
    %p66 = por %p64, %p65
    %p68 = scmp.ne.s32.totalorder %s53, %s67
    %p69 = scmp.eq.s32.totalorder %s22, 0
    %p70 = por %p68, %p69
    %s72 = sadd.s32 %s71, 1
    %p75 = scmp.eq.s32.totalorder %s16, 1
    %p76 = scmp.ne.s32.totalorder %s71, %s73
    %p77 = scmp.eq.s32.totalorder %s16, 0
    %p78 = por %p76, %p77
    %p79 = scmp.ne.s32.totalorder %s71, %s73
    %p80 = scmp.eq.s32.totalorder %s21, 1
    %p81 = por %p79, %p80
    %p82 = scmp.ne.s32.totalorder %s73, %s74
    %p83 = scmp.eq.s32.totalorder %s21, 0
    %p84 = por %p82, %p83
    %p85 = scmp.ne.s32.totalorder %s73, %s74
    %p86 = scmp.eq.s32.totalorder %s22, 1
    %p87 = por %p85, %p86
    %p89 = scmp.ne.s32.totalorder %s74, %s88
    %p90 = scmp.eq.s32.totalorder %s22, 0
    %p91 = por %p89, %p90
    %s93 = sadd.s32 %s92, 1
    %p96 = scmp.eq.s32.totalorder %s16, 1
    %p97 = scmp.ne.s32.totalorder %s92, %s94
    %p98 = scmp.eq.s32.totalorder %s16, 0
    %p99 = por %p97, %p98
    %p100 = scmp.ne.s32.totalorder %s92, %s94
    %p101 = scmp.eq.s32.totalorder %s21, 1
    %p102 = por %p100, %p101
    %p103 = scmp.ne.s32.totalorder %s94, %s95
    %p104 = scmp.eq.s32.totalorder %s21, 0
    %p105 = por %p103, %p104
    %p106 = scmp.ne.s32.totalorder %s94, %s95
    %p107 = scmp.eq.s32.totalorder %s22, 1
    %p108 = por %p106, %p107
    %p110 = scmp.ne.s32.totalorder %s95, %s109
    %p111 = scmp.eq.s32.totalorder %s22, 0
    %p112 = por %p110, %p111
    %s114 = sadd.s32 %s113, 1
    %p117 = scmp.eq.s32.totalorder %s16, 1
    %p118 = scmp.ne.s32.totalorder %s113, %s115
    %p119 = scmp.eq.s32.totalorder %s16, 0
    %p120 = por %p118, %p119
    %p121 = scmp.ne.s32.totalorder %s113, %s115
    %p122 = scmp.eq.s32.totalorder %s21, 1
    %p123 = por %p121, %p122
    %p124 = scmp.ne.s32.totalorder %s115, %s116
    %p125 = scmp.eq.s32.totalorder %s21, 0
    %p126 = por %p124, %p125
    %p127 = scmp.ne.s32.totalorder %s115, %s116
    %p128 = scmp.eq.s32.totalorder %s22, 1
    %p129 = por %p127, %p128
    %p131 = scmp.ne.s32.totalorder %s116, %s130
    %p132 = scmp.eq.s32.totalorder %s22, 0
    %p133 = por %p131, %p132
    %s135 = sadd.s32 %s134, 1
    %p138 = scmp.eq.s32.totalorder %s16, 1
    %p139 = scmp.ne.s32.totalorder %s134, %s136
    %p140 = scmp.eq.s32.totalorder %s16, 0
    %p141 = por %p139, %p140
    %p142 = scmp.ne.s32.totalorder %s134, %s136
    %p143 = scmp.eq.s32.totalorder %s21, 1
    %p144 = por %p142, %p143
    %p145 = scmp.ne.s32.totalorder %s136, %s137
    %p146 = scmp.eq.s32.totalorder %s21, 0
    %p147 = por %p145, %p146
    %p148 = scmp.ne.s32.totalorder %s136, %s137
    %p149 = scmp.eq.s32.totalorder %s22, 1
    %p150 = por %p148, %p149
    %p152 = scmp.ne.s32.totalorder %s137, %s151
    %p153 = scmp.eq.s32.totalorder %s22, 0
    %p154 = por %p152, %p153
    %s156 = sadd.s32 %s155, 1
    %p159 = scmp.eq.s32.totalorder %s16, 1
    %p160 = scmp.ne.s32.totalorder %s155, %s157
    %p161 = scmp.eq.s32.totalorder %s16, 0
    %p162 = por %p160, %p161
    %p163 = scmp.ne.s32.totalorder %s155, %s157
    %p164 = scmp.eq.s32.totalorder %s21, 1
    %p165 = por %p163, %p164
    %p166 = scmp.ne.s32.totalorder %s157, %s158
    %p167 = scmp.eq.s32.totalorder %s21, 0
    %p168 = por %p166, %p167
    %p169 = scmp.ne.s32.totalorder %s157, %s158
    %p170 = scmp.eq.s32.totalorder %s22, 1
    %p171 = por %p169, %p170
    %p173 = scmp.ne.s32.totalorder %s158, %s172
    %p174 = scmp.eq.s32.totalorder %s22, 0
    %p175 = por %p173, %p174
    %s177 = sadd.s32 %s176, 1
    %p180 = scmp.eq.s32.totalorder %s16, 1
    %p181 = scmp.ne.s32.totalorder %s176, %s178
    %p182 = scmp.eq.s32.totalorder %s16, 0
    %p183 = por %p181, %p182
    %p184 = scmp.ne.s32.totalorder %s176, %s178
    %p185 = scmp.eq.s32.totalorder %s21, 1
    %p186 = por %p184, %p185
    %p187 = scmp.ne.s32.totalorder %s178, %s179
    %p188 = scmp.eq.s32.totalorder %s21, 0
    %p189 = por %p187, %p188
    %p190 = scmp.ne.s32.totalorder %s178, %s179
    %p191 = scmp.eq.s32.totalorder %s22, 1
    %p192 = por %p190, %p191
    %p194 = scmp.ne.s32.totalorder %s179, %s193
    %p195 = scmp.eq.s32.totalorder %s22, 0
    %p196 = por %p194, %p195
    %s198 = sadd.s32 %s197, 1
    %p201 = scmp.eq.s32.totalorder %s16, 1
    %p202 = scmp.ne.s32.totalorder %s197, %s199
    %p203 = scmp.eq.s32.totalorder %s16, 0
    %p204 = por %p202, %p203
    %p205 = scmp.ne.s32.totalorder %s197, %s199
    %p206 = scmp.eq.s32.totalorder %s21, 1
    %p207 = por %p205, %p206
    %p208 = scmp.ne.s32.totalorder %s199, %s200
    %p209 = scmp.eq.s32.totalorder %s21, 0
    %p210 = por %p208, %p209
    %p211 = scmp.ne.s32.totalorder %s199, %s200
    %p212 = scmp.eq.s32.totalorder %s22, 1
    %p213 = por %p211, %p212
    %p215 = scmp.ne.s32.totalorder %s200, %s214
    %p216 = scmp.eq.s32.totalorder %s22, 0
    %p217 = por %p215, %p216
    %s219 = sadd.s32 %s218, 1
    %p222 = scmp.eq.s32.totalorder %s16, 1
    %p223 = scmp.ne.s32.totalorder %s218, %s220
    %p224 = scmp.eq.s32.totalorder %s16, 0
    %p225 = por %p223, %p224
    %p226 = scmp.ne.s32.totalorder %s218, %s220
    %p227 = scmp.eq.s32.totalorder %s21, 1
    %p228 = por %p226, %p227
    %p229 = scmp.ne.s32.totalorder %s220, %s221
    %p230 = scmp.eq.s32.totalorder %s21, 0
    %p231 = por %p229, %p230
    %p232 = scmp.ne.s32.totalorder %s220, %s221
    %p233 = scmp.eq.s32.totalorder %s22, 1
    %p234 = por %p232, %p233
    %p236 = scmp.ne.s32.totalorder %s221, %s235
    %p237 = scmp.eq.s32.totalorder %s22, 0
    %p238 = por %p236, %p237
    %s239 = ssub.s32 %s16, %s23
    %p240 = scmp.eq.s32.totalorder %s239, 0
    %s242 = sadd.s32 %s241, 1
    %s243 = scalar_select %p240, %s241, %s242
    %p246 = pneg %p240
    %p247 = scmp.eq.s32.totalorder %s16, 1
    %p248 = por %p246, %p247
    %p249 = scmp.ne.s32.totalorder %s241, %s244
    %p250 = scmp.eq.s32.totalorder %s16, 0
    %p251 = por %p249, %p250
    %p252 = scmp.ne.s32.totalorder %s241, %s244
    %p253 = scmp.eq.s32.totalorder %s21, 1
    %p254 = por %p252, %p253
    %p255 = scmp.ne.s32.totalorder %s244, %s245
    %p256 = scmp.eq.s32.totalorder %s21, 0
    %p257 = por %p255, %p256
    %p258 = scmp.ne.s32.totalorder %s244, %s245
    %p259 = scmp.eq.s32.totalorder %s22, 1
    %p260 = por %p258, %p259
    %p262 = scmp.ne.s32.totalorder %s245, %s261
    %p263 = scmp.eq.s32.totalorder %s22, 0
    %p264 = por %p262, %p263
    %p265 = scmp.le.s32.totalorder 1, %s16
    %p266 = scmp.lt.s32.totalorder %s16, 3
    %p267 = pnand %p265, %p266
    %p268 = pneg %p267
    // Predicated region
    $region9: #{small_cnn_forward.2} parent=5 // pred_check
      _
    $region10: #{small_cnn_forward.2} parent=5 // pred_check_branch
      %270 = sbr.rel (%p267) target = $region12
    $region11: #{small_cnn_forward.2} parent=5 // pred_region
      %s271 = ssub.s32 %s16, 1
      // Predicated region
      $region13: #{small_cnn_forward.2} parent=11 // pred_check
        %p272 = pneg %p63
      $region14: #{small_cnn_forward.2} parent=11 // pred_check_branch
        %274 = sbr.rel (%p272) target = $region16
      $region15: #{small_cnn_forward.2} parent=11 // pred_region
        _
      $region16: #{small_cnn_forward.2} parent=11 // pred_fallthru
        _
      // Predicated region
      $region17: #{small_cnn_forward.2} parent=11 // pred_check
        %p275 = pneg %p84
      $region18: #{small_cnn_forward.2} parent=11 // pred_check_branch
        %277 = sbr.rel (%p275) target = $region20
      $region19: #{small_cnn_forward.2} parent=11 // pred_region
        _
      $region20: #{small_cnn_forward.2} parent=11 // pred_fallthru
        _
      // Predicated region
      $region21: #{small_cnn_forward.2} parent=11 // pred_check
        %p278 = pneg %p105
      $region22: #{small_cnn_forward.2} parent=11 // pred_check_branch
        %280 = sbr.rel (%p278) target = $region24
      $region23: #{small_cnn_forward.2} parent=11 // pred_region
        _
      $region24: #{small_cnn_forward.2} parent=11 // pred_fallthru
        _
      // Predicated region
      $region25: #{small_cnn_forward.2} parent=11 // pred_check
        %p281 = pneg %p126
      $region26: #{small_cnn_forward.2} parent=11 // pred_check_branch
        %283 = sbr.rel (%p281) target = $region28
      $region27: #{small_cnn_forward.2} parent=11 // pred_region
        _
      $region28: #{small_cnn_forward.2} parent=11 // pred_fallthru
        _
      // Predicated region
      $region29: #{small_cnn_forward.2} parent=11 // pred_check
        %p284 = pneg %p147
      $region30: #{small_cnn_forward.2} parent=11 // pred_check_branch
        %286 = sbr.rel (%p284) target = $region32
      $region31: #{small_cnn_forward.2} parent=11 // pred_region
        _
      $region32: #{small_cnn_forward.2} parent=11 // pred_fallthru
        _
      // Predicated region
      $region33: #{small_cnn_forward.2} parent=11 // pred_check
        %p287 = pneg %p168
      $region34: #{small_cnn_forward.2} parent=11 // pred_check_branch
        %289 = sbr.rel (%p287) target = $region36
      $region35: #{small_cnn_forward.2} parent=11 // pred_region
        _
      $region36: #{small_cnn_forward.2} parent=11 // pred_fallthru
        _
      // Predicated region
      $region37: #{small_cnn_forward.2} parent=11 // pred_check
        %p290 = pneg %p189
      $region38: #{small_cnn_forward.2} parent=11 // pred_check_branch
        %292 = sbr.rel (%p290) target = $region40
      $region39: #{small_cnn_forward.2} parent=11 // pred_region
        _
      $region40: #{small_cnn_forward.2} parent=11 // pred_fallthru
        _
      // Predicated region
      $region41: #{small_cnn_forward.2} parent=11 // pred_check
        %p293 = pneg %p210
      $region42: #{small_cnn_forward.2} parent=11 // pred_check_branch
        %295 = sbr.rel (%p293) target = $region44
      $region43: #{small_cnn_forward.2} parent=11 // pred_region
        _
      $region44: #{small_cnn_forward.2} parent=11 // pred_fallthru
        _
      // Predicated region
      $region45: #{small_cnn_forward.2} parent=11 // pred_check
        %p296 = pneg %p231
      $region46: #{small_cnn_forward.2} parent=11 // pred_check_branch
        %298 = sbr.rel (%p296) target = $region48
      $region47: #{small_cnn_forward.2} parent=11 // pred_region
        _
      $region48: #{small_cnn_forward.2} parent=11 // pred_fallthru
        _
    $region12: #{small_cnn_forward.2} parent=5 // pred_fallthru
      _
    %p299 = scmp.lt.s32.totalorder %s16, 2
    // Predicated region
    $region49: #{small_cnn_forward.2} parent=5 // pred_check
      %p300 = pneg %p299
    $region50: #{small_cnn_forward.2} parent=5 // pred_check_branch
      %302 = sbr.rel (%p300) target = $region52
    $region51: #{small_cnn_forward.2} parent=5 // pred_region
      // Predicated region
      $region53: #{small_cnn_forward.2} parent=51 // pred_check
        %p303 = pneg %p36
      $region54: #{small_cnn_forward.2} parent=51 // pred_check_branch
        %305 = sbr.rel (%p303) target = $region56
      $region55: #{small_cnn_forward.2} parent=51 // pred_region
        %p306 = scmp.lt.s32.totalorder %s16, 1
        %s307 = scalar_select %p306, %s16, 1
        %s308 = smul.addr %s307, 36
        %s309 = smul.addr %s308, 4
        %s310 = scalar_lea.vmem %s0, %s309
      $region56: #{small_cnn_forward.2} parent=51 // pred_fallthru
        _
    $region52: #{small_cnn_forward.2} parent=5 // pred_fallthru
      _
    %p311 = scmp.le.s32.totalorder 1, %s16
    %p312 = scmp.lt.s32.totalorder %s16, 3
    %p313 = pnand %p311, %p312
    %p314 = pneg %p313
    // Predicated region
    $region57: #{small_cnn_forward.2} parent=5 // pred_check
      _
    $region58: #{small_cnn_forward.2} parent=5 // pred_check_branch
      %316 = sbr.rel (%p313) target = $region60
    $region59: #{small_cnn_forward.2} parent=5 // pred_region
      %s317 = ssub.s32 %s16, 1
      %p318 = scmp.lt.s32.totalorder %s21, 1
      %s319 = scalar_select %p318, %s21, 1
      %s320 = smul.addr %s319, 36
      %s321 = smul.addr %s320, 4
      %s322 = scalar_lea.vmem %s0, %s321
      %p323 = pneg %p42
      %p324 = pneg %p39
      %p325 = pneg %p63
      %p326 = pneg %p60
      %p327 = pneg %p84
      %p328 = pneg %p81
      %p329 = pneg %p105
      %p330 = pneg %p102
      %p331 = pneg %p126
      %p332 = pneg %p123
      %p333 = pneg %p147
      %p334 = pneg %p144
      %p335 = pneg %p168
      %p336 = pneg %p165
      %p337 = pneg %p189
      %p338 = pneg %p186
      %p339 = pneg %p210
      %p340 = pneg %p207
      %p341 = pneg %p231
      %p342 = pneg %p228
      %p343 = pneg %p257
      %p344 = pneg %p254
      %p345 = scmp.lt.s32.totalorder %s21, 1
      %s346 = scalar_select %p345, %s21, 1
      %s347 = smul.addr %s346, 8
      %s348 = smul.addr %s347, 4
      %s349 = scalar_lea.vmem %s10, %s348
      %p350 = scmp.lt.s32.totalorder %s21, 1
      %s351 = scalar_select %p350, %s21, 1
      %s352 = smul.addr %s351, 36
      %s353 = smul.addr %s352, 4
      %s354 = scalar_lea.vmem %s0, %s353
      %p355 = scmp.lt.s32.totalorder %s21, 1
      %s356 = scalar_select %p355, %s21, 1
      %s357 = smul.addr %s356, 8
      %s358 = smul.addr %s357, 4
      %s359 = scalar_lea.vmem %s10, %s358
      %v361 = vld [vmem:[%s1] sm:$0xf]
      %v362 = vld [vmem:[%s1 + $0x4] sm:$0xf]
      %v363 = vld [vmem:[%s354] sm:$0xff]
      %v364 = vld [vmem:[%s354 + $0x8] sm:$0xff]
      %v365 = vld [vmem:[%s354 + $0x10] sm:$0xff]
      %v366 = vld [vmem:[%s354 + $0x18] sm:$0xff]
      %v367 = vld [vmem:[%s354 + $0x20] sm:$0xf]
      %v368 = vld [vmem:[%s354 + $0x24] sm:$0xff]
      %v369 = vld [vmem:[%s354 + $0x2c] sm:$0xff]
      %v370 = vld [vmem:[%s354 + $0x34] sm:$0xff]
      %v371 = vld [vmem:[%s354 + $0x3c] sm:$0xff]
      %v372 = vld [vmem:[%s354 + $0x44] sm:$0xf]
      %v373 = vld [vmem:[%s354 + $0x48] sm:$0xff]
      %v374 = vld [vmem:[%s354 + $0x50] sm:$0xff]
      %v375 = vld [vmem:[%s354 + $0x58] sm:$0xff]
      %v376 = vld [vmem:[%s354 + $0x60] sm:$0xff]
      %v377 = vld [vmem:[%s354 + $0x68] sm:$0xf]
      %v378 = vld [vmem:[%s354 + $0x6c] sm:$0xff]
      %v379 = vld [vmem:[%s354 + $0x74] sm:$0xff]
      %v380 = vld [vmem:[%s354 + $0x7c] sm:$0xff]
      %v381 = vld [vmem:[%s354 + $0x84] sm:$0xff]
      %v382 = vld [vmem:[%s354 + $0x8c] sm:$0xf]
      %v383 = vld [vmem:[%s2] sm:$0xff]
      %v384 = vld [vmem:[%s2 + $0x8] sm:$0xff]
      %386 = vset.pattern.permute.xlu0 0
      %387 = vperm.xlu0 %386, %v383
      %v388 = vpop.permute.xlu0 %387
      %391 = vset.pattern.permute.xlu0 0
      %392 = vperm.xlu0 %391, %v384
      %v393 = vpop.permute.xlu0 %392
      %v397 = vunpack.c.l.b16 %v361
      %v398 = vunpack.c.l.b16 %v362
      %v399 = vpack.c.b16 %v398, %v397
      %v420 = vunpack.c.l.b16 %v363
      %v421 = vunpack.c.h.b16 %v363
      %v422 = vunpack.c.l.b16 %v364
      %v423 = vunpack.c.h.b16 %v364
      %v424 = vunpack.c.l.b16 %v365
      %v425 = vunpack.c.h.b16 %v365
      %v426 = vunpack.c.l.b16 %v366
      %v427 = vunpack.c.h.b16 %v366
      %v428 = vunpack.c.l.b16 %v367
      %v429 = vunpack.c.l.b16 %v368
      %v430 = vunpack.c.h.b16 %v368
      %v431 = vunpack.c.l.b16 %v369
      %v432 = vunpack.c.h.b16 %v369
      %v433 = vunpack.c.l.b16 %v370
      %v434 = vunpack.c.h.b16 %v370
      %v435 = vunpack.c.l.b16 %v371
      %v436 = vunpack.c.h.b16 %v371
      %v437 = vunpack.c.l.b16 %v372
      %v438 = vunpack.c.l.b16 %v373
      %v439 = vunpack.c.h.b16 %v373
      %v440 = vunpack.c.l.b16 %v374
      %v441 = vunpack.c.h.b16 %v374
      %v442 = vunpack.c.l.b16 %v375
      %v443 = vunpack.c.h.b16 %v375
      %v444 = vunpack.c.l.b16 %v376
      %v445 = vunpack.c.h.b16 %v376
      %v446 = vunpack.c.l.b16 %v377
      %v447 = vunpack.c.l.b16 %v378
      %v448 = vunpack.c.h.b16 %v378
      %v449 = vunpack.c.l.b16 %v379
      %v450 = vunpack.c.h.b16 %v379
      %v451 = vunpack.c.l.b16 %v380
      %v452 = vunpack.c.h.b16 %v380
      %v453 = vunpack.c.l.b16 %v381
      %v454 = vunpack.c.h.b16 %v381
      %v455 = vunpack.c.l.b16 %v382
      %v456 = vpack.c.b16 %v429, %v420
      %v457 = vpack.c.b16 %v430, %v421
      %v458 = vpack.c.b16 %v431, %v422
      %v459 = vpack.c.b16 %v432, %v423
      %v460 = vpack.c.b16 %v433, %v424
      %v461 = vpack.c.b16 %v434, %v425
      %v462 = vpack.c.b16 %v435, %v426
      %v463 = vpack.c.b16 %v436, %v427
      %v464 = vpack.c.b16 %v437, %v428
      %v465 = vpack.c.b16 %v447, %v438
      %v466 = vpack.c.b16 %v448, %v439
      %v467 = vpack.c.b16 %v449, %v440
      %v468 = vpack.c.b16 %v450, %v441
      %v469 = vpack.c.b16 %v451, %v442
      %v470 = vpack.c.b16 %v452, %v443
      %v471 = vpack.c.b16 %v453, %v444
      %v472 = vpack.c.b16 %v454, %v445
      %v473 = vpack.c.b16 %v455, %v446
      %vm492 = vcmask 261120
      %v494 = vsel %vm492, %v399, 0
      %496 = vmatpush.bf16.msra.mxu0 0
      %497 = vmatpush.bf16.msra.mxu0 0
      %498 = vmatpush.bf16.msra.mxu0 0
      %499 = vmatpush.bf16.msra.mxu0 0
      %500 = vmatpush.bf16.msra.mxu0 0
      %501 = vmatpush.bf16.msra.mxu0 0
      %502 = vmatpush.bf16.msra.mxu0 %v465
      %503 = vmatpush.bf16.msra.mxu0 %v456
      %504 = vmatmul.bf16.gmra.mxu0 %v494
      %v505 = vpop.f32.mrf.mxu0
      %v506 = vadd.f32 %v388, %v505
      %v507 = vpop.f32.mrf.mxu0
      %v508 = vadd.f32 %v393, %v507
      %509 = vdwg.mxu0
      %510 = vmatpush.bf16.msra.mxu0 0
      %511 = vmatpush.bf16.msra.mxu0 0
      %512 = vmatpush.bf16.msra.mxu0 0
      %513 = vmatpush.bf16.msra.mxu0 0
      %514 = vmatpush.bf16.msra.mxu0 0
      %515 = vmatpush.bf16.msra.mxu0 0
      %516 = vmatpush.bf16.msra.mxu0 %v466
      %517 = vmatpush.bf16.msra.mxu0 %v457
      %518 = vmatmul.bf16.gmra.mxu0 %v494
      %v519 = vpop.f32.mrf.mxu0
      %v520 = vadd.f32 %v388, %v519
      %v521 = vpop.f32.mrf.mxu0
      %v522 = vadd.f32 %v393, %v521
      %523 = vdwg.mxu0
      %524 = vmatpush.bf16.msra.mxu0 0
      %525 = vmatpush.bf16.msra.mxu0 0
      %526 = vmatpush.bf16.msra.mxu0 0
      %527 = vmatpush.bf16.msra.mxu0 0
      %528 = vmatpush.bf16.msra.mxu0 0
      %529 = vmatpush.bf16.msra.mxu0 0
      %530 = vmatpush.bf16.msra.mxu0 %v467
      %531 = vmatpush.bf16.msra.mxu0 %v458
      %532 = vmatmul.bf16.gmra.mxu0 %v494
      %v533 = vpop.f32.mrf.mxu0
      %v534 = vadd.f32 %v388, %v533
      %v535 = vpop.f32.mrf.mxu0
      %v536 = vadd.f32 %v393, %v535
      %537 = vdwg.mxu0
      %538 = vmatpush.bf16.msra.mxu0 0
      %539 = vmatpush.bf16.msra.mxu0 0
      %540 = vmatpush.bf16.msra.mxu0 0
      %541 = vmatpush.bf16.msra.mxu0 0
      %542 = vmatpush.bf16.msra.mxu0 0
      %543 = vmatpush.bf16.msra.mxu0 0
      %544 = vmatpush.bf16.msra.mxu0 %v468
      %545 = vmatpush.bf16.msra.mxu0 %v459
      %546 = vmatmul.bf16.gmra.mxu0 %v494
      %v547 = vpop.f32.mrf.mxu0
      %v548 = vadd.f32 %v388, %v547
      %v549 = vpop.f32.mrf.mxu0
      %v550 = vadd.f32 %v393, %v549
      %551 = vdwg.mxu0
      %552 = vmatpush.bf16.msra.mxu0 0
      %553 = vmatpush.bf16.msra.mxu0 0
      %554 = vmatpush.bf16.msra.mxu0 0
      %555 = vmatpush.bf16.msra.mxu0 0
      %556 = vmatpush.bf16.msra.mxu0 0
      %557 = vmatpush.bf16.msra.mxu0 0
      %558 = vmatpush.bf16.msra.mxu0 %v469
      %559 = vmatpush.bf16.msra.mxu0 %v460
      %560 = vmatmul.bf16.gmra.mxu0 %v494
      %v561 = vpop.f32.mrf.mxu0
      %v562 = vadd.f32 %v388, %v561
      %v563 = vpop.f32.mrf.mxu0
      %v564 = vadd.f32 %v393, %v563
      %565 = vdwg.mxu0
      %566 = vmatpush.bf16.msra.mxu0 0
      %567 = vmatpush.bf16.msra.mxu0 0
      %568 = vmatpush.bf16.msra.mxu0 0
      %569 = vmatpush.bf16.msra.mxu0 0
      %570 = vmatpush.bf16.msra.mxu0 0
      %571 = vmatpush.bf16.msra.mxu0 0
      %572 = vmatpush.bf16.msra.mxu0 %v470
      %573 = vmatpush.bf16.msra.mxu0 %v461
      %574 = vmatmul.bf16.gmra.mxu0 %v494
      %v575 = vpop.f32.mrf.mxu0
      %v576 = vadd.f32 %v388, %v575
      %v577 = vpop.f32.mrf.mxu0
      %v578 = vadd.f32 %v393, %v577
      %579 = vdwg.mxu0
      %580 = vmatpush.bf16.msra.mxu0 0
      %581 = vmatpush.bf16.msra.mxu0 0
      %582 = vmatpush.bf16.msra.mxu0 0
      %583 = vmatpush.bf16.msra.mxu0 0
      %584 = vmatpush.bf16.msra.mxu0 0
      %585 = vmatpush.bf16.msra.mxu0 0
      %586 = vmatpush.bf16.msra.mxu0 %v471
      %587 = vmatpush.bf16.msra.mxu0 %v462
      %588 = vmatmul.bf16.gmra.mxu0 %v494
      %v589 = vpop.f32.mrf.mxu0
      %v590 = vadd.f32 %v388, %v589
      %v591 = vpop.f32.mrf.mxu0
      %v592 = vadd.f32 %v393, %v591
      %593 = vdwg.mxu0
      %594 = vmatpush.bf16.msra.mxu0 0
      %595 = vmatpush.bf16.msra.mxu0 0
      %596 = vmatpush.bf16.msra.mxu0 0
      %597 = vmatpush.bf16.msra.mxu0 0
      %598 = vmatpush.bf16.msra.mxu0 0
      %599 = vmatpush.bf16.msra.mxu0 0
      %600 = vmatpush.bf16.msra.mxu0 %v472
      %601 = vmatpush.bf16.msra.mxu0 %v463
      %602 = vmatmul.bf16.gmra.mxu0 %v494
      %v603 = vpop.f32.mrf.mxu0
      %v604 = vadd.f32 %v388, %v603
      %v605 = vpop.f32.mrf.mxu0
      %v606 = vadd.f32 %v393, %v605
      %607 = vdwg.mxu0
      %608 = vmatpush.bf16.msra.mxu0 0
      %609 = vmatpush.bf16.msra.mxu0 0
      %610 = vmatpush.bf16.msra.mxu0 0
      %611 = vmatpush.bf16.msra.mxu0 0
      %612 = vmatpush.bf16.msra.mxu0 0
      %613 = vmatpush.bf16.msra.mxu0 0
      %614 = vmatpush.bf16.msra.mxu0 %v473
      %615 = vmatpush.bf16.msra.mxu0 %v464
      %616 = vmatmul.bf16.gmra.mxu0 %v494
      %v617 = vpop.f32.mrf.mxu0
      %v618 = vadd.f32 %v388, %v617
      %v619 = vpop.f32.mrf.mxu0
      %v620 = vadd.f32 %v393, %v619
      %621 = vdwg.mxu0
      %v622 = vmax.f32 %v506, 0.0
      %v623 = vmax.f32 %v520, 0.0
      %v624 = vmax.f32 %v534, 0.0
      %v625 = vmax.f32 %v548, 0.0
      %v626 = vmax.f32 %v562, 0.0
      %v627 = vmax.f32 %v576, 0.0
      %v628 = vmax.f32 %v590, 0.0
      %v629 = vmax.f32 %v604, 0.0
      %v630 = vmax.f32 %v618, 0.0
      %v631 = vmax.f32 %v508, 0.0
      %v632 = vmax.f32 %v522, 0.0
      %v633 = vmax.f32 %v536, 0.0
      %v634 = vmax.f32 %v550, 0.0
      %v635 = vmax.f32 %v564, 0.0
      %v636 = vmax.f32 %v578, 0.0
      %v637 = vmax.f32 %v592, 0.0
      %v638 = vmax.f32 %v606, 0.0
      %v639 = vmax.f32 %v620, 0.0
      %658 = vrot.lane.b32.xlu0 %v622, 127
      %v659 = vpop.permute.xlu0 %658
      %660 = vrot.lane.b32.xlu0 %v623, 127
      %v661 = vpop.permute.xlu0 %660
      %662 = vrot.lane.b32.xlu0 %v624, 127
      %v663 = vpop.permute.xlu0 %662
      %664 = vrot.lane.b32.xlu0 %v625, 127
      %v665 = vpop.permute.xlu0 %664
      %666 = vrot.lane.b32.xlu0 %v626, 127
      %v667 = vpop.permute.xlu0 %666
      %668 = vrot.lane.b32.xlu0 %v627, 127
      %v669 = vpop.permute.xlu0 %668
      %670 = vrot.lane.b32.xlu0 %v628, 127
      %v671 = vpop.permute.xlu0 %670
      %672 = vrot.lane.b32.xlu0 %v629, 127
      %v673 = vpop.permute.xlu0 %672
      %674 = vrot.lane.b32.xlu0 %v630, 127
      %v675 = vpop.permute.xlu0 %674
      %676 = vrot.lane.b32.xlu0 %v631, 127
      %v677 = vpop.permute.xlu0 %676
      %678 = vrot.lane.b32.xlu0 %v632, 127
      %v679 = vpop.permute.xlu0 %678
      %680 = vrot.lane.b32.xlu0 %v633, 127
      %v681 = vpop.permute.xlu0 %680
      %682 = vrot.lane.b32.xlu0 %v634, 127
      %v683 = vpop.permute.xlu0 %682
      %684 = vrot.lane.b32.xlu0 %v635, 127
      %v685 = vpop.permute.xlu0 %684
      %686 = vrot.lane.b32.xlu0 %v636, 127
      %v687 = vpop.permute.xlu0 %686
      %688 = vrot.lane.b32.xlu0 %v637, 127
      %v689 = vpop.permute.xlu0 %688
      %690 = vrot.lane.b32.xlu0 %v638, 127
      %v691 = vpop.permute.xlu0 %690
      %692 = vrot.lane.b32.xlu0 %v639, 127
      %v693 = vpop.permute.xlu0 %692
      %vm694 = vcmask 1039360
      %v695 = vsel %vm694, %v659, %v661
      %v696 = vsel %vm694, %v661, %v663
      %v697 = vsel %vm694, %v663, %v665
      %v698 = vsel %vm694, %v665, %v667
      %v699 = vsel %vm694, %v667, %v669
      %v700 = vsel %vm694, %v669, %v671
      %v701 = vsel %vm694, %v671, %v673
      %v702 = vsel %vm694, %v673, %v675
      %v703 = vsel %vm694, %v677, %v679
      %v704 = vsel %vm694, %v679, %v681
      %v705 = vsel %vm694, %v681, %v683
      %v706 = vsel %vm694, %v683, %v685
      %v707 = vsel %vm694, %v685, %v687
      %v708 = vsel %vm694, %v687, %v689
      %v709 = vsel %vm694, %v689, %v691
      %v710 = vsel %vm694, %v691, %v693
      %v729 = vmax.f32 %v622, %v695
      %v730 = vmax.f32 %v623, %v696
      %v731 = vmax.f32 %v624, %v697
      %v732 = vmax.f32 %v625, %v698
      %v733 = vmax.f32 %v626, %v699
      %v734 = vmax.f32 %v627, %v700
      %v735 = vmax.f32 %v628, %v701
      %v736 = vmax.f32 %v629, %v702
      %v737 = vmax.f32 %v630, %v675
      %v738 = vmax.f32 %v631, %v703
      %v739 = vmax.f32 %v632, %v704
      %v740 = vmax.f32 %v633, %v705
      %v741 = vmax.f32 %v634, %v706
      %v742 = vmax.f32 %v635, %v707
      %v743 = vmax.f32 %v636, %v708
      %v744 = vmax.f32 %v637, %v709
      %v745 = vmax.f32 %v638, %v710
      %v746 = vmax.f32 %v639, %v693
      %765 = vrot.lane.b32.xlu0 %v729, 94
      %v766 = vpop.permute.xlu0 %765
      %767 = vrot.lane.b32.xlu0 %v730, 94
      %v768 = vpop.permute.xlu0 %767
      %769 = vrot.lane.b32.xlu0 %v731, 94
      %v770 = vpop.permute.xlu0 %769
      %771 = vrot.lane.b32.xlu0 %v732, 94
      %v772 = vpop.permute.xlu0 %771
      %773 = vrot.lane.b32.xlu0 %v733, 94
      %v774 = vpop.permute.xlu0 %773
      %775 = vrot.lane.b32.xlu0 %v734, 94
      %v776 = vpop.permute.xlu0 %775
      %777 = vrot.lane.b32.xlu0 %v735, 94
      %v778 = vpop.permute.xlu0 %777
      %779 = vrot.lane.b32.xlu0 %v736, 94
      %v780 = vpop.permute.xlu0 %779
      %781 = vrot.lane.b32.xlu0 %v737, 94
      %v782 = vpop.permute.xlu0 %781
      %783 = vrot.lane.b32.xlu0 %v738, 94
      %v784 = vpop.permute.xlu0 %783
      %785 = vrot.lane.b32.xlu0 %v739, 94
      %v786 = vpop.permute.xlu0 %785
      %787 = vrot.lane.b32.xlu0 %v740, 94
      %v788 = vpop.permute.xlu0 %787
      %789 = vrot.lane.b32.xlu0 %v741, 94
      %v790 = vpop.permute.xlu0 %789
      %791 = vrot.lane.b32.xlu0 %v742, 94
      %v792 = vpop.permute.xlu0 %791
      %793 = vrot.lane.b32.xlu0 %v743, 94
      %v794 = vpop.permute.xlu0 %793
      %795 = vrot.lane.b32.xlu0 %v744, 94
      %v796 = vpop.permute.xlu0 %795
      %797 = vrot.lane.b32.xlu0 %v745, 94
      %v798 = vpop.permute.xlu0 %797
      %799 = vrot.lane.b32.xlu0 %v746, 94
      %v800 = vpop.permute.xlu0 %799
      %vm801 = vcmask 769024
      %v802 = vsel %vm801, %v766, %v768
      %v803 = vsel %vm801, %v768, %v770
      %v804 = vsel %vm801, %v770, %v772
      %v805 = vsel %vm801, %v772, %v774
      %v806 = vsel %vm801, %v774, %v776
      %v807 = vsel %vm801, %v776, %v778
      %v808 = vsel %vm801, %v778, %v780
      %v809 = vsel %vm801, %v780, %v782
      %v810 = vsel %vm801, %v784, %v786
      %v811 = vsel %vm801, %v786, %v788
      %v812 = vsel %vm801, %v788, %v790
      %v813 = vsel %vm801, %v790, %v792
      %v814 = vsel %vm801, %v792, %v794
      %v815 = vsel %vm801, %v794, %v796
      %v816 = vsel %vm801, %v796, %v798
      %v817 = vsel %vm801, %v798, %v800
      %v836 = vmax.f32 %v729, %v802
      %v837 = vmax.f32 %v730, %v803
      %v838 = vmax.f32 %v731, %v804
      %v839 = vmax.f32 %v732, %v805
      %v840 = vmax.f32 %v733, %v806
      %v841 = vmax.f32 %v734, %v807
      %v842 = vmax.f32 %v735, %v808
      %v843 = vmax.f32 %v736, %v809
      %v844 = vmax.f32 %v737, %v782
      %v845 = vmax.f32 %v738, %v810
      %v846 = vmax.f32 %v739, %v811
      %v847 = vmax.f32 %v740, %v812
      %v848 = vmax.f32 %v741, %v813
      %v849 = vmax.f32 %v742, %v814
      %v850 = vmax.f32 %v743, %v815
      %v851 = vmax.f32 %v744, %v816
      %v852 = vmax.f32 %v745, %v817
      %v853 = vmax.f32 %v746, %v800
      %v854 = vpack.c.bf16 %v845, %v836
      %v855 = vpack.c.bf16 %v846, %v837
      %v856 = vpack.c.bf16 %v847, %v838
      %v857 = vpack.c.bf16 %v848, %v839
      %v858 = vpack.c.bf16 %v849, %v840
      %v859 = vpack.c.bf16 %v850, %v841
      %v860 = vpack.c.bf16 %v851, %v842
      %v861 = vpack.c.bf16 %v852, %v843
      %v862 = vpack.c.bf16 %v853, %v844
      %v863 = vld [vmem:[%s3] sm:$0xff]
      %v864 = vld [vmem:[%s3 + $0x8] sm:$0xf]
      %v865 = vld [vmem:[%s3 + $0xc] sm:$0xff]
      %v866 = vld [vmem:[%s3 + $0x14] sm:$0xf]
      %v867 = vld [vmem:[%s3 + $0x18] sm:$0xff]
      %v868 = vld [vmem:[%s3 + $0x20] sm:$0xf]
      %v869 = vld [vmem:[%s3 + $0x24] sm:$0xff]
      %v870 = vld [vmem:[%s3 + $0x2c] sm:$0xf]
      %v871 = vld [vmem:[%s3 + $0x30] sm:$0xff]
      %v872 = vld [vmem:[%s3 + $0x38] sm:$0xf]
      %v873 = vld [vmem:[%s3 + $0x3c] sm:$0xff]
      %v874 = vld [vmem:[%s3 + $0x44] sm:$0xf]
      %v875 = vld [vmem:[%s3 + $0x48] sm:$0xff]
      %v876 = vld [vmem:[%s3 + $0x50] sm:$0xf]
      %v877 = vld [vmem:[%s3 + $0x54] sm:$0xff]
      %v878 = vld [vmem:[%s3 + $0x5c] sm:$0xf]
      %v879 = vld [vmem:[%s3 + $0x60] sm:$0xff]
      %v880 = vld [vmem:[%s3 + $0x68] sm:$0xf]
      %v881 = vld [vmem:[%s3 + $0x6c] sm:$0xff]
      %v882 = vld [vmem:[%s3 + $0x74] sm:$0xf]
      %v883 = vld [vmem:[%s3 + $0x78] sm:$0xff]
      %v884 = vld [vmem:[%s3 + $0x80] sm:$0xf]
      %v885 = vld [vmem:[%s3 + $0x84] sm:$0xff]
      %v886 = vld [vmem:[%s3 + $0x8c] sm:$0xf]
      %v887 = vld [vmem:[%s3 + $0x90] sm:$0xff]
      %v888 = vld [vmem:[%s3 + $0x98] sm:$0xf]
      %v889 = vld [vmem:[%s3 + $0x9c] sm:$0xff]
      %v890 = vld [vmem:[%s3 + $0xa4] sm:$0xf]
      %v891 = vld [vmem:[%s3 + $0xa8] sm:$0xff]
      %v892 = vld [vmem:[%s3 + $0xb0] sm:$0xf]
      %v893 = vld [vmem:[%s3 + $0xb4] sm:$0xff]
      %v894 = vld [vmem:[%s3 + $0xbc] sm:$0xf]
      %v895 = vld [vmem:[%s3 + $0xc0] sm:$0xff]
      %v896 = vld [vmem:[%s3 + $0xc8] sm:$0xf]
      %v897 = vld [vmem:[%s3 + $0xcc] sm:$0xff]
      %v898 = vld [vmem:[%s3 + $0xd4] sm:$0xf]
      %v899 = vld [vmem:[%s3 + $0xd8] sm:$0xff]
      %v900 = vld [vmem:[%s3 + $0xe0] sm:$0xf]
      %v901 = vld [vmem:[%s3 + $0xe4] sm:$0xff]
      %v902 = vld [vmem:[%s3 + $0xec] sm:$0xf]
      %v903 = vld [vmem:[%s3 + $0xf0] sm:$0xff]
      %v904 = vld [vmem:[%s3 + $0xf8] sm:$0xf]
      %v905 = vld [vmem:[%s3 + $0xfc] sm:$0xff]
      %v906 = vld [vmem:[%s3 + $0x104] sm:$0xf]
      %v907 = vld [vmem:[%s3 + $0x108] sm:$0xff]
      %v908 = vld [vmem:[%s3 + $0x110] sm:$0xf]
      %v909 = vld [vmem:[%s3 + $0x114] sm:$0xff]
      %v910 = vld [vmem:[%s3 + $0x11c] sm:$0xf]
      %v911 = vld [vmem:[%s3 + $0x120] sm:$0xff]
      %v912 = vld [vmem:[%s3 + $0x128] sm:$0xf]
      %v913 = vld [vmem:[%s3 + $0x12c] sm:$0xff]
      %v914 = vld [vmem:[%s3 + $0x134] sm:$0xf]
      %v915 = vld [vmem:[%s3 + $0x138] sm:$0xff]
      %v916 = vld [vmem:[%s3 + $0x140] sm:$0xf]
      %v917 = vld [vmem:[%s3 + $0x144] sm:$0xff]
      %v918 = vld [vmem:[%s3 + $0x14c] sm:$0xf]
      %v919 = vld [vmem:[%s3 + $0x150] sm:$0xff]
      %v920 = vld [vmem:[%s3 + $0x158] sm:$0xf]
      %v921 = vld [vmem:[%s3 + $0x15c] sm:$0xff]
      %v922 = vld [vmem:[%s3 + $0x164] sm:$0xf]
      %v923 = vld [vmem:[%s3 + $0x168] sm:$0xff]
      %v924 = vld [vmem:[%s3 + $0x170] sm:$0xf]
      %v925 = vld [vmem:[%s3 + $0x174] sm:$0xff]
      %v926 = vld [vmem:[%s3 + $0x17c] sm:$0xf]
      %v927 = vld [vmem:[%s3 + $0x180] sm:$0xff]
      %v928 = vld [vmem:[%s3 + $0x188] sm:$0xf]
      %v929 = vld [vmem:[%s3 + $0x18c] sm:$0xff]
      %v930 = vld [vmem:[%s3 + $0x194] sm:$0xf]
      %v931 = vld [vmem:[%s3 + $0x198] sm:$0xff]
      %v932 = vld [vmem:[%s3 + $0x1a0] sm:$0xf]
      %v933 = vld [vmem:[%s3 + $0x1a4] sm:$0xff]
      %v934 = vld [vmem:[%s3 + $0x1ac] sm:$0xf]
      %v935 = vld [vmem:[%s3 + $0x1b0] sm:$0xff]
      %v936 = vld [vmem:[%s3 + $0x1b8] sm:$0xf]
      %v937 = vld [vmem:[%s3 + $0x1bc] sm:$0xff]
      %v938 = vld [vmem:[%s3 + $0x1c4] sm:$0xf]
      %v939 = vld [vmem:[%s3 + $0x1c8] sm:$0xff]
      %v940 = vld [vmem:[%s3 + $0x1d0] sm:$0xf]
      %v941 = vld [vmem:[%s3 + $0x1d4] sm:$0xff]
      %v942 = vld [vmem:[%s3 + $0x1dc] sm:$0xf]
      %v943 = vld [vmem:[%s3 + $0x1e0] sm:$0xff]
      %v944 = vld [vmem:[%s3 + $0x1e8] sm:$0xf]
      %v945 = vld [vmem:[%s3 + $0x1ec] sm:$0xff]
      %v946 = vld [vmem:[%s3 + $0x1f4] sm:$0xf]
      %v947 = vld [vmem:[%s3 + $0x1f8] sm:$0xff]
      %v948 = vld [vmem:[%s3 + $0x200] sm:$0xf]
      %v949 = vld [vmem:[%s3 + $0x204] sm:$0xff]
      %v950 = vld [vmem:[%s3 + $0x20c] sm:$0xf]
      %v951 = vld [vmem:[%s3 + $0x210] sm:$0xff]
      %v952 = vld [vmem:[%s3 + $0x218] sm:$0xf]
      %v953 = vld [vmem:[%s3 + $0x21c] sm:$0xff]
      %v954 = vld [vmem:[%s3 + $0x224] sm:$0xf]
      %v955 = vld [vmem:[%s3 + $0x228] sm:$0xff]
      %v956 = vld [vmem:[%s3 + $0x230] sm:$0xf]
      %v957 = vld [vmem:[%s3 + $0x234] sm:$0xff]
      %v958 = vld [vmem:[%s3 + $0x23c] sm:$0xf]
      %v959 = vld [vmem:[%s3 + $0x240] sm:$0xff]
      %v960 = vld [vmem:[%s3 + $0x248] sm:$0xf]
      %v961 = vld [vmem:[%s3 + $0x24c] sm:$0xff]
      %v962 = vld [vmem:[%s3 + $0x254] sm:$0xf]
      %v963 = vld [vmem:[%s3 + $0x258] sm:$0xff]
      %v964 = vld [vmem:[%s3 + $0x260] sm:$0xf]
      %v965 = vld [vmem:[%s3 + $0x264] sm:$0xff]
      %v966 = vld [vmem:[%s3 + $0x26c] sm:$0xf]
      %v967 = vld [vmem:[%s3 + $0x270] sm:$0xff]
      %v968 = vld [vmem:[%s3 + $0x278] sm:$0xf]
      %v969 = vld [vmem:[%s3 + $0x27c] sm:$0xff]
      %v970 = vld [vmem:[%s3 + $0x284] sm:$0xf]
      %v971 = vld [vmem:[%s3 + $0x288] sm:$0xff]
      %v972 = vld [vmem:[%s3 + $0x290] sm:$0xf]
      %v973 = vld [vmem:[%s3 + $0x294] sm:$0xff]
      %v974 = vld [vmem:[%s3 + $0x29c] sm:$0xf]
      %v975 = vld [vmem:[%s3 + $0x2a0] sm:$0xff]
      %v976 = vld [vmem:[%s3 + $0x2a8] sm:$0xf]
      %v977 = vld [vmem:[%s3 + $0x2ac] sm:$0xff]
      %v978 = vld [vmem:[%s3 + $0x2b4] sm:$0xf]
      %v979 = vld [vmem:[%s3 + $0x2b8] sm:$0xff]
      %v980 = vld [vmem:[%s3 + $0x2c0] sm:$0xf]
      %v981 = vld [vmem:[%s3 + $0x2c4] sm:$0xff]
      %v982 = vld [vmem:[%s3 + $0x2cc] sm:$0xf]
      %v983 = vld [vmem:[%s3 + $0x2d0] sm:$0xff]
      %v984 = vld [vmem:[%s3 + $0x2d8] sm:$0xf]
      %v985 = vld [vmem:[%s3 + $0x2dc] sm:$0xff]
      %v986 = vld [vmem:[%s3 + $0x2e4] sm:$0xf]
      %v987 = vld [vmem:[%s3 + $0x2e8] sm:$0xff]
      %v988 = vld [vmem:[%s3 + $0x2f0] sm:$0xf]
      %v989 = vld [vmem:[%s3 + $0x2f4] sm:$0xff]
      %v990 = vld [vmem:[%s3 + $0x2fc] sm:$0xf]
      %v991 = vld [vmem:[%s3 + $0x300] sm:$0xff]
      %v992 = vld [vmem:[%s3 + $0x308] sm:$0xf]
      %v993 = vld [vmem:[%s3 + $0x30c] sm:$0xff]
      %v994 = vld [vmem:[%s3 + $0x314] sm:$0xf]
      %v995 = vld [vmem:[%s3 + $0x318] sm:$0xff]
      %v996 = vld [vmem:[%s3 + $0x320] sm:$0xf]
      %v997 = vld [vmem:[%s3 + $0x324] sm:$0xff]
      %v998 = vld [vmem:[%s3 + $0x32c] sm:$0xf]
      %v999 = vld [vmem:[%s3 + $0x330] sm:$0xff]
      %v1000 = vld [vmem:[%s3 + $0x338] sm:$0xf]
      %v1001 = vld [vmem:[%s3 + $0x33c] sm:$0xff]
      %v1002 = vld [vmem:[%s3 + $0x344] sm:$0xf]
      %v1003 = vld [vmem:[%s3 + $0x348] sm:$0xff]
      %v1004 = vld [vmem:[%s3 + $0x350] sm:$0xf]
      %v1005 = vld [vmem:[%s3 + $0x354] sm:$0xff]
      %v1006 = vld [vmem:[%s3 + $0x35c] sm:$0xf]
      %v1007 = vld [vmem:[%s3 + $0x360] sm:$0xff]
      %v1008 = vld [vmem:[%s3 + $0x368] sm:$0xf]
      %v1009 = vld [vmem:[%s3 + $0x36c] sm:$0xff]
      %v1010 = vld [vmem:[%s3 + $0x374] sm:$0xf]
      %v1011 = vld [vmem:[%s3 + $0x378] sm:$0xff]
      %v1012 = vld [vmem:[%s3 + $0x380] sm:$0xf]
      %v1013 = vld [vmem:[%s3 + $0x384] sm:$0xff]
      %v1014 = vld [vmem:[%s3 + $0x38c] sm:$0xf]
      %v1015 = vld [vmem:[%s3 + $0x390] sm:$0xff]
      %v1016 = vld [vmem:[%s3 + $0x398] sm:$0xf]
      %v1017 = vld [vmem:[%s3 + $0x39c] sm:$0xff]
      %v1018 = vld [vmem:[%s3 + $0x3a4] sm:$0xf]
      %v1019 = vld [vmem:[%s3 + $0x3a8] sm:$0xff]
      %v1020 = vld [vmem:[%s3 + $0x3b0] sm:$0xf]
      %v1021 = vld [vmem:[%s3 + $0x3b4] sm:$0xff]
      %v1022 = vld [vmem:[%s3 + $0x3bc] sm:$0xf]
      %v1023 = vld [vmem:[%s3 + $0x3c0] sm:$0xff]
      %v1024 = vld [vmem:[%s3 + $0x3c8] sm:$0xf]
      %v1025 = vld [vmem:[%s3 + $0x3cc] sm:$0xff]
      %v1026 = vld [vmem:[%s3 + $0x3d4] sm:$0xf]
      %v1027 = vld [vmem:[%s3 + $0x3d8] sm:$0xff]
      %v1028 = vld [vmem:[%s3 + $0x3e0] sm:$0xf]
      %v1029 = vld [vmem:[%s3 + $0x3e4] sm:$0xff]
      %v1030 = vld [vmem:[%s3 + $0x3ec] sm:$0xf]
      %v1031 = vld [vmem:[%s3 + $0x3f0] sm:$0xff]
      %v1032 = vld [vmem:[%s3 + $0x3f8] sm:$0xf]
      %v1033 = vld [vmem:[%s3 + $0x3fc] sm:$0xff]
      %v1034 = vld [vmem:[%s3 + $0x404] sm:$0xf]
      %v1035 = vld [vmem:[%s3 + $0x408] sm:$0xff]
      %v1036 = vld [vmem:[%s3 + $0x410] sm:$0xf]
      %v1037 = vld [vmem:[%s3 + $0x414] sm:$0xff]
      %v1038 = vld [vmem:[%s3 + $0x41c] sm:$0xf]
      %v1039 = vld [vmem:[%s3 + $0x420] sm:$0xff]
      %v1040 = vld [vmem:[%s3 + $0x428] sm:$0xf]
      %v1041 = vld [vmem:[%s3 + $0x42c] sm:$0xff]
      %v1042 = vld [vmem:[%s3 + $0x434] sm:$0xf]
      %v1043 = vld [vmem:[%s3 + $0x438] sm:$0xff]
      %v1044 = vld [vmem:[%s3 + $0x440] sm:$0xf]
      %v1045 = vld [vmem:[%s3 + $0x444] sm:$0xff]
      %v1046 = vld [vmem:[%s3 + $0x44c] sm:$0xf]
      %v1047 = vld [vmem:[%s3 + $0x450] sm:$0xff]
      %v1048 = vld [vmem:[%s3 + $0x458] sm:$0xf]
      %v1049 = vld [vmem:[%s3 + $0x45c] sm:$0xff]
      %v1050 = vld [vmem:[%s3 + $0x464] sm:$0xf]
      %v1051 = vld [vmem:[%s3 + $0x468] sm:$0xff]
      %v1052 = vld [vmem:[%s3 + $0x470] sm:$0xf]
      %v1053 = vld [vmem:[%s3 + $0x474] sm:$0xff]
      %v1054 = vld [vmem:[%s3 + $0x47c] sm:$0xf]
      %v1055 = vld [vmem:[%s3 + $0x480] sm:$0xff]
      %v1056 = vld [vmem:[%s3 + $0x488] sm:$0xf]
      %v1057 = vld [vmem:[%s3 + $0x48c] sm:$0xff]
      %v1058 = vld [vmem:[%s3 + $0x494] sm:$0xf]
      %v1059 = vld [vmem:[%s3 + $0x498] sm:$0xff]
      %v1060 = vld [vmem:[%s3 + $0x4a0] sm:$0xf]
      %v1061 = vld [vmem:[%s3 + $0x4a4] sm:$0xff]
      %v1062 = vld [vmem:[%s3 + $0x4ac] sm:$0xf]
      %v1063 = vld [vmem:[%s3 + $0x4b0] sm:$0xff]
      %v1064 = vld [vmem:[%s3 + $0x4b8] sm:$0xf]
      %v1065 = vld [vmem:[%s3 + $0x4bc] sm:$0xff]
      %v1066 = vld [vmem:[%s3 + $0x4c4] sm:$0xf]
      %v1067 = vld [vmem:[%s3 + $0x4c8] sm:$0xff]
      %v1068 = vld [vmem:[%s3 + $0x4d0] sm:$0xf]
      %v1069 = vld [vmem:[%s3 + $0x4d4] sm:$0xff]
      %v1070 = vld [vmem:[%s3 + $0x4dc] sm:$0xf]
      %v1071 = vld [vmem:[%s3 + $0x4e0] sm:$0xff]
      %v1072 = vld [vmem:[%s3 + $0x4e8] sm:$0xf]
      %v1073 = vld [vmem:[%s3 + $0x4ec] sm:$0xff]
      %v1074 = vld [vmem:[%s3 + $0x4f4] sm:$0xf]
      %v1075 = vld [vmem:[%s3 + $0x4f8] sm:$0xff]
      %v1076 = vld [vmem:[%s3 + $0x500] sm:$0xf]
      %v1077 = vld [vmem:[%s3 + $0x504] sm:$0xff]
      %v1078 = vld [vmem:[%s3 + $0x50c] sm:$0xf]
      %v1079 = vld [vmem:[%s3 + $0x510] sm:$0xff]
      %v1080 = vld [vmem:[%s3 + $0x518] sm:$0xf]
      %v1081 = vld [vmem:[%s3 + $0x51c] sm:$0xff]
      %v1082 = vld [vmem:[%s3 + $0x524] sm:$0xf]
      %v1083 = vld [vmem:[%s3 + $0x528] sm:$0xff]
      %v1084 = vld [vmem:[%s3 + $0x530] sm:$0xf]
      %v1085 = vld [vmem:[%s3 + $0x534] sm:$0xff]
      %v1086 = vld [vmem:[%s3 + $0x53c] sm:$0xf]
      %v1087 = vld [vmem:[%s3 + $0x540] sm:$0xff]
      %v1088 = vld [vmem:[%s3 + $0x548] sm:$0xf]
      %v1089 = vld [vmem:[%s3 + $0x54c] sm:$0xff]
      %v1090 = vld [vmem:[%s3 + $0x554] sm:$0xf]
      %v1091 = vld [vmem:[%s3 + $0x558] sm:$0xff]
      %v1092 = vld [vmem:[%s3 + $0x560] sm:$0xf]
      %v1093 = vld [vmem:[%s3 + $0x564] sm:$0xff]
      %v1094 = vld [vmem:[%s3 + $0x56c] sm:$0xf]
      %v1095 = vld [vmem:[%s3 + $0x570] sm:$0xff]
      %v1096 = vld [vmem:[%s3 + $0x578] sm:$0xf]
      %v1097 = vld [vmem:[%s3 + $0x57c] sm:$0xff]
      %v1098 = vld [vmem:[%s3 + $0x584] sm:$0xf]
      %v1099 = vld [vmem:[%s3 + $0x588] sm:$0xff]
      %v1100 = vld [vmem:[%s3 + $0x590] sm:$0xf]
      %v1101 = vld [vmem:[%s3 + $0x594] sm:$0xff]
      %v1102 = vld [vmem:[%s3 + $0x59c] sm:$0xf]
      %v1103 = vld [vmem:[%s3 + $0x5a0] sm:$0xff]
      %v1104 = vld [vmem:[%s3 + $0x5a8] sm:$0xf]
      %v1105 = vld [vmem:[%s3 + $0x5ac] sm:$0xff]
      %v1106 = vld [vmem:[%s3 + $0x5b4] sm:$0xf]
      %v1107 = vld [vmem:[%s3 + $0x5b8] sm:$0xff]
      %v1108 = vld [vmem:[%s3 + $0x5c0] sm:$0xf]
      %v1109 = vld [vmem:[%s3 + $0x5c4] sm:$0xff]
      %v1110 = vld [vmem:[%s3 + $0x5cc] sm:$0xf]
      %v1111 = vld [vmem:[%s3 + $0x5d0] sm:$0xff]
      %v1112 = vld [vmem:[%s3 + $0x5d8] sm:$0xf]
      %v1113 = vld [vmem:[%s3 + $0x5dc] sm:$0xff]
      %v1114 = vld [vmem:[%s3 + $0x5e4] sm:$0xf]
      %v1115 = vld [vmem:[%s3 + $0x5e8] sm:$0xff]
      %v1116 = vld [vmem:[%s3 + $0x5f0] sm:$0xf]
      %v1117 = vld [vmem:[%s3 + $0x5f4] sm:$0xff]
      %v1118 = vld [vmem:[%s3 + $0x5fc] sm:$0xf]
      %v1119 = vld [vmem:[%s3 + $0x600] sm:$0xff]
      %v1120 = vld [vmem:[%s3 + $0x608] sm:$0xf]
      %v1121 = vld [vmem:[%s3 + $0x60c] sm:$0xff]
      %v1122 = vld [vmem:[%s3 + $0x614] sm:$0xf]
      %v1123 = vld [vmem:[%s3 + $0x618] sm:$0xff]
      %v1124 = vld [vmem:[%s3 + $0x620] sm:$0xf]
      %v1125 = vld [vmem:[%s3 + $0x624] sm:$0xff]
      %v1126 = vld [vmem:[%s3 + $0x62c] sm:$0xf]
      %v1127 = vld [vmem:[%s3 + $0x630] sm:$0xff]
      %v1128 = vld [vmem:[%s3 + $0x638] sm:$0xf]
      %v1129 = vld [vmem:[%s3 + $0x63c] sm:$0xff]
      %v1130 = vld [vmem:[%s3 + $0x644] sm:$0xf]
      %v1131 = vld [vmem:[%s3 + $0x648] sm:$0xff]
      %v1132 = vld [vmem:[%s3 + $0x650] sm:$0xf]
      %v1133 = vld [vmem:[%s3 + $0x654] sm:$0x77]
      %v1134 = vld [vmem:[%s3 + $0x65c] sm:$0x7]
      %v1407 = vunpack.c.l.b16 %v863
      %v1408 = vunpack.c.h.b16 %v863
      %v1409 = vunpack.c.l.b16 %v864
      %v1410 = vunpack.c.l.b16 %v865
      %v1411 = vunpack.c.h.b16 %v865
      %v1412 = vunpack.c.l.b16 %v866
      %v1413 = vunpack.c.l.b16 %v867
      %v1414 = vunpack.c.h.b16 %v867
      %v1415 = vunpack.c.l.b16 %v868
      %v1416 = vunpack.c.l.b16 %v869
      %v1417 = vunpack.c.h.b16 %v869
      %v1418 = vunpack.c.l.b16 %v870
      %v1419 = vunpack.c.l.b16 %v871
      %v1420 = vunpack.c.h.b16 %v871
      %v1421 = vunpack.c.l.b16 %v872
      %v1422 = vunpack.c.l.b16 %v873
      %v1423 = vunpack.c.h.b16 %v873
      %v1424 = vunpack.c.l.b16 %v874
      %v1425 = vunpack.c.l.b16 %v875
      %v1426 = vunpack.c.h.b16 %v875
      %v1427 = vunpack.c.l.b16 %v876
      %v1428 = vunpack.c.l.b16 %v877
      %v1429 = vunpack.c.h.b16 %v877
      %v1430 = vunpack.c.l.b16 %v878
      %v1431 = vunpack.c.l.b16 %v879
      %v1432 = vunpack.c.h.b16 %v879
      %v1433 = vunpack.c.l.b16 %v880
      %v1434 = vunpack.c.l.b16 %v881
      %v1435 = vunpack.c.h.b16 %v881
      %v1436 = vunpack.c.l.b16 %v882
      %v1437 = vunpack.c.l.b16 %v883
      %v1438 = vunpack.c.h.b16 %v883
      %v1439 = vunpack.c.l.b16 %v884
      %v1440 = vunpack.c.l.b16 %v885
      %v1441 = vunpack.c.h.b16 %v885
      %v1442 = vunpack.c.l.b16 %v886
      %v1443 = vunpack.c.l.b16 %v887
      %v1444 = vunpack.c.h.b16 %v887
      %v1445 = vunpack.c.l.b16 %v888
      %v1446 = vunpack.c.l.b16 %v889
      %v1447 = vunpack.c.h.b16 %v889
      %v1448 = vunpack.c.l.b16 %v890
      %v1449 = vunpack.c.l.b16 %v891
      %v1450 = vunpack.c.h.b16 %v891
      %v1451 = vunpack.c.l.b16 %v892
      %v1452 = vunpack.c.l.b16 %v893
      %v1453 = vunpack.c.h.b16 %v893
      %v1454 = vunpack.c.l.b16 %v894
      %v1455 = vunpack.c.l.b16 %v895
      %v1456 = vunpack.c.h.b16 %v895
      %v1457 = vunpack.c.l.b16 %v896
      %v1458 = vunpack.c.l.b16 %v897
      %v1459 = vunpack.c.h.b16 %v897
      %v1460 = vunpack.c.l.b16 %v898
      %v1461 = vunpack.c.l.b16 %v899
      %v1462 = vunpack.c.h.b16 %v899
      %v1463 = vunpack.c.l.b16 %v900
      %v1464 = vunpack.c.l.b16 %v901
      %v1465 = vunpack.c.h.b16 %v901
      %v1466 = vunpack.c.l.b16 %v902
      %v1467 = vunpack.c.l.b16 %v903
      %v1468 = vunpack.c.h.b16 %v903
      %v1469 = vunpack.c.l.b16 %v904
      %v1470 = vunpack.c.l.b16 %v905
      %v1471 = vunpack.c.h.b16 %v905
      %v1472 = vunpack.c.l.b16 %v906
      %v1473 = vunpack.c.l.b16 %v907
      %v1474 = vunpack.c.h.b16 %v907
      %v1475 = vunpack.c.l.b16 %v908
      %v1476 = vunpack.c.l.b16 %v909
      %v1477 = vunpack.c.h.b16 %v909
      %v1478 = vunpack.c.l.b16 %v910
      %v1479 = vunpack.c.l.b16 %v911
      %v1480 = vunpack.c.h.b16 %v911
      %v1481 = vunpack.c.l.b16 %v912
      %v1482 = vunpack.c.l.b16 %v913
      %v1483 = vunpack.c.h.b16 %v913
      %v1484 = vunpack.c.l.b16 %v914
      %v1485 = vunpack.c.l.b16 %v915
      %v1486 = vunpack.c.h.b16 %v915
      %v1487 = vunpack.c.l.b16 %v916
      %v1488 = vunpack.c.l.b16 %v917
      %v1489 = vunpack.c.h.b16 %v917
      %v1490 = vunpack.c.l.b16 %v918
      %v1491 = vunpack.c.l.b16 %v919
      %v1492 = vunpack.c.h.b16 %v919
      %v1493 = vunpack.c.l.b16 %v920
      %v1494 = vunpack.c.l.b16 %v921
      %v1495 = vunpack.c.h.b16 %v921
      %v1496 = vunpack.c.l.b16 %v922
      %v1497 = vunpack.c.l.b16 %v923
      %v1498 = vunpack.c.h.b16 %v923
      %v1499 = vunpack.c.l.b16 %v924
      %v1500 = vunpack.c.l.b16 %v925
      %v1501 = vunpack.c.h.b16 %v925
      %v1502 = vunpack.c.l.b16 %v926
      %v1503 = vunpack.c.l.b16 %v927
      %v1504 = vunpack.c.h.b16 %v927
      %v1505 = vunpack.c.l.b16 %v928
      %v1506 = vunpack.c.l.b16 %v929
      %v1507 = vunpack.c.h.b16 %v929
      %v1508 = vunpack.c.l.b16 %v930
      %v1509 = vunpack.c.l.b16 %v931
      %v1510 = vunpack.c.h.b16 %v931
      %v1511 = vunpack.c.l.b16 %v932
      %v1512 = vunpack.c.l.b16 %v933
      %v1513 = vunpack.c.h.b16 %v933
      %v1514 = vunpack.c.l.b16 %v934
      %v1515 = vunpack.c.l.b16 %v935
      %v1516 = vunpack.c.h.b16 %v935
      %v1517 = vunpack.c.l.b16 %v936
      %v1518 = vunpack.c.l.b16 %v937
      %v1519 = vunpack.c.h.b16 %v937
      %v1520 = vunpack.c.l.b16 %v938
      %v1521 = vunpack.c.l.b16 %v939
      %v1522 = vunpack.c.h.b16 %v939
      %v1523 = vunpack.c.l.b16 %v940
      %v1524 = vunpack.c.l.b16 %v941
      %v1525 = vunpack.c.h.b16 %v941
      %v1526 = vunpack.c.l.b16 %v942
      %v1527 = vunpack.c.l.b16 %v943
      %v1528 = vunpack.c.h.b16 %v943
      %v1529 = vunpack.c.l.b16 %v944
      %v1530 = vunpack.c.l.b16 %v945
      %v1531 = vunpack.c.h.b16 %v945
      %v1532 = vunpack.c.l.b16 %v946
      %v1533 = vunpack.c.l.b16 %v947
      %v1534 = vunpack.c.h.b16 %v947
      %v1535 = vunpack.c.l.b16 %v948
      %v1536 = vunpack.c.l.b16 %v949
      %v1537 = vunpack.c.h.b16 %v949
      %v1538 = vunpack.c.l.b16 %v950
      %v1539 = vunpack.c.l.b16 %v951
      %v1540 = vunpack.c.h.b16 %v951
      %v1541 = vunpack.c.l.b16 %v952
      %v1542 = vunpack.c.l.b16 %v953
      %v1543 = vunpack.c.h.b16 %v953
      %v1544 = vunpack.c.l.b16 %v954
      %v1545 = vunpack.c.l.b16 %v955
      %v1546 = vunpack.c.h.b16 %v955
      %v1547 = vunpack.c.l.b16 %v956
      %v1548 = vunpack.c.l.b16 %v957
      %v1549 = vunpack.c.h.b16 %v957
      %v1550 = vunpack.c.l.b16 %v958
      %v1551 = vunpack.c.l.b16 %v959
      %v1552 = vunpack.c.h.b16 %v959
      %v1553 = vunpack.c.l.b16 %v960
      %v1554 = vunpack.c.l.b16 %v961
      %v1555 = vunpack.c.h.b16 %v961
      %v1556 = vunpack.c.l.b16 %v962
      %v1557 = vunpack.c.l.b16 %v963
      %v1558 = vunpack.c.h.b16 %v963
      %v1559 = vunpack.c.l.b16 %v964
      %v1560 = vunpack.c.l.b16 %v965
      %v1561 = vunpack.c.h.b16 %v965
      %v1562 = vunpack.c.l.b16 %v966
      %v1563 = vunpack.c.l.b16 %v967
      %v1564 = vunpack.c.h.b16 %v967
      %v1565 = vunpack.c.l.b16 %v968
      %v1566 = vunpack.c.l.b16 %v969
      %v1567 = vunpack.c.h.b16 %v969
      %v1568 = vunpack.c.l.b16 %v970
      %v1569 = vunpack.c.l.b16 %v971
      %v1570 = vunpack.c.h.b16 %v971
      %v1571 = vunpack.c.l.b16 %v972
      %v1572 = vunpack.c.l.b16 %v973
      %v1573 = vunpack.c.h.b16 %v973
      %v1574 = vunpack.c.l.b16 %v974
      %v1575 = vunpack.c.l.b16 %v975
      %v1576 = vunpack.c.h.b16 %v975
      %v1577 = vunpack.c.l.b16 %v976
      %v1578 = vunpack.c.l.b16 %v977
      %v1579 = vunpack.c.h.b16 %v977
      %v1580 = vunpack.c.l.b16 %v978
      %v1581 = vunpack.c.l.b16 %v979
      %v1582 = vunpack.c.h.b16 %v979
      %v1583 = vunpack.c.l.b16 %v980
      %v1584 = vunpack.c.l.b16 %v981
      %v1585 = vunpack.c.h.b16 %v981
      %v1586 = vunpack.c.l.b16 %v982
      %v1587 = vunpack.c.l.b16 %v983
      %v1588 = vunpack.c.h.b16 %v983
      %v1589 = vunpack.c.l.b16 %v984
      %v1590 = vunpack.c.l.b16 %v985
      %v1591 = vunpack.c.h.b16 %v985
      %v1592 = vunpack.c.l.b16 %v986
      %v1593 = vunpack.c.l.b16 %v987
      %v1594 = vunpack.c.h.b16 %v987
      %v1595 = vunpack.c.l.b16 %v988
      %v1596 = vunpack.c.l.b16 %v989
      %v1597 = vunpack.c.h.b16 %v989
      %v1598 = vunpack.c.l.b16 %v990
      %v1599 = vunpack.c.l.b16 %v991
      %v1600 = vunpack.c.h.b16 %v991
      %v1601 = vunpack.c.l.b16 %v992
      %v1602 = vunpack.c.l.b16 %v993
      %v1603 = vunpack.c.h.b16 %v993
      %v1604 = vunpack.c.l.b16 %v994
      %v1605 = vunpack.c.l.b16 %v995
      %v1606 = vunpack.c.h.b16 %v995
      %v1607 = vunpack.c.l.b16 %v996
      %v1608 = vunpack.c.l.b16 %v997
      %v1609 = vunpack.c.h.b16 %v997
      %v1610 = vunpack.c.l.b16 %v998
      %v1611 = vunpack.c.l.b16 %v999
      %v1612 = vunpack.c.h.b16 %v999
      %v1613 = vunpack.c.l.b16 %v1000
      %v1614 = vunpack.c.l.b16 %v1001
      %v1615 = vunpack.c.h.b16 %v1001
      %v1616 = vunpack.c.l.b16 %v1002
      %v1617 = vunpack.c.l.b16 %v1003
      %v1618 = vunpack.c.h.b16 %v1003
      %v1619 = vunpack.c.l.b16 %v1004
      %v1620 = vunpack.c.l.b16 %v1005
      %v1621 = vunpack.c.h.b16 %v1005
      %v1622 = vunpack.c.l.b16 %v1006
      %v1623 = vunpack.c.l.b16 %v1007
      %v1624 = vunpack.c.h.b16 %v1007
      %v1625 = vunpack.c.l.b16 %v1008
      %v1626 = vunpack.c.l.b16 %v1009
      %v1627 = vunpack.c.h.b16 %v1009
      %v1628 = vunpack.c.l.b16 %v1010
      %v1629 = vunpack.c.l.b16 %v1011
      %v1630 = vunpack.c.h.b16 %v1011
      %v1631 = vunpack.c.l.b16 %v1012
      %v1632 = vunpack.c.l.b16 %v1013
      %v1633 = vunpack.c.h.b16 %v1013
      %v1634 = vunpack.c.l.b16 %v1014
      %v1635 = vunpack.c.l.b16 %v1015
      %v1636 = vunpack.c.h.b16 %v1015
      %v1637 = vunpack.c.l.b16 %v1016
      %v1638 = vunpack.c.l.b16 %v1017
      %v1639 = vunpack.c.h.b16 %v1017
      %v1640 = vunpack.c.l.b16 %v1018
      %v1641 = vunpack.c.l.b16 %v1019
      %v1642 = vunpack.c.h.b16 %v1019
      %v1643 = vunpack.c.l.b16 %v1020
      %v1644 = vunpack.c.l.b16 %v1021
      %v1645 = vunpack.c.h.b16 %v1021
      %v1646 = vunpack.c.l.b16 %v1022
      %v1647 = vunpack.c.l.b16 %v1023
      %v1648 = vunpack.c.h.b16 %v1023
      %v1649 = vunpack.c.l.b16 %v1024
      %v1650 = vunpack.c.l.b16 %v1025
      %v1651 = vunpack.c.h.b16 %v1025
      %v1652 = vunpack.c.l.b16 %v1026
      %v1653 = vunpack.c.l.b16 %v1027
      %v1654 = vunpack.c.h.b16 %v1027
      %v1655 = vunpack.c.l.b16 %v1028
      %v1656 = vunpack.c.l.b16 %v1029
      %v1657 = vunpack.c.h.b16 %v1029
      %v1658 = vunpack.c.l.b16 %v1030
      %v1659 = vunpack.c.l.b16 %v1031
      %v1660 = vunpack.c.h.b16 %v1031
      %v1661 = vunpack.c.l.b16 %v1032
      %v1662 = vunpack.c.l.b16 %v1033
      %v1663 = vunpack.c.h.b16 %v1033
      %v1664 = vunpack.c.l.b16 %v1034
      %v1665 = vunpack.c.l.b16 %v1035
      %v1666 = vunpack.c.h.b16 %v1035
      %v1667 = vunpack.c.l.b16 %v1036
      %v1668 = vunpack.c.l.b16 %v1037
      %v1669 = vunpack.c.h.b16 %v1037
      %v1670 = vunpack.c.l.b16 %v1038
      %v1671 = vunpack.c.l.b16 %v1039
      %v1672 = vunpack.c.h.b16 %v1039
      %v1673 = vunpack.c.l.b16 %v1040
      %v1674 = vunpack.c.l.b16 %v1041
      %v1675 = vunpack.c.h.b16 %v1041
      %v1676 = vunpack.c.l.b16 %v1042
      %v1677 = vunpack.c.l.b16 %v1043
      %v1678 = vunpack.c.h.b16 %v1043
      %v1679 = vunpack.c.l.b16 %v1044
      %v1680 = vunpack.c.l.b16 %v1045
      %v1681 = vunpack.c.h.b16 %v1045
      %v1682 = vunpack.c.l.b16 %v1046
      %v1683 = vunpack.c.l.b16 %v1047
      %v1684 = vunpack.c.h.b16 %v1047
      %v1685 = vunpack.c.l.b16 %v1048
      %v1686 = vunpack.c.l.b16 %v1049
      %v1687 = vunpack.c.h.b16 %v1049
      %v1688 = vunpack.c.l.b16 %v1050
      %v1689 = vunpack.c.l.b16 %v1051
      %v1690 = vunpack.c.h.b16 %v1051
      %v1691 = vunpack.c.l.b16 %v1052
      %v1692 = vunpack.c.l.b16 %v1053
      %v1693 = vunpack.c.h.b16 %v1053
      %v1694 = vunpack.c.l.b16 %v1054
      %v1695 = vunpack.c.l.b16 %v1055
      %v1696 = vunpack.c.h.b16 %v1055
      %v1697 = vunpack.c.l.b16 %v1056
      %v1698 = vunpack.c.l.b16 %v1057
      %v1699 = vunpack.c.h.b16 %v1057
      %v1700 = vunpack.c.l.b16 %v1058
      %v1701 = vunpack.c.l.b16 %v1059
      %v1702 = vunpack.c.h.b16 %v1059
      %v1703 = vunpack.c.l.b16 %v1060
      %v1704 = vunpack.c.l.b16 %v1061
      %v1705 = vunpack.c.h.b16 %v1061
      %v1706 = vunpack.c.l.b16 %v1062
      %v1707 = vunpack.c.l.b16 %v1063
      %v1708 = vunpack.c.h.b16 %v1063
      %v1709 = vunpack.c.l.b16 %v1064
      %v1710 = vunpack.c.l.b16 %v1065
      %v1711 = vunpack.c.h.b16 %v1065
      %v1712 = vunpack.c.l.b16 %v1066
      %v1713 = vunpack.c.l.b16 %v1067
      %v1714 = vunpack.c.h.b16 %v1067
      %v1715 = vunpack.c.l.b16 %v1068
      %v1716 = vunpack.c.l.b16 %v1069
      %v1717 = vunpack.c.h.b16 %v1069
      %v1718 = vunpack.c.l.b16 %v1070
      %v1719 = vunpack.c.l.b16 %v1071
      %v1720 = vunpack.c.h.b16 %v1071
      %v1721 = vunpack.c.l.b16 %v1072
      %v1722 = vunpack.c.l.b16 %v1073
      %v1723 = vunpack.c.h.b16 %v1073
      %v1724 = vunpack.c.l.b16 %v1074
      %v1725 = vunpack.c.l.b16 %v1075
      %v1726 = vunpack.c.h.b16 %v1075
      %v1727 = vunpack.c.l.b16 %v1076
      %v1728 = vunpack.c.l.b16 %v1077
      %v1729 = vunpack.c.h.b16 %v1077
      %v1730 = vunpack.c.l.b16 %v1078
      %v1731 = vunpack.c.l.b16 %v1079
      %v1732 = vunpack.c.h.b16 %v1079
      %v1733 = vunpack.c.l.b16 %v1080
      %v1734 = vunpack.c.l.b16 %v1081
      %v1735 = vunpack.c.h.b16 %v1081
      %v1736 = vunpack.c.l.b16 %v1082
      %v1737 = vunpack.c.l.b16 %v1083
      %v1738 = vunpack.c.h.b16 %v1083
      %v1739 = vunpack.c.l.b16 %v1084
      %v1740 = vunpack.c.l.b16 %v1085
      %v1741 = vunpack.c.h.b16 %v1085
      %v1742 = vunpack.c.l.b16 %v1086
      %v1743 = vunpack.c.l.b16 %v1087
      %v1744 = vunpack.c.h.b16 %v1087
      %v1745 = vunpack.c.l.b16 %v1088
      %v1746 = vunpack.c.l.b16 %v1089
      %v1747 = vunpack.c.h.b16 %v1089
      %v1748 = vunpack.c.l.b16 %v1090
      %v1749 = vunpack.c.l.b16 %v1091
      %v1750 = vunpack.c.h.b16 %v1091
      %v1751 = vunpack.c.l.b16 %v1092
      %v1752 = vunpack.c.l.b16 %v1093
      %v1753 = vunpack.c.h.b16 %v1093
      %v1754 = vunpack.c.l.b16 %v1094
      %v1755 = vunpack.c.l.b16 %v1095
      %v1756 = vunpack.c.h.b16 %v1095
      %v1757 = vunpack.c.l.b16 %v1096
      %v1758 = vunpack.c.l.b16 %v1097
      %v1759 = vunpack.c.h.b16 %v1097
      %v1760 = vunpack.c.l.b16 %v1098
      %v1761 = vunpack.c.l.b16 %v1099
      %v1762 = vunpack.c.h.b16 %v1099
      %v1763 = vunpack.c.l.b16 %v1100
      %v1764 = vunpack.c.l.b16 %v1101
      %v1765 = vunpack.c.h.b16 %v1101
      %v1766 = vunpack.c.l.b16 %v1102
      %v1767 = vunpack.c.l.b16 %v1103
      %v1768 = vunpack.c.h.b16 %v1103
      %v1769 = vunpack.c.l.b16 %v1104
      %v1770 = vunpack.c.l.b16 %v1105
      %v1771 = vunpack.c.h.b16 %v1105
      %v1772 = vunpack.c.l.b16 %v1106
      %v1773 = vunpack.c.l.b16 %v1107
      %v1774 = vunpack.c.h.b16 %v1107
      %v1775 = vunpack.c.l.b16 %v1108
      %v1776 = vunpack.c.l.b16 %v1109
      %v1777 = vunpack.c.h.b16 %v1109
      %v1778 = vunpack.c.l.b16 %v1110
      %v1779 = vunpack.c.l.b16 %v1111
      %v1780 = vunpack.c.h.b16 %v1111
      %v1781 = vunpack.c.l.b16 %v1112
      %v1782 = vunpack.c.l.b16 %v1113
      %v1783 = vunpack.c.h.b16 %v1113
      %v1784 = vunpack.c.l.b16 %v1114
      %v1785 = vunpack.c.l.b16 %v1115
      %v1786 = vunpack.c.h.b16 %v1115
      %v1787 = vunpack.c.l.b16 %v1116
      %v1788 = vunpack.c.l.b16 %v1117
      %v1789 = vunpack.c.h.b16 %v1117
      %v1790 = vunpack.c.l.b16 %v1118
      %v1791 = vunpack.c.l.b16 %v1119
      %v1792 = vunpack.c.h.b16 %v1119
      %v1793 = vunpack.c.l.b16 %v1120
      %v1794 = vunpack.c.l.b16 %v1121
      %v1795 = vunpack.c.h.b16 %v1121
      %v1796 = vunpack.c.l.b16 %v1122
      %v1797 = vunpack.c.l.b16 %v1123
      %v1798 = vunpack.c.h.b16 %v1123
      %v1799 = vunpack.c.l.b16 %v1124
      %v1800 = vunpack.c.l.b16 %v1125
      %v1801 = vunpack.c.h.b16 %v1125
      %v1802 = vunpack.c.l.b16 %v1126
      %v1803 = vunpack.c.l.b16 %v1127
      %v1804 = vunpack.c.h.b16 %v1127
      %v1805 = vunpack.c.l.b16 %v1128
      %v1806 = vunpack.c.l.b16 %v1129
      %v1807 = vunpack.c.h.b16 %v1129
      %v1808 = vunpack.c.l.b16 %v1130
      %v1809 = vunpack.c.l.b16 %v1131
      %v1810 = vunpack.c.h.b16 %v1131
      %v1811 = vunpack.c.l.b16 %v1132
      %v1812 = vunpack.c.l.b16 %v1133
      %v1813 = vunpack.c.h.b16 %v1133
      %v1814 = vunpack.c.l.b16 %v1134
      %v1815 = vpack.c.b16 %v1410, %v1407
      %v1816 = vpack.c.b16 %v1411, %v1408
      %v1817 = vpack.c.b16 %v1412, %v1409
      %v1818 = vpack.c.b16 %v1416, %v1413
      %v1819 = vpack.c.b16 %v1417, %v1414
      %v1820 = vpack.c.b16 %v1418, %v1415
      %v1821 = vpack.c.b16 %v1422, %v1419
      %v1822 = vpack.c.b16 %v1423, %v1420
      %v1823 = vpack.c.b16 %v1424, %v1421
      %v1824 = vpack.c.b16 %v1428, %v1425
      %v1825 = vpack.c.b16 %v1429, %v1426
      %v1826 = vpack.c.b16 %v1430, %v1427
      %v1827 = vpack.c.b16 %v1434, %v1431
      %v1828 = vpack.c.b16 %v1435, %v1432
      %v1829 = vpack.c.b16 %v1436, %v1433
      %v1830 = vpack.c.b16 %v1440, %v1437
      %v1831 = vpack.c.b16 %v1441, %v1438
      %v1832 = vpack.c.b16 %v1442, %v1439
      %v1833 = vpack.c.b16 %v1446, %v1443
      %v1834 = vpack.c.b16 %v1447, %v1444
      %v1835 = vpack.c.b16 %v1448, %v1445
      %v1836 = vpack.c.b16 %v1452, %v1449
      %v1837 = vpack.c.b16 %v1453, %v1450
      %v1838 = vpack.c.b16 %v1454, %v1451
      %v1839 = vpack.c.b16 %v1458, %v1455
      %v1840 = vpack.c.b16 %v1459, %v1456
      %v1841 = vpack.c.b16 %v1460, %v1457
      %v1842 = vpack.c.b16 %v1464, %v1461
      %v1843 = vpack.c.b16 %v1465, %v1462
      %v1844 = vpack.c.b16 %v1466, %v1463
      %v1845 = vpack.c.b16 %v1470, %v1467
      %v1846 = vpack.c.b16 %v1471, %v1468
      %v1847 = vpack.c.b16 %v1472, %v1469
      %v1848 = vpack.c.b16 %v1476, %v1473
      %v1849 = vpack.c.b16 %v1477, %v1474
      %v1850 = vpack.c.b16 %v1478, %v1475
      %v1851 = vpack.c.b16 %v1482, %v1479
      %v1852 = vpack.c.b16 %v1483, %v1480
      %v1853 = vpack.c.b16 %v1484, %v1481
      %v1854 = vpack.c.b16 %v1488, %v1485
      %v1855 = vpack.c.b16 %v1489, %v1486
      %v1856 = vpack.c.b16 %v1490, %v1487
      %v1857 = vpack.c.b16 %v1494, %v1491
      %v1858 = vpack.c.b16 %v1495, %v1492
      %v1859 = vpack.c.b16 %v1496, %v1493
      %v1860 = vpack.c.b16 %v1500, %v1497
      %v1861 = vpack.c.b16 %v1501, %v1498
      %v1862 = vpack.c.b16 %v1502, %v1499
      %v1863 = vpack.c.b16 %v1506, %v1503
      %v1864 = vpack.c.b16 %v1507, %v1504
      %v1865 = vpack.c.b16 %v1508, %v1505
      %v1866 = vpack.c.b16 %v1512, %v1509
      %v1867 = vpack.c.b16 %v1513, %v1510
      %v1868 = vpack.c.b16 %v1514, %v1511
      %v1869 = vpack.c.b16 %v1518, %v1515
      %v1870 = vpack.c.b16 %v1519, %v1516
      %v1871 = vpack.c.b16 %v1520, %v1517
      %v1872 = vpack.c.b16 %v1524, %v1521
      %v1873 = vpack.c.b16 %v1525, %v1522
      %v1874 = vpack.c.b16 %v1526, %v1523
      %v1875 = vpack.c.b16 %v1530, %v1527
      %v1876 = vpack.c.b16 %v1531, %v1528
      %v1877 = vpack.c.b16 %v1532, %v1529
      %v1878 = vpack.c.b16 %v1536, %v1533
      %v1879 = vpack.c.b16 %v1537, %v1534
      %v1880 = vpack.c.b16 %v1538, %v1535
      %v1881 = vpack.c.b16 %v1542, %v1539
      %v1882 = vpack.c.b16 %v1543, %v1540
      %v1883 = vpack.c.b16 %v1544, %v1541
      %v1884 = vpack.c.b16 %v1548, %v1545
      %v1885 = vpack.c.b16 %v1549, %v1546
      %v1886 = vpack.c.b16 %v1550, %v1547
      %v1887 = vpack.c.b16 %v1554, %v1551
      %v1888 = vpack.c.b16 %v1555, %v1552
      %v1889 = vpack.c.b16 %v1556, %v1553
      %v1890 = vpack.c.b16 %v1560, %v1557
      %v1891 = vpack.c.b16 %v1561, %v1558
      %v1892 = vpack.c.b16 %v1562, %v1559
      %v1893 = vpack.c.b16 %v1566, %v1563
      %v1894 = vpack.c.b16 %v1567, %v1564
      %v1895 = vpack.c.b16 %v1568, %v1565
      %v1896 = vpack.c.b16 %v1572, %v1569
      %v1897 = vpack.c.b16 %v1573, %v1570
      %v1898 = vpack.c.b16 %v1574, %v1571
      %v1899 = vpack.c.b16 %v1578, %v1575
      %v1900 = vpack.c.b16 %v1579, %v1576
      %v1901 = vpack.c.b16 %v1580, %v1577
      %v1902 = vpack.c.b16 %v1584, %v1581
      %v1903 = vpack.c.b16 %v1585, %v1582
      %v1904 = vpack.c.b16 %v1586, %v1583
      %v1905 = vpack.c.b16 %v1590, %v1587
      %v1906 = vpack.c.b16 %v1591, %v1588
      %v1907 = vpack.c.b16 %v1592, %v1589
      %v1908 = vpack.c.b16 %v1596, %v1593
      %v1909 = vpack.c.b16 %v1597, %v1594
      %v1910 = vpack.c.b16 %v1598, %v1595
      %v1911 = vpack.c.b16 %v1602, %v1599
      %v1912 = vpack.c.b16 %v1603, %v1600
      %v1913 = vpack.c.b16 %v1604, %v1601
      %v1914 = vpack.c.b16 %v1608, %v1605
      %v1915 = vpack.c.b16 %v1609, %v1606
      %v1916 = vpack.c.b16 %v1610, %v1607
      %v1917 = vpack.c.b16 %v1614, %v1611
      %v1918 = vpack.c.b16 %v1615, %v1612
      %v1919 = vpack.c.b16 %v1616, %v1613
      %v1920 = vpack.c.b16 %v1620, %v1617
      %v1921 = vpack.c.b16 %v1621, %v1618
      %v1922 = vpack.c.b16 %v1622, %v1619
      %v1923 = vpack.c.b16 %v1626, %v1623
      %v1924 = vpack.c.b16 %v1627, %v1624
      %v1925 = vpack.c.b16 %v1628, %v1625
      %v1926 = vpack.c.b16 %v1632, %v1629
      %v1927 = vpack.c.b16 %v1633, %v1630
      %v1928 = vpack.c.b16 %v1634, %v1631
      %v1929 = vpack.c.b16 %v1638, %v1635
      %v1930 = vpack.c.b16 %v1639, %v1636
      %v1931 = vpack.c.b16 %v1640, %v1637
      %v1932 = vpack.c.b16 %v1644, %v1641
      %v1933 = vpack.c.b16 %v1645, %v1642
      %v1934 = vpack.c.b16 %v1646, %v1643
      %v1935 = vpack.c.b16 %v1650, %v1647
      %v1936 = vpack.c.b16 %v1651, %v1648
      %v1937 = vpack.c.b16 %v1652, %v1649
      %v1938 = vpack.c.b16 %v1656, %v1653
      %v1939 = vpack.c.b16 %v1657, %v1654
      %v1940 = vpack.c.b16 %v1658, %v1655
      %v1941 = vpack.c.b16 %v1662, %v1659
      %v1942 = vpack.c.b16 %v1663, %v1660
      %v1943 = vpack.c.b16 %v1664, %v1661
      %v1944 = vpack.c.b16 %v1668, %v1665
      %v1945 = vpack.c.b16 %v1669, %v1666
      %v1946 = vpack.c.b16 %v1670, %v1667
      %v1947 = vpack.c.b16 %v1674, %v1671
      %v1948 = vpack.c.b16 %v1675, %v1672
      %v1949 = vpack.c.b16 %v1676, %v1673
      %v1950 = vpack.c.b16 %v1680, %v1677
      %v1951 = vpack.c.b16 %v1681, %v1678
      %v1952 = vpack.c.b16 %v1682, %v1679
      %v1953 = vpack.c.b16 %v1686, %v1683
      %v1954 = vpack.c.b16 %v1687, %v1684
      %v1955 = vpack.c.b16 %v1688, %v1685
      %v1956 = vpack.c.b16 %v1692, %v1689
      %v1957 = vpack.c.b16 %v1693, %v1690
      %v1958 = vpack.c.b16 %v1694, %v1691
      %v1959 = vpack.c.b16 %v1698, %v1695
      %v1960 = vpack.c.b16 %v1699, %v1696
      %v1961 = vpack.c.b16 %v1700, %v1697
      %v1962 = vpack.c.b16 %v1704, %v1701
      %v1963 = vpack.c.b16 %v1705, %v1702
      %v1964 = vpack.c.b16 %v1706, %v1703
      %v1965 = vpack.c.b16 %v1710, %v1707
      %v1966 = vpack.c.b16 %v1711, %v1708
      %v1967 = vpack.c.b16 %v1712, %v1709
      %v1968 = vpack.c.b16 %v1716, %v1713
      %v1969 = vpack.c.b16 %v1717, %v1714
      %v1970 = vpack.c.b16 %v1718, %v1715
      %v1971 = vpack.c.b16 %v1722, %v1719
      %v1972 = vpack.c.b16 %v1723, %v1720
      %v1973 = vpack.c.b16 %v1724, %v1721
      %v1974 = vpack.c.b16 %v1728, %v1725
      %v1975 = vpack.c.b16 %v1729, %v1726
      %v1976 = vpack.c.b16 %v1730, %v1727
      %v1977 = vpack.c.b16 %v1734, %v1731
      %v1978 = vpack.c.b16 %v1735, %v1732
      %v1979 = vpack.c.b16 %v1736, %v1733
      %v1980 = vpack.c.b16 %v1740, %v1737
      %v1981 = vpack.c.b16 %v1741, %v1738
      %v1982 = vpack.c.b16 %v1742, %v1739
      %v1983 = vpack.c.b16 %v1746, %v1743
      %v1984 = vpack.c.b16 %v1747, %v1744
      %v1985 = vpack.c.b16 %v1748, %v1745
      %v1986 = vpack.c.b16 %v1752, %v1749
      %v1987 = vpack.c.b16 %v1753, %v1750
      %v1988 = vpack.c.b16 %v1754, %v1751
      %v1989 = vpack.c.b16 %v1758, %v1755
      %v1990 = vpack.c.b16 %v1759, %v1756
      %v1991 = vpack.c.b16 %v1760, %v1757
      %v1992 = vpack.c.b16 %v1764, %v1761
      %v1993 = vpack.c.b16 %v1765, %v1762
      %v1994 = vpack.c.b16 %v1766, %v1763
      %v1995 = vpack.c.b16 %v1770, %v1767
      %v1996 = vpack.c.b16 %v1771, %v1768
      %v1997 = vpack.c.b16 %v1772, %v1769
      %v1998 = vpack.c.b16 %v1776, %v1773
      %v1999 = vpack.c.b16 %v1777, %v1774
      %v2000 = vpack.c.b16 %v1778, %v1775
      %v2001 = vpack.c.b16 %v1782, %v1779
      %v2002 = vpack.c.b16 %v1783, %v1780
      %v2003 = vpack.c.b16 %v1784, %v1781
      %v2004 = vpack.c.b16 %v1788, %v1785
      %v2005 = vpack.c.b16 %v1789, %v1786
      %v2006 = vpack.c.b16 %v1790, %v1787
      %v2007 = vpack.c.b16 %v1794, %v1791
      %v2008 = vpack.c.b16 %v1795, %v1792
      %v2009 = vpack.c.b16 %v1796, %v1793
      %v2010 = vpack.c.b16 %v1800, %v1797
      %v2011 = vpack.c.b16 %v1801, %v1798
      %v2012 = vpack.c.b16 %v1802, %v1799
      %v2013 = vpack.c.b16 %v1806, %v1803
      %v2014 = vpack.c.b16 %v1807, %v1804
      %v2015 = vpack.c.b16 %v1808, %v1805
      %v2016 = vpack.c.b16 %v1812, %v1809
      %v2017 = vpack.c.b16 %v1813, %v1810
      %v2018 = vpack.c.b16 %v1814, %v1811
      %vm2220 = vcmask 506880
      %v2222 = vsel %vm2220, %v862, 0
      %vm2224 = vcmask 1046528
      %v2226 = vsel %vm2224, %v2016, 0
      %v2229 = vsel %vm2224, %v2017, 0
      %v2232 = vsel %vm2224, %v2018, 0
      %2234 = vmatpush.bf16.msra.mxu0 %v1836
      %2235 = vmatpush.bf16.msra.mxu0 %v1833
      %2236 = vmatpush.bf16.msra.mxu0 %v1830
      %2237 = vmatpush.bf16.msra.mxu0 %v1827
      %2238 = vmatpush.bf16.msra.mxu0 %v1824
      %2239 = vmatpush.bf16.msra.mxu0 %v1821
      %2240 = vmatpush.bf16.msra.mxu0 %v1818
      %2241 = vmatpush.bf16.msra.mxu0 %v1815
      %2242 = vmatmul.bf16.gmra.mxu0 %v854
      %v2243 = vpop.f32.mrf.mxu0
      %v2244 = vadd.f32 0.0, %v2243
      %v2245 = vpop.f32.mrf.mxu0
      %v2246 = vadd.f32 0.0, %v2245
      %2247 = vdwg.mxu0
      %2248 = vmatpush.bf16.msra.mxu0 %v1860
      %2249 = vmatpush.bf16.msra.mxu0 %v1857
      %2250 = vmatpush.bf16.msra.mxu0 %v1854
      %2251 = vmatpush.bf16.msra.mxu0 %v1851
      %2252 = vmatpush.bf16.msra.mxu0 %v1848
      %2253 = vmatpush.bf16.msra.mxu0 %v1845
      %2254 = vmatpush.bf16.msra.mxu0 %v1842
      %2255 = vmatpush.bf16.msra.mxu0 %v1839
      %2256 = vmatmul.bf16.gmra.mxu0 %v855
      %v2257 = vpop.f32.mrf.mxu0
      %v2258 = vadd.f32 %v2244, %v2257
      %v2259 = vpop.f32.mrf.mxu0
      %v2260 = vadd.f32 %v2246, %v2259
      %2261 = vdwg.mxu0
      %2262 = vmatpush.bf16.msra.mxu0 %v1884
      %2263 = vmatpush.bf16.msra.mxu0 %v1881
      %2264 = vmatpush.bf16.msra.mxu0 %v1878
      %2265 = vmatpush.bf16.msra.mxu0 %v1875
      %2266 = vmatpush.bf16.msra.mxu0 %v1872
      %2267 = vmatpush.bf16.msra.mxu0 %v1869
      %2268 = vmatpush.bf16.msra.mxu0 %v1866
      %2269 = vmatpush.bf16.msra.mxu0 %v1863
      %2270 = vmatmul.bf16.gmra.mxu0 %v856
      %v2271 = vpop.f32.mrf.mxu0
      %v2272 = vadd.f32 %v2258, %v2271
      %v2273 = vpop.f32.mrf.mxu0
      %v2274 = vadd.f32 %v2260, %v2273
      %2275 = vdwg.mxu0
      %2276 = vmatpush.bf16.msra.mxu0 %v1908
      %2277 = vmatpush.bf16.msra.mxu0 %v1905
      %2278 = vmatpush.bf16.msra.mxu0 %v1902
      %2279 = vmatpush.bf16.msra.mxu0 %v1899
      %2280 = vmatpush.bf16.msra.mxu0 %v1896
      %2281 = vmatpush.bf16.msra.mxu0 %v1893
      %2282 = vmatpush.bf16.msra.mxu0 %v1890
      %2283 = vmatpush.bf16.msra.mxu0 %v1887
      %2284 = vmatmul.bf16.gmra.mxu0 %v857
      %v2285 = vpop.f32.mrf.mxu0
      %v2286 = vadd.f32 %v2272, %v2285
      %v2287 = vpop.f32.mrf.mxu0
      %v2288 = vadd.f32 %v2274, %v2287
      %2289 = vdwg.mxu0
      %2290 = vmatpush.bf16.msra.mxu0 %v1932
      %2291 = vmatpush.bf16.msra.mxu0 %v1929
      %2292 = vmatpush.bf16.msra.mxu0 %v1926
      %2293 = vmatpush.bf16.msra.mxu0 %v1923
      %2294 = vmatpush.bf16.msra.mxu0 %v1920
      %2295 = vmatpush.bf16.msra.mxu0 %v1917
      %2296 = vmatpush.bf16.msra.mxu0 %v1914
      %2297 = vmatpush.bf16.msra.mxu0 %v1911
      %2298 = vmatmul.bf16.gmra.mxu0 %v858
      %v2299 = vpop.f32.mrf.mxu0
      %v2300 = vadd.f32 %v2286, %v2299
      %v2301 = vpop.f32.mrf.mxu0
      %v2302 = vadd.f32 %v2288, %v2301
      %2303 = vdwg.mxu0
      %2304 = vmatpush.bf16.msra.mxu0 %v1956
      %2305 = vmatpush.bf16.msra.mxu0 %v1953
      %2306 = vmatpush.bf16.msra.mxu0 %v1950
      %2307 = vmatpush.bf16.msra.mxu0 %v1947
      %2308 = vmatpush.bf16.msra.mxu0 %v1944
      %2309 = vmatpush.bf16.msra.mxu0 %v1941
      %2310 = vmatpush.bf16.msra.mxu0 %v1938
      %2311 = vmatpush.bf16.msra.mxu0 %v1935
      %2312 = vmatmul.bf16.gmra.mxu0 %v859
      %v2313 = vpop.f32.mrf.mxu0
      %v2314 = vadd.f32 %v2300, %v2313
      %v2315 = vpop.f32.mrf.mxu0
      %v2316 = vadd.f32 %v2302, %v2315
      %2317 = vdwg.mxu0
      %2318 = vmatpush.bf16.msra.mxu0 %v1980
      %2319 = vmatpush.bf16.msra.mxu0 %v1977
      %2320 = vmatpush.bf16.msra.mxu0 %v1974
      %2321 = vmatpush.bf16.msra.mxu0 %v1971
      %2322 = vmatpush.bf16.msra.mxu0 %v1968
      %2323 = vmatpush.bf16.msra.mxu0 %v1965
      %2324 = vmatpush.bf16.msra.mxu0 %v1962
      %2325 = vmatpush.bf16.msra.mxu0 %v1959
      %2326 = vmatmul.bf16.gmra.mxu0 %v860
      %v2327 = vpop.f32.mrf.mxu0
      %v2328 = vadd.f32 %v2314, %v2327
      %v2329 = vpop.f32.mrf.mxu0
      %v2330 = vadd.f32 %v2316, %v2329
      %2331 = vdwg.mxu0
      %2332 = vmatpush.bf16.msra.mxu0 %v2004
      %2333 = vmatpush.bf16.msra.mxu0 %v2001
      %2334 = vmatpush.bf16.msra.mxu0 %v1998
      %2335 = vmatpush.bf16.msra.mxu0 %v1995
      %2336 = vmatpush.bf16.msra.mxu0 %v1992
      %2337 = vmatpush.bf16.msra.mxu0 %v1989
      %2338 = vmatpush.bf16.msra.mxu0 %v1986
      %2339 = vmatpush.bf16.msra.mxu0 %v1983
      %2340 = vmatmul.bf16.gmra.mxu0 %v861
      %v2341 = vpop.f32.mrf.mxu0
      %v2342 = vadd.f32 %v2328, %v2341
      %v2343 = vpop.f32.mrf.mxu0
      %v2344 = vadd.f32 %v2330, %v2343
      %2345 = vdwg.mxu0
      %2346 = vmatpush.bf16.msra.mxu0 0
      %2347 = vmatpush.bf16.msra.mxu0 0
      %2348 = vmatpush.bf16.msra.mxu0 0
      %2349 = vmatpush.bf16.msra.mxu0 0
      %2350 = vmatpush.bf16.msra.mxu0 %v2226
      %2351 = vmatpush.bf16.msra.mxu0 %v2013
      %2352 = vmatpush.bf16.msra.mxu0 %v2010
      %2353 = vmatpush.bf16.msra.mxu0 %v2007
      %2354 = vmatmul.bf16.gmra.mxu0 %v2222
      %v2355 = vpop.f32.mrf.mxu0
      %v2356 = vadd.f32 %v2342, %v2355
      %v2357 = vpop.f32.mrf.mxu0
      %v2358 = vadd.f32 %v2344, %v2357
      %2359 = vdwg.mxu0
      %2360 = vmatpush.bf16.msra.mxu0 %v1837
      %2361 = vmatpush.bf16.msra.mxu0 %v1834
      %2362 = vmatpush.bf16.msra.mxu0 %v1831
      %2363 = vmatpush.bf16.msra.mxu0 %v1828
      %2364 = vmatpush.bf16.msra.mxu0 %v1825
      %2365 = vmatpush.bf16.msra.mxu0 %v1822
      %2366 = vmatpush.bf16.msra.mxu0 %v1819
      %2367 = vmatpush.bf16.msra.mxu0 %v1816
      %2368 = vmatmul.bf16.gmra.mxu0 %v854
      %v2369 = vpop.f32.mrf.mxu0
      %v2370 = vadd.f32 0.0, %v2369
      %v2371 = vpop.f32.mrf.mxu0
      %v2372 = vadd.f32 0.0, %v2371
      %2373 = vdwg.mxu0
      %2374 = vmatpush.bf16.msra.mxu0 %v1861
      %2375 = vmatpush.bf16.msra.mxu0 %v1858
      %2376 = vmatpush.bf16.msra.mxu0 %v1855
      %2377 = vmatpush.bf16.msra.mxu0 %v1852
      %2378 = vmatpush.bf16.msra.mxu0 %v1849
      %2379 = vmatpush.bf16.msra.mxu0 %v1846
      %2380 = vmatpush.bf16.msra.mxu0 %v1843
      %2381 = vmatpush.bf16.msra.mxu0 %v1840
      %2382 = vmatmul.bf16.gmra.mxu0 %v855
      %v2383 = vpop.f32.mrf.mxu0
      %v2384 = vadd.f32 %v2370, %v2383
      %v2385 = vpop.f32.mrf.mxu0
      %v2386 = vadd.f32 %v2372, %v2385
      %2387 = vdwg.mxu0
      %2388 = vmatpush.bf16.msra.mxu0 %v1885
      %2389 = vmatpush.bf16.msra.mxu0 %v1882
      %2390 = vmatpush.bf16.msra.mxu0 %v1879
      %2391 = vmatpush.bf16.msra.mxu0 %v1876
      %2392 = vmatpush.bf16.msra.mxu0 %v1873
      %2393 = vmatpush.bf16.msra.mxu0 %v1870
      %2394 = vmatpush.bf16.msra.mxu0 %v1867
      %2395 = vmatpush.bf16.msra.mxu0 %v1864
      %2396 = vmatmul.bf16.gmra.mxu0 %v856
      %v2397 = vpop.f32.mrf.mxu0
      %v2398 = vadd.f32 %v2384, %v2397
      %v2399 = vpop.f32.mrf.mxu0
      %v2400 = vadd.f32 %v2386, %v2399
      %2401 = vdwg.mxu0
      %2402 = vmatpush.bf16.msra.mxu0 %v1909
      %2403 = vmatpush.bf16.msra.mxu0 %v1906
      %2404 = vmatpush.bf16.msra.mxu0 %v1903
      %2405 = vmatpush.bf16.msra.mxu0 %v1900
      %2406 = vmatpush.bf16.msra.mxu0 %v1897
      %2407 = vmatpush.bf16.msra.mxu0 %v1894
      %2408 = vmatpush.bf16.msra.mxu0 %v1891
      %2409 = vmatpush.bf16.msra.mxu0 %v1888
      %2410 = vmatmul.bf16.gmra.mxu0 %v857
      %v2411 = vpop.f32.mrf.mxu0
      %v2412 = vadd.f32 %v2398, %v2411
      %v2413 = vpop.f32.mrf.mxu0
      %v2414 = vadd.f32 %v2400, %v2413
      %2415 = vdwg.mxu0
      %2416 = vmatpush.bf16.msra.mxu0 %v1933
      %2417 = vmatpush.bf16.msra.mxu0 %v1930
      %2418 = vmatpush.bf16.msra.mxu0 %v1927
      %2419 = vmatpush.bf16.msra.mxu0 %v1924
      %2420 = vmatpush.bf16.msra.mxu0 %v1921
      %2421 = vmatpush.bf16.msra.mxu0 %v1918
      %2422 = vmatpush.bf16.msra.mxu0 %v1915
      %2423 = vmatpush.bf16.msra.mxu0 %v1912
      %2424 = vmatmul.bf16.gmra.mxu0 %v858
      %v2425 = vpop.f32.mrf.mxu0
      %v2426 = vadd.f32 %v2412, %v2425
      %v2427 = vpop.f32.mrf.mxu0
      %v2428 = vadd.f32 %v2414, %v2427
      %2429 = vdwg.mxu0
      %2430 = vmatpush.bf16.msra.mxu0 %v1957
      %2431 = vmatpush.bf16.msra.mxu0 %v1954
      %2432 = vmatpush.bf16.msra.mxu0 %v1951
      %2433 = vmatpush.bf16.msra.mxu0 %v1948
      %2434 = vmatpush.bf16.msra.mxu0 %v1945
      %2435 = vmatpush.bf16.msra.mxu0 %v1942
      %2436 = vmatpush.bf16.msra.mxu0 %v1939
      %2437 = vmatpush.bf16.msra.mxu0 %v1936
      %2438 = vmatmul.bf16.gmra.mxu0 %v859
      %v2439 = vpop.f32.mrf.mxu0
      %v2440 = vadd.f32 %v2426, %v2439
      %v2441 = vpop.f32.mrf.mxu0
      %v2442 = vadd.f32 %v2428, %v2441
      %2443 = vdwg.mxu0
      %2444 = vmatpush.bf16.msra.mxu0 %v1981
      %2445 = vmatpush.bf16.msra.mxu0 %v1978
      %2446 = vmatpush.bf16.msra.mxu0 %v1975
      %2447 = vmatpush.bf16.msra.mxu0 %v1972
      %2448 = vmatpush.bf16.msra.mxu0 %v1969
      %2449 = vmatpush.bf16.msra.mxu0 %v1966
      %2450 = vmatpush.bf16.msra.mxu0 %v1963
      %2451 = vmatpush.bf16.msra.mxu0 %v1960
      %2452 = vmatmul.bf16.gmra.mxu0 %v860
      %v2453 = vpop.f32.mrf.mxu0
      %v2454 = vadd.f32 %v2440, %v2453
      %v2455 = vpop.f32.mrf.mxu0
      %v2456 = vadd.f32 %v2442, %v2455
      %2457 = vdwg.mxu0
      %2458 = vmatpush.bf16.msra.mxu0 %v2005
      %2459 = vmatpush.bf16.msra.mxu0 %v2002
      %2460 = vmatpush.bf16.msra.mxu0 %v1999
      %2461 = vmatpush.bf16.msra.mxu0 %v1996
      %2462 = vmatpush.bf16.msra.mxu0 %v1993
      %2463 = vmatpush.bf16.msra.mxu0 %v1990
      %2464 = vmatpush.bf16.msra.mxu0 %v1987
      %2465 = vmatpush.bf16.msra.mxu0 %v1984
      %2466 = vmatmul.bf16.gmra.mxu0 %v861
      %v2467 = vpop.f32.mrf.mxu0
      %v2468 = vadd.f32 %v2454, %v2467
      %v2469 = vpop.f32.mrf.mxu0
      %v2470 = vadd.f32 %v2456, %v2469
      %2471 = vdwg.mxu0
      %2472 = vmatpush.bf16.msra.mxu0 0
      %2473 = vmatpush.bf16.msra.mxu0 0
      %2474 = vmatpush.bf16.msra.mxu0 0
      %2475 = vmatpush.bf16.msra.mxu0 0
      %2476 = vmatpush.bf16.msra.mxu0 %v2229
      %2477 = vmatpush.bf16.msra.mxu0 %v2014
      %2478 = vmatpush.bf16.msra.mxu0 %v2011
      %2479 = vmatpush.bf16.msra.mxu0 %v2008
      %2480 = vmatmul.bf16.gmra.mxu0 %v2222
      %v2481 = vpop.f32.mrf.mxu0
      %v2482 = vadd.f32 %v2468, %v2481
      %v2483 = vpop.f32.mrf.mxu0
      %v2484 = vadd.f32 %v2470, %v2483
      %2485 = vdwg.mxu0
      %2486 = vmatpush.bf16.msra.mxu0 %v1838
      %2487 = vmatpush.bf16.msra.mxu0 %v1835
      %2488 = vmatpush.bf16.msra.mxu0 %v1832
      %2489 = vmatpush.bf16.msra.mxu0 %v1829
      %2490 = vmatpush.bf16.msra.mxu0 %v1826
      %2491 = vmatpush.bf16.msra.mxu0 %v1823
      %2492 = vmatpush.bf16.msra.mxu0 %v1820
      %2493 = vmatpush.bf16.msra.mxu0 %v1817
      %2494 = vmatmul.bf16.gmra.mxu0 %v854
      %v2495 = vpop.f32.mrf.mxu0
      %v2496 = vadd.f32 0.0, %v2495
      %v2497 = vpop.f32.mrf.mxu0
      %v2498 = vadd.f32 0.0, %v2497
      %2499 = vdwg.mxu0
      %2500 = vmatpush.bf16.msra.mxu0 %v1862
      %2501 = vmatpush.bf16.msra.mxu0 %v1859
      %2502 = vmatpush.bf16.msra.mxu0 %v1856
      %2503 = vmatpush.bf16.msra.mxu0 %v1853
      %2504 = vmatpush.bf16.msra.mxu0 %v1850
      %2505 = vmatpush.bf16.msra.mxu0 %v1847
      %2506 = vmatpush.bf16.msra.mxu0 %v1844
      %2507 = vmatpush.bf16.msra.mxu0 %v1841
      %2508 = vmatmul.bf16.gmra.mxu0 %v855
      %v2509 = vpop.f32.mrf.mxu0
      %v2510 = vadd.f32 %v2496, %v2509
      %v2511 = vpop.f32.mrf.mxu0
      %v2512 = vadd.f32 %v2498, %v2511
      %2513 = vdwg.mxu0
      %2514 = vmatpush.bf16.msra.mxu0 %v1886
      %2515 = vmatpush.bf16.msra.mxu0 %v1883
      %2516 = vmatpush.bf16.msra.mxu0 %v1880
      %2517 = vmatpush.bf16.msra.mxu0 %v1877
      %2518 = vmatpush.bf16.msra.mxu0 %v1874
      %2519 = vmatpush.bf16.msra.mxu0 %v1871
      %2520 = vmatpush.bf16.msra.mxu0 %v1868
      %2521 = vmatpush.bf16.msra.mxu0 %v1865
      %2522 = vmatmul.bf16.gmra.mxu0 %v856
      %v2523 = vpop.f32.mrf.mxu0
      %v2524 = vadd.f32 %v2510, %v2523
      %v2525 = vpop.f32.mrf.mxu0
      %v2526 = vadd.f32 %v2512, %v2525
      %2527 = vdwg.mxu0
      %2528 = vmatpush.bf16.msra.mxu0 %v1910
      %2529 = vmatpush.bf16.msra.mxu0 %v1907
      %2530 = vmatpush.bf16.msra.mxu0 %v1904
      %2531 = vmatpush.bf16.msra.mxu0 %v1901
      %2532 = vmatpush.bf16.msra.mxu0 %v1898
      %2533 = vmatpush.bf16.msra.mxu0 %v1895
      %2534 = vmatpush.bf16.msra.mxu0 %v1892
      %2535 = vmatpush.bf16.msra.mxu0 %v1889
      %2536 = vmatmul.bf16.gmra.mxu0 %v857
      %v2537 = vpop.f32.mrf.mxu0
      %v2538 = vadd.f32 %v2524, %v2537
      %v2539 = vpop.f32.mrf.mxu0
      %v2540 = vadd.f32 %v2526, %v2539
      %2541 = vdwg.mxu0
      %2542 = vmatpush.bf16.msra.mxu0 %v1934
      %2543 = vmatpush.bf16.msra.mxu0 %v1931
      %2544 = vmatpush.bf16.msra.mxu0 %v1928
      %2545 = vmatpush.bf16.msra.mxu0 %v1925
      %2546 = vmatpush.bf16.msra.mxu0 %v1922
      %2547 = vmatpush.bf16.msra.mxu0 %v1919
      %2548 = vmatpush.bf16.msra.mxu0 %v1916
      %2549 = vmatpush.bf16.msra.mxu0 %v1913
      %2550 = vmatmul.bf16.gmra.mxu0 %v858
      %v2551 = vpop.f32.mrf.mxu0
      %v2552 = vadd.f32 %v2538, %v2551
      %v2553 = vpop.f32.mrf.mxu0
      %v2554 = vadd.f32 %v2540, %v2553
      %2555 = vdwg.mxu0
      %2556 = vmatpush.bf16.msra.mxu0 %v1958
      %2557 = vmatpush.bf16.msra.mxu0 %v1955
      %2558 = vmatpush.bf16.msra.mxu0 %v1952
      %2559 = vmatpush.bf16.msra.mxu0 %v1949
      %2560 = vmatpush.bf16.msra.mxu0 %v1946
      %2561 = vmatpush.bf16.msra.mxu0 %v1943
      %2562 = vmatpush.bf16.msra.mxu0 %v1940
      %2563 = vmatpush.bf16.msra.mxu0 %v1937
      %2564 = vmatmul.bf16.gmra.mxu0 %v859
      %v2565 = vpop.f32.mrf.mxu0
      %v2566 = vadd.f32 %v2552, %v2565
      %v2567 = vpop.f32.mrf.mxu0
      %v2568 = vadd.f32 %v2554, %v2567
      %2569 = vdwg.mxu0
      %2570 = vmatpush.bf16.msra.mxu0 %v1982
      %2571 = vmatpush.bf16.msra.mxu0 %v1979
      %2572 = vmatpush.bf16.msra.mxu0 %v1976
      %2573 = vmatpush.bf16.msra.mxu0 %v1973
      %2574 = vmatpush.bf16.msra.mxu0 %v1970
      %2575 = vmatpush.bf16.msra.mxu0 %v1967
      %2576 = vmatpush.bf16.msra.mxu0 %v1964
      %2577 = vmatpush.bf16.msra.mxu0 %v1961
      %2578 = vmatmul.bf16.gmra.mxu0 %v860
      %v2579 = vpop.f32.mrf.mxu0
      %v2580 = vadd.f32 %v2566, %v2579
      %v2581 = vpop.f32.mrf.mxu0
      %v2582 = vadd.f32 %v2568, %v2581
      %2583 = vdwg.mxu0
      %2584 = vmatpush.bf16.msra.mxu0 %v2006
      %2585 = vmatpush.bf16.msra.mxu0 %v2003
      %2586 = vmatpush.bf16.msra.mxu0 %v2000
      %2587 = vmatpush.bf16.msra.mxu0 %v1997
      %2588 = vmatpush.bf16.msra.mxu0 %v1994
      %2589 = vmatpush.bf16.msra.mxu0 %v1991
      %2590 = vmatpush.bf16.msra.mxu0 %v1988
      %2591 = vmatpush.bf16.msra.mxu0 %v1985
      %2592 = vmatmul.bf16.gmra.mxu0 %v861
      %v2593 = vpop.f32.mrf.mxu0
      %v2594 = vadd.f32 %v2580, %v2593
      %v2595 = vpop.f32.mrf.mxu0
      %v2596 = vadd.f32 %v2582, %v2595
      %2597 = vdwg.mxu0
      %2598 = vmatpush.bf16.msra.mxu0 0
      %2599 = vmatpush.bf16.msra.mxu0 0
      %2600 = vmatpush.bf16.msra.mxu0 0
      %2601 = vmatpush.bf16.msra.mxu0 0
      %2602 = vmatpush.bf16.msra.mxu0 %v2232
      %2603 = vmatpush.bf16.msra.mxu0 %v2015
      %2604 = vmatpush.bf16.msra.mxu0 %v2012
      %2605 = vmatpush.bf16.msra.mxu0 %v2009
      %2606 = vmatmul.bf16.gmra.mxu0 %v2222
      %v2607 = vpop.f32.mrf.mxu0
      %v2608 = vadd.f32 %v2594, %v2607
      %v2609 = vpop.f32.mrf.mxu0
      %v2610 = vadd.f32 %v2596, %v2609
      %2611 = vdwg.mxu0
      %v2612 = vpack.c.bf16 %v2482, %v2356
      %v2613 = vpack.c.bf16 %v2608, %v2608
      %v2614 = vpack.c.bf16 %v2484, %v2358
      %v2615 = vpack.c.bf16 %v2610, %v2610
      %2616 = vst [vmem:[#allocation2] sm:$0xff] %v2612
      %vm2617 = vcmask 396288
      %2618 = vst.msk [vmem:[#allocation2 + $0x8] sm:$0xf] %vm2617, %v2613
      %2619 = vst [vmem:[#allocation2 + $0xc] sm:$0xff] %v2614
      %2620 = vst.msk [vmem:[#allocation2 + $0x14] sm:$0xf] %vm2617, %v2615
      %2625 = vrot.lane.b32.xlu0 %v2612, 127
      %v2626 = vpop.permute.xlu0 %2625
      %2627 = vrot.lane.b32.xlu0 %v2613, 127
      %v2628 = vpop.permute.xlu0 %2627
      %2629 = vrot.lane.b32.xlu0 %v2614, 127
      %v2630 = vpop.permute.xlu0 %2629
      %2631 = vrot.lane.b32.xlu0 %v2615, 127
      %v2632 = vpop.permute.xlu0 %2631
      %v2633 = vrot.slane %v2626, 4
      %v2634 = vrot.slane %v2628, 4
      %v2635 = vrot.slane %v2630, 4
      %v2636 = vrot.slane %v2632, 4
      %vm2637 = vcmask 1043456
      %v2638 = vsel %vm2637, %v2633, %v2634
      %vm2639 = vcmask 1039360
      %v2640 = vsel %vm2639, %v2626, %v2638
      %v2641 = vsel %vm2637, %v2635, %v2636
      %v2642 = vsel %vm2639, %v2630, %v2641
      %2647 = vst [vmem:[#allocation2 + $0x18] sm:$0xff] %v2640
      %2648 = vst.msk [vmem:[#allocation2 + $0x20] sm:$0xf] %vm2617, %v2628
      %2649 = vst [vmem:[#allocation2 + $0x24] sm:$0xff] %v2642
      %2650 = vst.msk [vmem:[#allocation2 + $0x2c] sm:$0xf] %vm2617, %v2632
      %2651 = vrot.lane.b32.xlu0 %v2612, 110
      %v2652 = vpop.permute.xlu0 %2651
      %2653 = vrot.lane.b32.xlu0 %v2613, 110
      %v2654 = vpop.permute.xlu0 %2653
      %2655 = vrot.lane.b32.xlu0 %v2614, 110
      %v2656 = vpop.permute.xlu0 %2655
      %2657 = vrot.lane.b32.xlu0 %v2615, 110
      %v2658 = vpop.permute.xlu0 %2657
      %v2659 = vrot.slane %v2652, 4
      %v2660 = vrot.slane %v2654, 4
      %v2661 = vrot.slane %v2656, 4
      %v2662 = vrot.slane %v2658, 4
      %v2663 = vsel %vm2637, %v2659, %v2660
      %vm2664 = vcmask 900096
      %v2665 = vsel %vm2664, %v2652, %v2663
      %v2666 = vsel %vm2637, %v2661, %v2662
      %v2667 = vsel %vm2664, %v2656, %v2666
      %2672 = vst [vmem:[#allocation2 + $0x30] sm:$0xff] %v2665
      %2673 = vst.msk [vmem:[#allocation2 + $0x38] sm:$0xf] %vm2617, %v2654
      %2674 = vst [vmem:[#allocation2 + $0x3c] sm:$0xff] %v2667
      %2675 = vst.msk [vmem:[#allocation2 + $0x44] sm:$0xf] %vm2617, %v2658
      %2676 = vrot.lane.b32.xlu0 %v2612, 109
      %v2677 = vpop.permute.xlu0 %2676
      %2678 = vrot.lane.b32.xlu0 %v2613, 109
      %v2679 = vpop.permute.xlu0 %2678
      %2680 = vrot.lane.b32.xlu0 %v2614, 109
      %v2681 = vpop.permute.xlu0 %2680
      %2682 = vrot.lane.b32.xlu0 %v2615, 109
      %v2683 = vpop.permute.xlu0 %2682
      %v2684 = vrot.slane %v2677, 4
      %v2685 = vrot.slane %v2679, 4
      %v2686 = vrot.slane %v2681, 4
      %v2687 = vrot.slane %v2683, 4
      %v2688 = vsel %vm2637, %v2684, %v2685
      %vm2689 = vcmask 891904
      %v2690 = vsel %vm2689, %v2677, %v2688
      %v2691 = vsel %vm2637, %v2686, %v2687
      %v2692 = vsel %vm2689, %v2681, %v2691
      %2697 = vst [vmem:[#allocation2 + $0x48] sm:$0xff] %v2690
      %2698 = vst.msk [vmem:[#allocation2 + $0x50] sm:$0xf] %vm2617, %v2679
      %2699 = vst [vmem:[#allocation2 + $0x54] sm:$0xff] %v2692
      %2700 = vst.msk [vmem:[#allocation2 + $0x5c] sm:$0xf] %vm2617, %v2683
      %v2701 = vld [vmem:[%s4] sm:$0xf]
      %v2702 = vld [vmem:[%s4 + $0x4] sm:$0xf]
      %v2703 = vld [vmem:[%s4 + $0x8] sm:$0xf]
      %v2704 = vld [vmem:[%s4 + $0xc] sm:$0xf]
      %v2705 = vld [vmem:[#allocation2] sm:$0xff]
      %v2706 = vld [vmem:[#allocation2 + $0x8] sm:$0xf]
      %v2707 = vld [vmem:[#allocation2 + $0xc] sm:$0xff]
      %v2708 = vld [vmem:[#allocation2 + $0x14] sm:$0xf]
      %v2709 = vld [vmem:[#allocation2 + $0x18] sm:$0xff]
      %v2710 = vld [vmem:[#allocation2 + $0x20] sm:$0xf]
      %v2711 = vld [vmem:[#allocation2 + $0x24] sm:$0xff]
      %v2712 = vld [vmem:[#allocation2 + $0x2c] sm:$0xf]
      %v2713 = vld [vmem:[#allocation2 + $0x30] sm:$0xff]
      %v2714 = vld [vmem:[#allocation2 + $0x38] sm:$0xf]
      %v2715 = vld [vmem:[#allocation2 + $0x3c] sm:$0xff]
      %v2716 = vld [vmem:[#allocation2 + $0x44] sm:$0xf]
      %v2717 = vld [vmem:[#allocation2 + $0x48] sm:$0xff]
      %v2718 = vld [vmem:[#allocation2 + $0x50] sm:$0xf]
      %v2719 = vld [vmem:[#allocation2 + $0x54] sm:$0xff]
      %v2720 = vld [vmem:[#allocation2 + $0x5c] sm:$0xf]
      %v2721 = vld [vmem:[%s5] sm:$0xff]
      %v2722 = vld [vmem:[%s5 + $0x8] sm:$0xff]
      %v2723 = vld [vmem:[%s5 + $0x10] sm:$0xff]
      %v2724 = vld [vmem:[%s5 + $0x18] sm:$0xff]
      %2726 = vset.pattern.permute.xlu0 0
      %2727 = vperm.xlu0 %2726, %v2721
      %v2728 = vpop.permute.xlu0 %2727
      %2731 = vset.pattern.permute.xlu0 0
      %2732 = vperm.xlu0 %2731, %v2722
      %v2733 = vpop.permute.xlu0 %2732
      %2736 = vset.pattern.permute.xlu0 0
      %2737 = vperm.xlu0 %2736, %v2723
      %v2738 = vpop.permute.xlu0 %2737
      %2741 = vset.pattern.permute.xlu0 0
      %2742 = vperm.xlu0 %2741, %v2724
      %v2743 = vpop.permute.xlu0 %2742
      %v2749 = vunpack.c.l.b16 %v2701
      %v2750 = vunpack.c.l.b16 %v2702
      %v2751 = vunpack.c.l.b16 %v2703
      %v2752 = vunpack.c.l.b16 %v2704
      %v2753 = vpack.c.b16 %v2750, %v2749
      %v2754 = vpack.c.b16 %v2752, %v2751
      %v2771 = vunpack.c.l.b16 %v2705
      %v2772 = vunpack.c.h.b16 %v2705
      %v2773 = vunpack.c.l.b16 %v2706
      %v2774 = vunpack.c.l.b16 %v2707
      %v2775 = vunpack.c.h.b16 %v2707
      %v2776 = vunpack.c.l.b16 %v2708
      %v2777 = vunpack.c.l.b16 %v2709
      %v2778 = vunpack.c.h.b16 %v2709
      %v2779 = vunpack.c.l.b16 %v2710
      %v2780 = vunpack.c.l.b16 %v2711
      %v2781 = vunpack.c.h.b16 %v2711
      %v2782 = vunpack.c.l.b16 %v2712
      %v2783 = vunpack.c.l.b16 %v2713
      %v2784 = vunpack.c.h.b16 %v2713
      %v2785 = vunpack.c.l.b16 %v2714
      %v2786 = vunpack.c.l.b16 %v2715
      %v2787 = vunpack.c.h.b16 %v2715
      %v2788 = vunpack.c.l.b16 %v2716
      %v2789 = vunpack.c.l.b16 %v2717
      %v2790 = vunpack.c.h.b16 %v2717
      %v2791 = vunpack.c.l.b16 %v2718
      %v2792 = vunpack.c.l.b16 %v2719
      %v2793 = vunpack.c.h.b16 %v2719
      %v2794 = vunpack.c.l.b16 %v2720
      %v2795 = vpack.c.b16 %v2774, %v2771
      %v2796 = vpack.c.b16 %v2775, %v2772
      %v2797 = vpack.c.b16 %v2776, %v2773
      %v2798 = vpack.c.b16 %v2780, %v2777
      %v2799 = vpack.c.b16 %v2781, %v2778
      %v2800 = vpack.c.b16 %v2782, %v2779
      %v2801 = vpack.c.b16 %v2786, %v2783
      %v2802 = vpack.c.b16 %v2787, %v2784
      %v2803 = vpack.c.b16 %v2788, %v2785
      %v2804 = vpack.c.b16 %v2792, %v2789
      %v2805 = vpack.c.b16 %v2793, %v2790
      %v2806 = vpack.c.b16 %v2794, %v2791
      %vm2819 = vcmask 523264
      %v2821 = vsel %vm2819, %v2753, 0
      %v2824 = vsel %vm2819, %v2754, 0
      %2826 = vmatpush.bf16.msra.mxu0 0
      %2827 = vmatpush.bf16.msra.mxu0 0
      %2828 = vmatpush.bf16.msra.mxu0 0
      %2829 = vmatpush.bf16.msra.mxu0 0
      %2830 = vmatpush.bf16.msra.mxu0 %v2804
      %2831 = vmatpush.bf16.msra.mxu0 %v2801
      %2832 = vmatpush.bf16.msra.mxu0 %v2798
      %2833 = vmatpush.bf16.msra.mxu0 %v2795
      %2834 = vmatmul.bf16.gmra.mxu0 %v2821
      %v2835 = vpop.f32.mrf.mxu0
      %v2836 = vadd.f32 %v2728, %v2835
      %v2837 = vpop.f32.mrf.mxu0
      %v2838 = vadd.f32 %v2733, %v2837
      %2839 = vmatmul.bf16.gmra.mxu0 %v2824
      %v2840 = vpop.f32.mrf.mxu0
      %v2841 = vadd.f32 %v2738, %v2840
      %v2842 = vpop.f32.mrf.mxu0
      %v2843 = vadd.f32 %v2743, %v2842
      %2844 = vdwg.mxu0
      %2845 = vmatpush.bf16.msra.mxu0 0
      %2846 = vmatpush.bf16.msra.mxu0 0
      %2847 = vmatpush.bf16.msra.mxu0 0
      %2848 = vmatpush.bf16.msra.mxu0 0
      %2849 = vmatpush.bf16.msra.mxu0 %v2805
      %2850 = vmatpush.bf16.msra.mxu0 %v2802
      %2851 = vmatpush.bf16.msra.mxu0 %v2799
      %2852 = vmatpush.bf16.msra.mxu0 %v2796
      %2853 = vmatmul.bf16.gmra.mxu0 %v2821
      %v2854 = vpop.f32.mrf.mxu0
      %v2855 = vadd.f32 %v2728, %v2854
      %v2856 = vpop.f32.mrf.mxu0
      %v2857 = vadd.f32 %v2733, %v2856
      %2858 = vmatmul.bf16.gmra.mxu0 %v2824
      %v2859 = vpop.f32.mrf.mxu0
      %v2860 = vadd.f32 %v2738, %v2859
      %v2861 = vpop.f32.mrf.mxu0
      %v2862 = vadd.f32 %v2743, %v2861
      %2863 = vdwg.mxu0
      %2864 = vmatpush.bf16.msra.mxu0 0
      %2865 = vmatpush.bf16.msra.mxu0 0
      %2866 = vmatpush.bf16.msra.mxu0 0
      %2867 = vmatpush.bf16.msra.mxu0 0
      %2868 = vmatpush.bf16.msra.mxu0 %v2806
      %2869 = vmatpush.bf16.msra.mxu0 %v2803
      %2870 = vmatpush.bf16.msra.mxu0 %v2800
      %2871 = vmatpush.bf16.msra.mxu0 %v2797
      %2872 = vmatmul.bf16.gmra.mxu0 %v2821
      %v2873 = vpop.f32.mrf.mxu0
      %v2874 = vadd.f32 %v2728, %v2873
      %v2875 = vpop.f32.mrf.mxu0
      %v2876 = vadd.f32 %v2733, %v2875
      %2877 = vmatmul.bf16.gmra.mxu0 %v2824
      %v2878 = vpop.f32.mrf.mxu0
      %v2879 = vadd.f32 %v2738, %v2878
      %v2880 = vpop.f32.mrf.mxu0
      %v2881 = vadd.f32 %v2743, %v2880
      %2882 = vdwg.mxu0
      %v2883 = vmax.f32 %v2836, 0.0
      %v2884 = vmax.f32 %v2855, 0.0
      %v2885 = vmax.f32 %v2874, 0.0
      %v2886 = vmax.f32 %v2838, 0.0
      %v2887 = vmax.f32 %v2857, 0.0
      %v2888 = vmax.f32 %v2876, 0.0
      %v2889 = vmax.f32 %v2841, 0.0
      %v2890 = vmax.f32 %v2860, 0.0
      %v2891 = vmax.f32 %v2879, 0.0
      %v2892 = vmax.f32 %v2843, 0.0
      %v2893 = vmax.f32 %v2862, 0.0
      %v2894 = vmax.f32 %v2881, 0.0
      %2907 = vrot.lane.b32.xlu0 %v2883, 127
      %v2908 = vpop.permute.xlu0 %2907
      %2909 = vrot.lane.b32.xlu0 %v2884, 127
      %v2910 = vpop.permute.xlu0 %2909
      %2911 = vrot.lane.b32.xlu0 %v2885, 127
      %v2912 = vpop.permute.xlu0 %2911
      %2913 = vrot.lane.b32.xlu0 %v2886, 127
      %v2914 = vpop.permute.xlu0 %2913
      %2915 = vrot.lane.b32.xlu0 %v2887, 127
      %v2916 = vpop.permute.xlu0 %2915
      %2917 = vrot.lane.b32.xlu0 %v2888, 127
      %v2918 = vpop.permute.xlu0 %2917
      %2919 = vrot.lane.b32.xlu0 %v2889, 127
      %v2920 = vpop.permute.xlu0 %2919
      %2921 = vrot.lane.b32.xlu0 %v2890, 127
      %v2922 = vpop.permute.xlu0 %2921
      %2923 = vrot.lane.b32.xlu0 %v2891, 127
      %v2924 = vpop.permute.xlu0 %2923
      %2925 = vrot.lane.b32.xlu0 %v2892, 127
      %v2926 = vpop.permute.xlu0 %2925
      %2927 = vrot.lane.b32.xlu0 %v2893, 127
      %v2928 = vpop.permute.xlu0 %2927
      %2929 = vrot.lane.b32.xlu0 %v2894, 127
      %v2930 = vpop.permute.xlu0 %2929
      %v2931 = vsel %vm694, %v2908, %v2910
      %v2932 = vsel %vm694, %v2910, %v2912
      %v2933 = vsel %vm694, %v2914, %v2916
      %v2934 = vsel %vm694, %v2916, %v2918
      %v2935 = vsel %vm694, %v2920, %v2922
      %v2936 = vsel %vm694, %v2922, %v2924
      %v2937 = vsel %vm694, %v2926, %v2928
      %v2938 = vsel %vm694, %v2928, %v2930
      %v2951 = vmax.f32 %v2883, %v2931
      %v2952 = vmax.f32 %v2884, %v2932
      %v2953 = vmax.f32 %v2885, %v2912
      %v2954 = vmax.f32 %v2886, %v2933
      %v2955 = vmax.f32 %v2887, %v2934
      %v2956 = vmax.f32 %v2888, %v2918
      %v2957 = vmax.f32 %v2889, %v2935
      %v2958 = vmax.f32 %v2890, %v2936
      %v2959 = vmax.f32 %v2891, %v2924
      %v2960 = vmax.f32 %v2892, %v2937
      %v2961 = vmax.f32 %v2893, %v2938
      %v2962 = vmax.f32 %v2894, %v2930
      %2975 = vrot.lane.b32.xlu0 %v2951, 110
      %v2976 = vpop.permute.xlu0 %2975
      %2977 = vrot.lane.b32.xlu0 %v2952, 110
      %v2978 = vpop.permute.xlu0 %2977
      %2979 = vrot.lane.b32.xlu0 %v2953, 110
      %v2980 = vpop.permute.xlu0 %2979
      %2981 = vrot.lane.b32.xlu0 %v2954, 110
      %v2982 = vpop.permute.xlu0 %2981
      %2983 = vrot.lane.b32.xlu0 %v2955, 110
      %v2984 = vpop.permute.xlu0 %2983
      %2985 = vrot.lane.b32.xlu0 %v2956, 110
      %v2986 = vpop.permute.xlu0 %2985
      %2987 = vrot.lane.b32.xlu0 %v2957, 110
      %v2988 = vpop.permute.xlu0 %2987
      %2989 = vrot.lane.b32.xlu0 %v2958, 110
      %v2990 = vpop.permute.xlu0 %2989
      %2991 = vrot.lane.b32.xlu0 %v2959, 110
      %v2992 = vpop.permute.xlu0 %2991
      %2993 = vrot.lane.b32.xlu0 %v2960, 110
      %v2994 = vpop.permute.xlu0 %2993
      %2995 = vrot.lane.b32.xlu0 %v2961, 110
      %v2996 = vpop.permute.xlu0 %2995
      %2997 = vrot.lane.b32.xlu0 %v2962, 110
      %v2998 = vpop.permute.xlu0 %2997
      %vm2999 = vcmask 900096
      %v3000 = vsel %vm2999, %v2976, %v2978
      %v3001 = vsel %vm2999, %v2978, %v2980
      %v3002 = vsel %vm2999, %v2982, %v2984
      %v3003 = vsel %vm2999, %v2984, %v2986
      %v3004 = vsel %vm2999, %v2988, %v2990
      %v3005 = vsel %vm2999, %v2990, %v2992
      %v3006 = vsel %vm2999, %v2994, %v2996
      %v3007 = vsel %vm2999, %v2996, %v2998
      %v3020 = vmax.f32 %v2951, %v3000
      %v3021 = vmax.f32 %v2952, %v3001
      %v3022 = vmax.f32 %v2953, %v2980
      %v3023 = vmax.f32 %v2954, %v3002
      %v3024 = vmax.f32 %v2955, %v3003
      %v3025 = vmax.f32 %v2956, %v2986
      %v3026 = vmax.f32 %v2957, %v3004
      %v3027 = vmax.f32 %v2958, %v3005
      %v3028 = vmax.f32 %v2959, %v2992
      %v3029 = vmax.f32 %v2960, %v3006
      %v3030 = vmax.f32 %v2961, %v3007
      %v3031 = vmax.f32 %v2962, %v2998
      %v3032 = vpack.c.bf16 %v3023, %v3020
      %v3033 = vpack.c.bf16 %v3024, %v3021
      %v3034 = vpack.c.bf16 %v3025, %v3022
      %v3035 = vpack.c.bf16 %v3029, %v3026
      %v3036 = vpack.c.bf16 %v3030, %v3027
      %v3037 = vpack.c.bf16 %v3031, %v3028
      %v3038 = vld [vmem:[%s6] sm:$0xf]
      %v3039 = vld [vmem:[%s6 + $0x4] sm:$0xf]
      %v3040 = vld [vmem:[%s6 + $0x8] sm:$0xf]
      %v3041 = vld [vmem:[%s6 + $0xc] sm:$0xf]
      %v3042 = vld [vmem:[%s6 + $0x10] sm:$0xf]
      %v3043 = vld [vmem:[%s6 + $0x14] sm:$0xf]
      %v3044 = vld [vmem:[%s6 + $0x18] sm:$0xf]
      %v3045 = vld [vmem:[%s6 + $0x1c] sm:$0xf]
      %v3046 = vld [vmem:[%s6 + $0x20] sm:$0xf]
      %v3047 = vld [vmem:[%s6 + $0x24] sm:$0xf]
      %v3048 = vld [vmem:[%s6 + $0x28] sm:$0xf]
      %v3049 = vld [vmem:[%s6 + $0x2c] sm:$0xf]
      %v3050 = vld [vmem:[%s6 + $0x30] sm:$0xf]
      %v3051 = vld [vmem:[%s6 + $0x34] sm:$0xf]
      %v3052 = vld [vmem:[%s6 + $0x38] sm:$0xf]
      %v3053 = vld [vmem:[%s6 + $0x3c] sm:$0xf]
      %v3054 = vld [vmem:[%s6 + $0x40] sm:$0xf]
      %v3055 = vld [vmem:[%s6 + $0x44] sm:$0xf]
      %v3056 = vld [vmem:[%s6 + $0x48] sm:$0xf]
      %v3057 = vld [vmem:[%s6 + $0x4c] sm:$0xf]
      %v3058 = vld [vmem:[%s6 + $0x50] sm:$0xf]
      %v3059 = vld [vmem:[%s6 + $0x54] sm:$0xf]
      %v3060 = vld [vmem:[%s6 + $0x58] sm:$0xf]
      %v3061 = vld [vmem:[%s6 + $0x5c] sm:$0xf]
      %v3062 = vld [vmem:[%s6 + $0x60] sm:$0xf]
      %v3063 = vld [vmem:[%s6 + $0x64] sm:$0xf]
      %v3064 = vld [vmem:[%s6 + $0x68] sm:$0xf]
      %v3065 = vld [vmem:[%s6 + $0x6c] sm:$0xf]
      %v3066 = vld [vmem:[%s6 + $0x70] sm:$0xf]
      %v3067 = vld [vmem:[%s6 + $0x74] sm:$0xf]
      %v3068 = vld [vmem:[%s6 + $0x78] sm:$0xf]
      %v3069 = vld [vmem:[%s6 + $0x7c] sm:$0xf]
      %v3070 = vld [vmem:[%s6 + $0x80] sm:$0xf]
      %v3071 = vld [vmem:[%s6 + $0x84] sm:$0xf]
      %v3072 = vld [vmem:[%s6 + $0x88] sm:$0xf]
      %v3073 = vld [vmem:[%s6 + $0x8c] sm:$0x7]
      %v3110 = vunpack.c.l.b16 %v3038
      %v3111 = vunpack.c.l.b16 %v3039
      %v3112 = vunpack.c.l.b16 %v3040
      %v3113 = vunpack.c.l.b16 %v3041
      %v3114 = vunpack.c.l.b16 %v3042
      %v3115 = vunpack.c.l.b16 %v3043
      %v3116 = vunpack.c.l.b16 %v3044
      %v3117 = vunpack.c.l.b16 %v3045
      %v3118 = vunpack.c.l.b16 %v3046
      %v3119 = vunpack.c.l.b16 %v3047
      %v3120 = vunpack.c.l.b16 %v3048
      %v3121 = vunpack.c.l.b16 %v3049
      %v3122 = vunpack.c.l.b16 %v3050
      %v3123 = vunpack.c.l.b16 %v3051
      %v3124 = vunpack.c.l.b16 %v3052
      %v3125 = vunpack.c.l.b16 %v3053
      %v3126 = vunpack.c.l.b16 %v3054
      %v3127 = vunpack.c.l.b16 %v3055
      %v3128 = vunpack.c.l.b16 %v3056
      %v3129 = vunpack.c.l.b16 %v3057
      %v3130 = vunpack.c.l.b16 %v3058
      %v3131 = vunpack.c.l.b16 %v3059
      %v3132 = vunpack.c.l.b16 %v3060
      %v3133 = vunpack.c.l.b16 %v3061
      %v3134 = vunpack.c.l.b16 %v3062
      %v3135 = vunpack.c.l.b16 %v3063
      %v3136 = vunpack.c.l.b16 %v3064
      %v3137 = vunpack.c.l.b16 %v3065
      %v3138 = vunpack.c.l.b16 %v3066
      %v3139 = vunpack.c.l.b16 %v3067
      %v3140 = vunpack.c.l.b16 %v3068
      %v3141 = vunpack.c.l.b16 %v3069
      %v3142 = vunpack.c.l.b16 %v3070
      %v3143 = vunpack.c.l.b16 %v3071
      %v3144 = vunpack.c.l.b16 %v3072
      %v3145 = vunpack.c.l.b16 %v3073
      %v3146 = vpack.c.b16 %v3111, %v3110
      %v3147 = vpack.c.b16 %v3113, %v3112
      %v3148 = vpack.c.b16 %v3115, %v3114
      %v3149 = vpack.c.b16 %v3117, %v3116
      %v3150 = vpack.c.b16 %v3119, %v3118
      %v3151 = vpack.c.b16 %v3121, %v3120
      %v3152 = vpack.c.b16 %v3123, %v3122
      %v3153 = vpack.c.b16 %v3125, %v3124
      %v3154 = vpack.c.b16 %v3127, %v3126
      %v3155 = vpack.c.b16 %v3129, %v3128
      %v3156 = vpack.c.b16 %v3131, %v3130
      %v3157 = vpack.c.b16 %v3133, %v3132
      %v3158 = vpack.c.b16 %v3135, %v3134
      %v3159 = vpack.c.b16 %v3137, %v3136
      %v3160 = vpack.c.b16 %v3139, %v3138
      %v3161 = vpack.c.b16 %v3141, %v3140
      %v3162 = vpack.c.b16 %v3143, %v3142
      %v3163 = vpack.c.b16 %v3145, %v3144
      %vm3181 = vcmask 244736
      %v3183 = vsel %vm3181, %v3034, 0
      %v3186 = vsel %vm3181, %v3037, 0
      %v3189 = vsel %vm2224, %v3163, 0
      %3191 = vmatpush.bf16.msra.mxu0 %v3153
      %3192 = vmatpush.bf16.msra.mxu0 %v3152
      %3193 = vmatpush.bf16.msra.mxu0 %v3151
      %3194 = vmatpush.bf16.msra.mxu0 %v3150
      %3195 = vmatpush.bf16.msra.mxu0 %v3149
      %3196 = vmatpush.bf16.msra.mxu0 %v3148
      %3197 = vmatpush.bf16.msra.mxu0 %v3147
      %3198 = vmatpush.bf16.msra.mxu0 %v3146
      %3199 = vmatmul.bf16.gmra.mxu0 %v3032
      %v3200 = vpop.f32.mrf.mxu0
      %v3201 = vadd.f32 0.0, %v3200
      %v3202 = vpop.f32.mrf.mxu0
      %v3203 = vadd.f32 0.0, %v3202
      %3204 = vmatmul.bf16.gmra.mxu0 %v3035
      %v3205 = vpop.f32.mrf.mxu0
      %v3206 = vadd.f32 0.0, %v3205
      %v3207 = vpop.f32.mrf.mxu0
      %v3208 = vadd.f32 0.0, %v3207
      %3209 = vdwg.mxu0
      %3210 = vmatpush.bf16.msra.mxu0 %v3161
      %3211 = vmatpush.bf16.msra.mxu0 %v3160
      %3212 = vmatpush.bf16.msra.mxu0 %v3159
      %3213 = vmatpush.bf16.msra.mxu0 %v3158
      %3214 = vmatpush.bf16.msra.mxu0 %v3157
      %3215 = vmatpush.bf16.msra.mxu0 %v3156
      %3216 = vmatpush.bf16.msra.mxu0 %v3155
      %3217 = vmatpush.bf16.msra.mxu0 %v3154
      %3218 = vmatmul.bf16.gmra.mxu0 %v3033
      %v3219 = vpop.f32.mrf.mxu0
      %v3220 = vadd.f32 %v3201, %v3219
      %v3221 = vpop.f32.mrf.mxu0
      %v3222 = vadd.f32 %v3203, %v3221
      %3223 = vmatmul.bf16.gmra.mxu0 %v3036
      %v3224 = vpop.f32.mrf.mxu0
      %v3225 = vadd.f32 %v3206, %v3224
      %v3226 = vpop.f32.mrf.mxu0
      %v3227 = vadd.f32 %v3208, %v3226
      %3228 = vdwg.mxu0
      %3229 = vmatpush.bf16.msra.mxu0 0
      %3230 = vmatpush.bf16.msra.mxu0 0
      %3231 = vmatpush.bf16.msra.mxu0 0
      %3232 = vmatpush.bf16.msra.mxu0 0
      %3233 = vmatpush.bf16.msra.mxu0 0
      %3234 = vmatpush.bf16.msra.mxu0 0
      %3235 = vmatpush.bf16.msra.mxu0 %v3189
      %3236 = vmatpush.bf16.msra.mxu0 %v3162
      %3237 = vmatmul.bf16.gmra.mxu0 %v3183
      %v3238 = vpop.f32.mrf.mxu0
      %v3239 = vadd.f32 %v3220, %v3238
      %v3240 = vpop.f32.mrf.mxu0
      %v3241 = vadd.f32 %v3222, %v3240
      %3242 = vmatmul.bf16.gmra.mxu0 %v3186
      %v3243 = vpop.f32.mrf.mxu0
      %v3244 = vadd.f32 %v3225, %v3243
      %v3245 = vpop.f32.mrf.mxu0
      %v3246 = vadd.f32 %v3227, %v3245
      %3247 = vdwg.mxu0
      %v3248 = vpack.c.bf16 %v3239, %v3239
      %v3249 = vpack.c.bf16 %v3241, %v3241
      %v3250 = vpack.c.bf16 %v3244, %v3244
      %v3251 = vpack.c.bf16 %v3246, %v3246
      %vm3252 = vcmask 723968
      %3253 = vst.msk [vmem:[#allocation3] sm:$0xf] %vm3252, %v3248
      %3254 = vst.msk [vmem:[#allocation3 + $0x4] sm:$0xf] %vm3252, %v3249
      %3255 = vst.msk [vmem:[#allocation3 + $0x8] sm:$0xf] %vm3252, %v3250
      %3256 = vst.msk [vmem:[#allocation3 + $0xc] sm:$0xf] %vm3252, %v3251
      %3261 = vrot.lane.b32.xlu0 %v3248, 127
      %v3262 = vpop.permute.xlu0 %3261
      %3263 = vrot.lane.b32.xlu0 %v3249, 127
      %v3264 = vpop.permute.xlu0 %3263
      %3265 = vrot.lane.b32.xlu0 %v3250, 127
      %v3266 = vpop.permute.xlu0 %3265
      %3267 = vrot.lane.b32.xlu0 %v3251, 127
      %v3268 = vpop.permute.xlu0 %3267
      %3273 = vst.msk [vmem:[#allocation3 + $0x10] sm:$0xf] %vm3252, %v3262
      %3274 = vst.msk [vmem:[#allocation3 + $0x14] sm:$0xf] %vm3252, %v3264
      %3275 = vst.msk [vmem:[#allocation3 + $0x18] sm:$0xf] %vm3252, %v3266
      %3276 = vst.msk [vmem:[#allocation3 + $0x1c] sm:$0xf] %vm3252, %v3268
      %3277 = vrot.lane.b32.xlu0 %v3248, 118
      %v3278 = vpop.permute.xlu0 %3277
      %3279 = vrot.lane.b32.xlu0 %v3249, 118
      %v3280 = vpop.permute.xlu0 %3279
      %3281 = vrot.lane.b32.xlu0 %v3250, 118
      %v3282 = vpop.permute.xlu0 %3281
      %3283 = vrot.lane.b32.xlu0 %v3251, 118
      %v3284 = vpop.permute.xlu0 %3283
      %3289 = vst.msk [vmem:[#allocation3 + $0x20] sm:$0xf] %vm3252, %v3278
      %3290 = vst.msk [vmem:[#allocation3 + $0x24] sm:$0xf] %vm3252, %v3280
      %3291 = vst.msk [vmem:[#allocation3 + $0x28] sm:$0xf] %vm3252, %v3282
      %3292 = vst.msk [vmem:[#allocation3 + $0x2c] sm:$0xf] %vm3252, %v3284
      %3293 = vrot.lane.b32.xlu0 %v3248, 117
      %v3294 = vpop.permute.xlu0 %3293
      %3295 = vrot.lane.b32.xlu0 %v3249, 117
      %v3296 = vpop.permute.xlu0 %3295
      %3297 = vrot.lane.b32.xlu0 %v3250, 117
      %v3298 = vpop.permute.xlu0 %3297
      %3299 = vrot.lane.b32.xlu0 %v3251, 117
      %v3300 = vpop.permute.xlu0 %3299
      %3305 = vst.msk [vmem:[#allocation3 + $0x30] sm:$0xf] %vm3252, %v3294
      %3306 = vst.msk [vmem:[#allocation3 + $0x34] sm:$0xf] %vm3252, %v3296
      %3307 = vst.msk [vmem:[#allocation3 + $0x38] sm:$0xf] %vm3252, %v3298
      %3308 = vst.msk [vmem:[#allocation3 + $0x3c] sm:$0xf] %vm3252, %v3300
      %v3309 = vld [vmem:[%s7] sm:$0xf]
      %v3310 = vld [vmem:[%s7 + $0x4] sm:$0xf]
      %v3311 = vld [vmem:[%s7 + $0x8] sm:$0xf]
      %v3312 = vld [vmem:[%s7 + $0xc] sm:$0xf]
      %v3313 = vld [vmem:[%s7 + $0x10] sm:$0xf]
      %v3314 = vld [vmem:[%s7 + $0x14] sm:$0xf]
      %v3315 = vld [vmem:[%s7 + $0x18] sm:$0xf]
      %v3316 = vld [vmem:[%s7 + $0x1c] sm:$0xf]
      %v3317 = vld [vmem:[#allocation3] sm:$0xf]
      %v3318 = vld [vmem:[#allocation3 + $0x4] sm:$0xf]
      %v3319 = vld [vmem:[#allocation3 + $0x8] sm:$0xf]
      %v3320 = vld [vmem:[#allocation3 + $0xc] sm:$0xf]
      %v3321 = vld [vmem:[#allocation3 + $0x10] sm:$0xf]
      %v3322 = vld [vmem:[#allocation3 + $0x14] sm:$0xf]
      %v3323 = vld [vmem:[#allocation3 + $0x18] sm:$0xf]
      %v3324 = vld [vmem:[#allocation3 + $0x1c] sm:$0xf]
      %v3325 = vld [vmem:[#allocation3 + $0x20] sm:$0xf]
      %v3326 = vld [vmem:[#allocation3 + $0x24] sm:$0xf]
      %v3327 = vld [vmem:[#allocation3 + $0x28] sm:$0xf]
      %v3328 = vld [vmem:[#allocation3 + $0x2c] sm:$0xf]
      %v3329 = vld [vmem:[#allocation3 + $0x30] sm:$0xf]
      %v3330 = vld [vmem:[#allocation3 + $0x34] sm:$0xf]
      %v3331 = vld [vmem:[#allocation3 + $0x38] sm:$0xf]
      %v3332 = vld [vmem:[#allocation3 + $0x3c] sm:$0xf]
      %v3333 = vld [vmem:[%s8] sm:$0xff]
      %v3334 = vld [vmem:[%s8 + $0x8] sm:$0xff]
      %v3335 = vld [vmem:[%s8 + $0x10] sm:$0xff]
      %v3336 = vld [vmem:[%s8 + $0x18] sm:$0xff]
      %v3337 = vld [vmem:[%s8 + $0x20] sm:$0xff]
      %v3338 = vld [vmem:[%s8 + $0x28] sm:$0xff]
      %v3339 = vld [vmem:[%s8 + $0x30] sm:$0xff]
      %v3340 = vld [vmem:[%s8 + $0x38] sm:$0xff]
      %3342 = vset.pattern.permute.xlu0 0
      %3343 = vperm.xlu0 %3342, %v3333
      %v3344 = vpop.permute.xlu0 %3343
      %3347 = vset.pattern.permute.xlu0 0
      %3348 = vperm.xlu0 %3347, %v3334
      %v3349 = vpop.permute.xlu0 %3348
      %3352 = vset.pattern.permute.xlu0 0
      %3353 = vperm.xlu0 %3352, %v3335
      %v3354 = vpop.permute.xlu0 %3353
      %3357 = vset.pattern.permute.xlu0 0
      %3358 = vperm.xlu0 %3357, %v3336
      %v3359 = vpop.permute.xlu0 %3358
      %3362 = vset.pattern.permute.xlu0 0
      %3363 = vperm.xlu0 %3362, %v3337
      %v3364 = vpop.permute.xlu0 %3363
      %3367 = vset.pattern.permute.xlu0 0
      %3368 = vperm.xlu0 %3367, %v3338
      %v3369 = vpop.permute.xlu0 %3368
      %3372 = vset.pattern.permute.xlu0 0
      %3373 = vperm.xlu0 %3372, %v3339
      %v3374 = vpop.permute.xlu0 %3373
      %3377 = vset.pattern.permute.xlu0 0
      %3378 = vperm.xlu0 %3377, %v3340
      %v3379 = vpop.permute.xlu0 %3378
      %v3389 = vunpack.c.l.b16 %v3309
      %v3390 = vunpack.c.l.b16 %v3310
      %v3391 = vunpack.c.l.b16 %v3311
      %v3392 = vunpack.c.l.b16 %v3312
      %v3393 = vunpack.c.l.b16 %v3313
      %v3394 = vunpack.c.l.b16 %v3314
      %v3395 = vunpack.c.l.b16 %v3315
      %v3396 = vunpack.c.l.b16 %v3316
      %v3397 = vpack.c.b16 %v3390, %v3389
      %v3398 = vpack.c.b16 %v3392, %v3391
      %v3399 = vpack.c.b16 %v3394, %v3393
      %v3400 = vpack.c.b16 %v3396, %v3395
      %v3421 = vunpack.c.l.b16 %v3317
      %v3422 = vunpack.c.l.b16 %v3318
      %v3423 = vunpack.c.l.b16 %v3319
      %v3424 = vunpack.c.l.b16 %v3320
      %v3425 = vunpack.c.l.b16 %v3321
      %v3426 = vunpack.c.l.b16 %v3322
      %v3427 = vunpack.c.l.b16 %v3323
      %v3428 = vunpack.c.l.b16 %v3324
      %v3429 = vunpack.c.l.b16 %v3325
      %v3430 = vunpack.c.l.b16 %v3326
      %v3431 = vunpack.c.l.b16 %v3327
      %v3432 = vunpack.c.l.b16 %v3328
      %v3433 = vunpack.c.l.b16 %v3329
      %v3434 = vunpack.c.l.b16 %v3330
      %v3435 = vunpack.c.l.b16 %v3331
      %v3436 = vunpack.c.l.b16 %v3332
      %v3437 = vpack.c.b16 %v3422, %v3421
      %v3438 = vpack.c.b16 %v3424, %v3423
      %v3439 = vpack.c.b16 %v3426, %v3425
      %v3440 = vpack.c.b16 %v3428, %v3427
      %v3441 = vpack.c.b16 %v3430, %v3429
      %v3442 = vpack.c.b16 %v3432, %v3431
      %v3443 = vpack.c.b16 %v3434, %v3433
      %v3444 = vpack.c.b16 %v3436, %v3435
      %3453 = vmatpush.bf16.msra.mxu0 %v3444
      %3454 = vmatpush.bf16.msra.mxu0 %v3443
      %3455 = vmatpush.bf16.msra.mxu0 %v3442
      %3456 = vmatpush.bf16.msra.mxu0 %v3441
      %3457 = vmatpush.bf16.msra.mxu0 %v3440
      %3458 = vmatpush.bf16.msra.mxu0 %v3439
      %3459 = vmatpush.bf16.msra.mxu0 %v3438
      %3460 = vmatpush.bf16.msra.mxu0 %v3437
      %3461 = vmatmul.bf16.gmra.mxu0 %v3397
      %v3462 = vpop.f32.mrf.mxu0
      %v3463 = vadd.f32 %v3344, %v3462
      %v3464 = vpop.f32.mrf.mxu0
      %v3465 = vadd.f32 %v3349, %v3464
      %3466 = vmatmul.bf16.gmra.mxu0 %v3398
      %v3467 = vpop.f32.mrf.mxu0
      %v3468 = vadd.f32 %v3354, %v3467
      %v3469 = vpop.f32.mrf.mxu0
      %v3470 = vadd.f32 %v3359, %v3469
      %3471 = vmatmul.bf16.gmra.mxu0 %v3399
      %v3472 = vpop.f32.mrf.mxu0
      %v3473 = vadd.f32 %v3364, %v3472
      %v3474 = vpop.f32.mrf.mxu0
      %v3475 = vadd.f32 %v3369, %v3474
      %3476 = vmatmul.bf16.gmra.mxu0 %v3400
      %v3477 = vpop.f32.mrf.mxu0
      %v3478 = vadd.f32 %v3374, %v3477
      %v3479 = vpop.f32.mrf.mxu0
      %v3480 = vadd.f32 %v3379, %v3479
      %3481 = vdwg.mxu0
      %v3482 = vmax.f32 %v3463, 0.0
      %v3483 = vmax.f32 %v3465, 0.0
      %v3484 = vmax.f32 %v3468, 0.0
      %v3485 = vmax.f32 %v3470, 0.0
      %v3486 = vmax.f32 %v3473, 0.0
      %v3487 = vmax.f32 %v3475, 0.0
      %v3488 = vmax.f32 %v3478, 0.0
      %v3489 = vmax.f32 %v3480, 0.0
      %3498 = vrot.lane.b32.xlu0 %v3482, 127
      %v3499 = vpop.permute.xlu0 %3498
      %3500 = vrot.lane.b32.xlu0 %v3483, 127
      %v3501 = vpop.permute.xlu0 %3500
      %3502 = vrot.lane.b32.xlu0 %v3484, 127
      %v3503 = vpop.permute.xlu0 %3502
      %3504 = vrot.lane.b32.xlu0 %v3485, 127
      %v3505 = vpop.permute.xlu0 %3504
      %3506 = vrot.lane.b32.xlu0 %v3486, 127
      %v3507 = vpop.permute.xlu0 %3506
      %3508 = vrot.lane.b32.xlu0 %v3487, 127
      %v3509 = vpop.permute.xlu0 %3508
      %3510 = vrot.lane.b32.xlu0 %v3488, 127
      %v3511 = vpop.permute.xlu0 %3510
      %3512 = vrot.lane.b32.xlu0 %v3489, 127
      %v3513 = vpop.permute.xlu0 %3512
      %v3522 = vmax.f32 %v3482, %v3499
      %v3523 = vmax.f32 %v3483, %v3501
      %v3524 = vmax.f32 %v3484, %v3503
      %v3525 = vmax.f32 %v3485, %v3505
      %v3526 = vmax.f32 %v3486, %v3507
      %v3527 = vmax.f32 %v3487, %v3509
      %v3528 = vmax.f32 %v3488, %v3511
      %v3529 = vmax.f32 %v3489, %v3513
      %3538 = vrot.lane.b32.xlu0 %v3522, 118
      %v3539 = vpop.permute.xlu0 %3538
      %3540 = vrot.lane.b32.xlu0 %v3523, 118
      %v3541 = vpop.permute.xlu0 %3540
      %3542 = vrot.lane.b32.xlu0 %v3524, 118
      %v3543 = vpop.permute.xlu0 %3542
      %3544 = vrot.lane.b32.xlu0 %v3525, 118
      %v3545 = vpop.permute.xlu0 %3544
      %3546 = vrot.lane.b32.xlu0 %v3526, 118
      %v3547 = vpop.permute.xlu0 %3546
      %3548 = vrot.lane.b32.xlu0 %v3527, 118
      %v3549 = vpop.permute.xlu0 %3548
      %3550 = vrot.lane.b32.xlu0 %v3528, 118
      %v3551 = vpop.permute.xlu0 %3550
      %3552 = vrot.lane.b32.xlu0 %v3529, 118
      %v3553 = vpop.permute.xlu0 %3552
      %v3562 = vmax.f32 %v3522, %v3539
      %v3563 = vmax.f32 %v3523, %v3541
      %v3564 = vmax.f32 %v3524, %v3543
      %v3565 = vmax.f32 %v3525, %v3545
      %v3566 = vmax.f32 %v3526, %v3547
      %v3567 = vmax.f32 %v3527, %v3549
      %v3568 = vmax.f32 %v3528, %v3551
      %v3569 = vmax.f32 %v3529, %v3553
      %v3570 = vpack.c.bf16 %v3563, %v3562
      %v3571 = vpack.c.bf16 %v3565, %v3564
      %v3572 = vpack.c.bf16 %v3567, %v3566
      %v3573 = vpack.c.bf16 %v3569, %v3568
      %v3574 = vld [vmem:[%s9] sm:$0xf]
      %v3575 = vld [vmem:[%s9 + $0x4] sm:$0xf]
      %v3576 = vld [vmem:[%s9 + $0x8] sm:$0xf]
      %v3577 = vld [vmem:[%s9 + $0xc] sm:$0xf]
      %v3578 = vld [vmem:[%s9 + $0x10] sm:$0xf]
      %v3579 = vld [vmem:[%s9 + $0x14] sm:$0xf]
      %v3580 = vld [vmem:[%s9 + $0x18] sm:$0xf]
      %v3581 = vld [vmem:[%s9 + $0x1c] sm:$0xf]
      %v3582 = vld [vmem:[%s9 + $0x20] sm:$0xf]
      %v3583 = vld [vmem:[%s9 + $0x24] sm:$0x7]
      %v3594 = vunpack.c.l.b16 %v3574
      %v3595 = vunpack.c.l.b16 %v3575
      %v3596 = vunpack.c.l.b16 %v3576
      %v3597 = vunpack.c.l.b16 %v3577
      %v3598 = vunpack.c.l.b16 %v3578
      %v3599 = vunpack.c.l.b16 %v3579
      %v3600 = vunpack.c.l.b16 %v3580
      %v3601 = vunpack.c.l.b16 %v3581
      %v3602 = vunpack.c.l.b16 %v3582
      %v3603 = vunpack.c.l.b16 %v3583
      %v3604 = vpack.c.b16 %v3595, %v3594
      %v3605 = vpack.c.b16 %v3597, %v3596
      %v3606 = vpack.c.b16 %v3599, %v3598
      %v3607 = vpack.c.b16 %v3601, %v3600
      %v3608 = vpack.c.b16 %v3603, %v3602
      %vm3613 = vcmask 637952
      %v3615 = vsel %vm3613, %v3570, 0
      %v3618 = vsel %vm3613, %v3571, 0
      %v3621 = vsel %vm3613, %v3572, 0
      %v3624 = vsel %vm3613, %v3573, 0
      %v3627 = vsel %vm2224, %v3608, 0
      %3629 = vmatpush.bf16.msra.mxu0 0
      %3630 = vmatpush.bf16.msra.mxu0 0
      %3631 = vmatpush.bf16.msra.mxu0 0
      %3632 = vmatpush.bf16.msra.mxu0 %v3627
      %3633 = vmatpush.bf16.msra.mxu0 %v3607
      %3634 = vmatpush.bf16.msra.mxu0 %v3606
      %3635 = vmatpush.bf16.msra.mxu0 %v3605
      %3636 = vmatpush.bf16.msra.mxu0 %v3604
      %3637 = vmatmul.bf16.gmra.mxu0 %v3615
      %v3638 = vpop.f32.mrf.mxu0
      %v3639 = vadd.f32 0.0, %v3638
      %v3640 = vpop.f32.mrf.mxu0
      %v3641 = vadd.f32 0.0, %v3640
      %3642 = vmatmul.bf16.gmra.mxu0 %v3618
      %v3643 = vpop.f32.mrf.mxu0
      %v3644 = vadd.f32 0.0, %v3643
      %v3645 = vpop.f32.mrf.mxu0
      %v3646 = vadd.f32 0.0, %v3645
      %3647 = vmatmul.bf16.gmra.mxu0 %v3621
      %v3648 = vpop.f32.mrf.mxu0
      %v3649 = vadd.f32 0.0, %v3648
      %v3650 = vpop.f32.mrf.mxu0
      %v3651 = vadd.f32 0.0, %v3650
      %3652 = vmatmul.bf16.gmra.mxu0 %v3624
      %v3653 = vpop.f32.mrf.mxu0
      %v3654 = vadd.f32 0.0, %v3653
      %v3655 = vpop.f32.mrf.mxu0
      %v3656 = vadd.f32 0.0, %v3655
      %3657 = vdwg.mxu0
      %v3658 = vpack.c.bf16 %v3639, %v3639
      %v3659 = vpack.c.bf16 %v3641, %v3641
      %v3660 = vpack.c.bf16 %v3644, %v3644
      %v3661 = vpack.c.bf16 %v3646, %v3646
      %v3662 = vpack.c.bf16 %v3649, %v3649
      %v3663 = vpack.c.bf16 %v3651, %v3651
      %v3664 = vpack.c.bf16 %v3654, %v3654
      %v3665 = vpack.c.bf16 %v3656, %v3656
      %vm3666 = vcmask 125952
      %3667 = vst.msk [vmem:[%s359] sm:$0xf] %vm3666, %v3658
      %3668 = vst.msk [vmem:[%s359 + $0x4] sm:$0xf] %vm3666, %v3659
      %3669 = vst.msk [vmem:[%s359 + $0x8] sm:$0xf] %vm3666, %v3660
      %3670 = vst.msk [vmem:[%s359 + $0xc] sm:$0xf] %vm3666, %v3661
      %3671 = vst.msk [vmem:[%s359 + $0x10] sm:$0xf] %vm3666, %v3662
      %3672 = vst.msk [vmem:[%s359 + $0x14] sm:$0xf] %vm3666, %v3663
      %3673 = vst.msk [vmem:[%s359 + $0x18] sm:$0xf] %vm3666, %v3664
      %3674 = vst.msk [vmem:[%s359 + $0x1c] sm:$0xf] %vm3666, %v3665
      %p3675 = scmp.lt.s32.totalorder %s21, 1
      %s3676 = scalar_select %p3675, %s21, 1
      %s3677 = smul.addr %s3676, 8
      %s3678 = smul.addr %s3677, 4
      %s3679 = scalar_lea.vmem %s10, %s3678
      // Predicated region
      $region61: #{small_cnn_forward.2} parent=59 // pred_check
        %p3680 = pneg %p254
      $region62: #{small_cnn_forward.2} parent=59 // pred_check_branch
        %3682 = sbr.rel (%p3680) target = $region64
      $region63: #{small_cnn_forward.2} parent=59 // pred_region
        _
      $region64: #{small_cnn_forward.2} parent=59 // pred_fallthru
        _
    $region60: #{small_cnn_forward.2} parent=5 // pred_fallthru
      _
    %p3683 = scmp.le.s32.totalorder 2, %s16
    // Predicated region
    $region65: #{small_cnn_forward.2} parent=5 // pred_check
      %p3684 = pneg %p3683
    $region66: #{small_cnn_forward.2} parent=5 // pred_check_branch
      %3686 = sbr.rel (%p3684) target = $region68
    $region67: #{small_cnn_forward.2} parent=5 // pred_region
      %s3687 = ssub.s32 %s16, 2
      // Predicated region
      $region69: #{small_cnn_forward.2} parent=67 // pred_check
        %p3688 = pneg %p260
      $region70: #{small_cnn_forward.2} parent=67 // pred_check_branch
        %3690 = sbr.rel (%p3688) target = $region72
      $region71: #{small_cnn_forward.2} parent=67 // pred_region
        %p3691 = scmp.lt.s32.totalorder %s22, 1
        %s3692 = scalar_select %p3691, %s22, 1
        %s3693 = smul.addr %s3692, 8
        %s3694 = smul.addr %s3693, 4
        %s3695 = scalar_lea.vmem %s10, %s3694
      $region72: #{small_cnn_forward.2} parent=67 // pred_fallthru
        _
    $region68: #{small_cnn_forward.2} parent=5 // pred_fallthru
      _
  $region6: #{small_cnn_forward.2} parent=0 // loop_footer
    %s20 = sadd.s32 1, %s16
  $region7: #{small_cnn_forward.2} parent=0 // loop_footer_branch
    %15 = sbr.rel target = $region3
  $region8: #{small_cnn_forward.2} parent=0 // loop_exit
    _

</llo_original>
